<compile_context>
chip_gen: v7x
topology: tpu7x:2x2x1
jax: 0.10.0
libtpu: 0.0.40
codegen_flags: <defaults>
</compile_context>

<pallas_src>
import functools
import math

import jax
import jax.numpy as jnp
from jax.experimental import pallas as pl
from jax.experimental.pallas import tpu as pltpu

GROUP_SIZE = 256          # FLASH(group_size=256)
EXPANSION = 4.0           # FLASH(expansion_factor=4.0)
NUM_BUCKETS = 32          # RelativePositionBias default
MAX_DISTANCE = 128        # RelativePositionBias default
LN_EPS = 1e-5             # nn.LayerNorm default eps

_MU = math.sqrt(0.5)                                       # LaplacianAttnFn mu
_CC = 1.0 / (math.sqrt(0.25 / math.pi) * math.sqrt(2.0))   # 1/(std*sqrt(2))
_ERF_C1 = 2.0 / math.sqrt(math.pi)                         # tanh-erf linear coeff
_ERF_C3 = 0.044715 * math.pi / 2.0                         # cubic coeff after folding C1 into z


# ----------------------------------------------------------------------------
# small math helpers
# ----------------------------------------------------------------------------
def _laplace_attn(x, erf_fn):
    # LaplacianAttnFn: (1 + erf((x - mu) / (std * sqrt(2)))) * 0.5  (reference)
    return 0.5 * (1.0 + erf_fn((x - _MU) * _CC))


def _rel_pos_bucket(rel_pos, num_buckets=NUM_BUCKETS, max_distance=MAX_DISTANCE):
    # Non-causal T5-style bucketing (matches FLASH-pytorch RelativePositionBias)
    n = -rel_pos
    num_buckets = num_buckets // 2
    ret = (n < 0).astype(jnp.int32) * num_buckets
    n = jnp.abs(n)
    max_exact = num_buckets // 2
    is_small = n < max_exact
    val_if_large = max_exact + (
        jnp.log(jnp.maximum(n, 1).astype(jnp.float32) / max_exact)
        / math.log(max_distance / max_exact) * (num_buckets - max_exact)
    ).astype(jnp.int32)
    val_if_large = jnp.minimum(val_if_large, num_buckets - 1)
    return ret + jnp.where(is_small, n, val_if_large)


def _rel_pos_bias(seq_len, emb_weight, scale):
    pos = jnp.arange(seq_len)
    rel_pos = pos[None, :] - pos[:, None]          # k_pos - q_pos
    bucket = _rel_pos_bucket(rel_pos)
    return (emb_weight[bucket, 0] * scale).astype(jnp.float32)   # (L, L)


def _round_up(x, m):
    return ((x + m - 1) // m) * m


def _pad_last(a, to):
    pad = to - a.shape[-1]
    if pad == 0:
        return a
    return jnp.pad(a, [(0, 0)] * (a.ndim - 1) + [(0, pad)])


def _device_kind():
    try:
        return jax.devices()[0].device_kind.lower()
    except Exception:
        return ""


def _pick_batch_tile(B, Lp, rows_target, two_cores):
    # Batch sequences per grid step so the projection matmuls see M = Bt*Lp
    # rows.  Only keep >= 2 grid steps (for the two v7x TensorCores) when each
    # step would still feed the MXU >= 128 rows; on single-TC chips the grid
    # is a serial loop, so never shrink Bt just to create extra steps.
    bt = max(1, min(B, max(1, rows_target // max(Lp, 1))))
    if two_cores and B > 1:
        half = max(1, B // 2)
        if min(bt, half) * Lp >= 128:
            bt = min(bt, half)
    while B % bt:
        bt -= 1
    return bt


def _vmem_need_bytes(bt, lp, dp, dkp, hp, const_bufs):
    # Generous per-step VMEM estimate (bytes) used to cap Bt and to size
    # vmem_limit_bytes.
    f32, bf16 = 4, 2
    rows = bt * lp
    # pipelined per-step blocks (x, lane-padded mask, out), double-buffered
    blocks = 2 * (rows * dp * f32 + rows * 128 * f32 + rows * dp * f32)
    # resident constants: bf16 weights, f32 biases/affines, rel-pos bias
    consts = (dp * 2 * hp + dp * dkp + hp * dp) * bf16
    consts += (2 * dp + 2 * hp + dkp + dp + 8 * dkp) * f32
    consts += lp * lp * f32
    consts *= const_bufs
    # major intermediates inside one step (upper bound, mostly f32)
    inter = rows * 2 * hp * (f32 + bf16)          # hid + activated copy
    inter += rows * dkp * (5 * f32)               # qk + 4 heads
    inter += bt * lp * lp * (2 * f32 + bf16)      # sim, attn (+ bf16 copy)
    inter += rows * hp * (4 * f32 + 2 * bf16)     # v, quad_out, lin_out, gated
    inter += rows * dp * (2 * f32 + bf16)         # normed (+ bf16), residual o
    return blocks + consts + inter


# ----------------------------------------------------------------------------
# Pallas kernel: Bt sequences per grid step
# ----------------------------------------------------------------------------
def _flash_kernel(x_ref, mask_ref, bias_ref,
                  lnw_ref, lnb_ref, wh_ref, bh_ref, wqk_ref, bqk_ref,
                  gamma_ref, beta_ref, wo_ref, bo_ref, o_ref,
                  *, true_dim, padded_dim, hidden_dim, true_len, padded_len,
                  bt, scale_z, use_bf16_act):
    act_dt = jnp.bfloat16 if use_bf16_act else jnp.float32

    x = x_ref[...]                       # (Bt, Lp, Dp) f32, padded lanes zero
    rows = bt * padded_len
    x2 = x.reshape(rows, padded_dim)     # Lp % 16 == 0 -> pure layout no-op

    # --- LayerNorm over the true feature dim (centered variance) ---
    inv_d = 1.0 / true_dim
    mean = jnp.sum(x2, axis=-1, keepdims=True) * inv_d
    xc = x2 - mean
    if padded_dim != true_dim:
        lane = jax.lax.broadcasted_iota(jnp.int32, (1, padded_dim), 1)
        xc = jnp.where(lane < true_dim, xc, 0.0)
    var = jnp.sum(xc * xc, axis=-1, keepdims=True) * inv_d
    normed = xc * jax.lax.rsqrt(var + LN_EPS) * lnw_ref[...] + lnb_ref[...]
    normed_bf = normed.astype(jnp.bfloat16)

    # --- to_hidden: Linear -> SiLU, chunk into (v, gate) ---
    hid = jnp.dot(normed_bf, wh_ref[...],
                  preferred_element_type=jnp.float32) + bh_ref[...]
    hid = hid.astype(act_dt)                       # bf16 SiLU on v6e/v7x
    hid = hid * jax.nn.sigmoid(hid)
    v = hid[:, :hidden_dim].reshape(bt, padded_len, hidden_dim)   # (Bt, Lp, H)
    gate = hid[:, hidden_dim:]                                    # (Bt*Lp, H)

    # --- to_qk: Linear -> SiLU -> OffsetScale (4 heads) ---
    qk = jnp.dot(normed_bf, wqk_ref[...],
                 preferred_element_type=jnp.float32) + bqk_ref[...]
    qk = qk.astype(act_dt)
    qk = qk * jax.nn.sigmoid(qk)                                  # (Bt*Lp, dkp)
    gamma = gamma_ref[...].astype(act_dt)
    beta = beta_ref[...].astype(act_dt)

    def head(i):
        return (qk * gamma[i:i + 1, :] + beta[i:i + 1, :]).reshape(
            bt, padded_len, -1)

    quad_q, lin_q, quad_k, lin_k = head(0), head(1), head(2), head(3)

    # Masking attn key columns / lin_k rows (incl. the L padding) is
    # equivalent to masking v once.
    v_bf = (v * mask_ref[...].astype(act_dt)).astype(jnp.bfloat16)

    # --- quadratic (in-group) attention, Laplace activation via tanh-erf ---
    sim = jnp.einsum('bqd,bkd->bqk',
                     quad_q.astype(jnp.bfloat16), quad_k.astype(jnp.bfloat16),
                     preferred_element_type=jnp.float32)
    # t = (sim/g + bias - mu) * CC * C1 ;  0.5*(1+erf(z)) ~ 0.5*(1+tanh(t+C3 t^3))
    t = sim * scale_z + bias_ref[...][None]
    attn = 0.5 + 0.5 * jnp.tanh(t + _ERF_C3 * (t * t * t))
    # TODO(synk): attn dropout (hdnDropout) is identity in inference mode.
    quad_out = jnp.einsum('bqk,bkd->bqd', attn.astype(jnp.bfloat16), v_bf,
                          preferred_element_type=jnp.float32)     # (Bt, Lp, H)

    # --- global linear attention (non-causal), divided by the TRUE seq len ---
    # TODO(synk): bundle-compare against a trans-LHS lax.dot_general (contract
    # lin_k axis 1 with v axis 1) to see if Mosaic consumes it without the
    # explicit XLU transpose.
    lin_kT = jnp.swapaxes(lin_k, -1, -2).astype(jnp.bfloat16)     # (Bt, dkp, Lp)
    lin_kv = jnp.einsum('bdn,bne->bde', lin_kT, v_bf,
                        preferred_element_type=jnp.float32) * (1.0 / true_len)
    lin_out = jnp.einsum('bnd,bde->bne',
                         lin_q.astype(jnp.bfloat16), lin_kv.astype(jnp.bfloat16),
                         preferred_element_type=jnp.float32)      # (Bt, Lp, H)

    # --- gate, output projection, residual ---
    out = gate * (quad_out + lin_out).reshape(rows, hidden_dim)
    o = x2 + jnp.dot(out.astype(jnp.bfloat16), wo_ref[...],
                     preferred_element_type=jnp.float32) + bo_ref[...]
    o_ref[...] = o.reshape(bt, padded_len, padded_dim)


def flash_pallas(params, x, mask):
    B, L, D = x.shape
    dk = params["w_qk"].shape[1]
    hidden = params["w_o"].shape[0]
    # TODO(synk): only the single-group case (L <= group_size) is implemented;
    # long sequences need a (batch, query-group) grid with an accumulated
    # lin_kv scratch.  Numerically identical to torch's pad-to-256 path here.
    assert L <= GROUP_SIZE

    kind = _device_kind()
    is_v7 = ("v7" in kind) or ("7x" in kind)
    use_bf16_act = ("v6" in kind) or is_v7            # bf16 VPU/EUP generations
    rows_target = 512 if "v6" in kind else 256        # v6e: 256-wide MXU, big VMEM

    Dp = _round_up(D, 128)
    dkp = _round_up(dk, 128)
    Hp = _round_up(hidden, 128)
    Lp = _round_up(L, 16)          # sublane-aligned for both f32 (8) and bf16 (16)
    pad_d = Dp - D

    # --- lane/sublane-dense padding (zeros; LN / lin_kv use the true dims) ---
    x_p = jnp.pad(x, ((0, 0), (0, Lp - L), (0, pad_d)))
    mask_col = jnp.pad(mask.astype(jnp.float32), ((0, 0), (0, Lp - L)))[:, :, None]

    ln_w = _pad_last(params["ln_w"][None, :], Dp)
    ln_b = _pad_last(params["ln_b"][None, :], Dp)

    w_v, w_g = params["w_h"][:, :hidden], params["w_h"][:, hidden:]
    w_h = jnp.concatenate(
        [jnp.pad(w_v, ((0, pad_d), (0, Hp - hidden))),
         jnp.pad(w_g, ((0, pad_d), (0, Hp - hidden)))],
        axis=1).astype(jnp.bfloat16)                              # (Dp, 2*Hp)
    b_h = jnp.concatenate(
        [_pad_last(params["b_h"][:hidden][None, :], Hp),
         _pad_last(params["b_h"][hidden:][None, :], Hp)], axis=1)  # (1, 2*Hp)

    w_qk = jnp.pad(params["w_qk"], ((0, pad_d), (0, dkp - dk))).astype(jnp.bfloat16)
    b_qk = _pad_last(params["b_qk"][None, :], dkp)
    gamma = _pad_last(params["gamma"], dkp)
    beta = _pad_last(params["beta"], dkp)
    w_o = jnp.pad(params["w_o"], ((0, Hp - hidden), (0, pad_d))).astype(jnp.bfloat16)
    b_o = _pad_last(params["b_o"][None, :], Dp)

    # Rel-pos bias (T5RelativePositionBias(query_key_dim ** 0.5)) with the
    # Laplace constants and the tanh-erf linear coefficient folded in:
    #   t = (sim/g + bias - mu) * CC * C1  ==  sim * scale_z + bias_z
    bias = _rel_pos_bias(Lp, params["rel_emb"], scale=float(dk) ** 0.5)
    bias_z = (bias - _MU) * (_CC * _ERF_C1)
    scale_z = _CC * _ERF_C1 / GROUP_SIZE

    # --- batch tile + VMEM budget ---
    Bt = _pick_batch_tile(B, Lp, rows_target, two_cores=is_v7)
    cap = (48 << 20) if is_v7 else (96 << 20)        # v7x: 64 MiB physical / TC
    while Bt > 1 and _vmem_need_bytes(Bt, Lp, Dp, dkp, Hp, 2) > cap:
        nb = Bt - 1
        while B % nb:
            nb -= 1
        Bt = nb
    need = _vmem_need_bytes(Bt, Lp, Dp, dkp, Hp, 2)
    vmem_limit = int(min(cap, max(32 << 20, int(need * 1.25))))

    kern = functools.partial(
        _flash_kernel, true_dim=D, padded_dim=Dp, hidden_dim=Hp,
        true_len=L, padded_len=Lp, bt=Bt, scale_z=scale_z,
        use_bf16_act=use_bf16_act)

    operands = (x_p, mask_col, bias_z, ln_w, ln_b, w_h, b_h, w_qk, b_qk,
                gamma, beta, w_o, b_o)

    def call(single_buffer_consts):
        def const_spec(shape):
            nd = len(shape)
            idx = lambda b, _nd=nd: (0,) * _nd
            if single_buffer_consts:
                # Constant block index -> no need to double-buffer in VMEM.
                return pl.BlockSpec(shape, idx, pipeline_mode=pl.Buffered(1))
            return pl.BlockSpec(shape, idx)

        grid_spec = pltpu.PrefetchScalarGridSpec(
            num_scalar_prefetch=0,
            grid=(B // Bt,),
            in_specs=[
                pl.BlockSpec((Bt, Lp, Dp), lambda b: (b, 0, 0)),   # x (padded)
                pl.BlockSpec((Bt, Lp, 1), lambda b: (b, 0, 0)),    # key-pad mask
                const_spec((Lp, Lp)),                              # folded bias
                const_spec((1, Dp)), const_spec((1, Dp)),          # LN w / b
                const_spec((Dp, 2 * Hp)), const_spec((1, 2 * Hp)), # to_hidden
                const_spec((Dp, dkp)), const_spec((1, dkp)),       # to_qk
                const_spec((4, dkp)), const_spec((4, dkp)),        # gamma / beta
                const_spec((Hp, Dp)), const_spec((1, Dp)),         # to_out
            ],
            out_specs=pl.BlockSpec((Bt, Lp, Dp), lambda b: (b, 0, 0)),
        )
        return pl.pallas_call(
            kern,
            out_shape=jax.ShapeDtypeStruct((B, Lp, Dp), jnp.float32),
            grid_spec=grid_spec,
            compiler_params=pltpu.CompilerParams(
                dimension_semantics=("parallel",),
                vmem_limit_bytes=vmem_limit),
        )(*operands)

    try:
        out_p = call(True)
    except Exception:
        # Fallback for jax builds where BlockSpec.pipeline_mode / Buffered(1)
        # is not supported on TPU: default (double-buffered) constant specs.
        out_p = call(False)

    if Lp != L or Dp != D:
        # TODO(synk): let downstream consume the padded layout to skip this copy.
        return out_p[:, :L, :D]
    return out_p


def py_flash_forward(params, inputs):
    # pyFLASH.forward: only vx and maskPAD are used; returns (x, x, x, maskPAD)
    qx, kx, vx, maskPAD = inputs
    x = flash_pallas(params, vx, maskPAD)
    return (x, x, x, maskPAD)


# ----------------------------------------------------------------------------
# pure-JAX reference (same math, f32 everywhere, exact erf)
# ----------------------------------------------------------------------------
def flash_reference(params, x, mask):
    B, L, D = x.shape
    dk = params["w_qk"].shape[1]
    hidden = params["w_o"].shape[0]
    mean = x.mean(-1, keepdims=True)
    xc = x - mean
    var = (xc * xc).mean(-1, keepdims=True)
    normed = xc / jnp.sqrt(var + LN_EPS) * params["ln_w"] + params["ln_b"]
    hid = normed @ params["w_h"] + params["b_h"]
    hid = hid * jax.nn.sigmoid(hid)
    v, gate = hid[..., :hidden], hid[..., hidden:]
    qk = normed @ params["w_qk"] + params["b_qk"]
    qk = qk * jax.nn.sigmoid(qk)
    heads = qk[..., None, :] * params["gamma"] + params["beta"]   # (B,L,4,dk)
    quad_q, lin_q, quad_k, lin_k = [heads[..., i, :] for i in range(4)]
    m = mask.astype(jnp.float32)
    lin_k = lin_k * m[..., None]
    bias = _rel_pos_bias(L, params["rel_emb"], scale=float(dk) ** 0.5)
    sim = jnp.einsum("bid,bjd->bij", quad_q, quad_k) / GROUP_SIZE + bias
    attn = _laplace_attn(sim, jax.scipy.special.erf)
    attn = attn * m[:, None, :]
    quad_out = jnp.einsum("bij,bjd->bid", attn, v)
    lin_kv = jnp.einsum("bnd,bne->bde", lin_k, v) / L
    lin_out = jnp.einsum("bnd,bde->bne", lin_q, lin_kv)
    out = gate * (quad_out + lin_out)
    return x + out @ params["w_o"] + params["b_o"]


# ----------------------------------------------------------------------------
# deterministic parameter init (shapes from FLASH.__init__; values synthetic)
# ----------------------------------------------------------------------------
def init_params(key, fea_size, dk):
    hidden = int(fea_size * EXPANSION)
    ks = jax.random.split(key, 8)
    return {
        "ln_w": jnp.ones((fea_size,), jnp.float32),
        "ln_b": jnp.zeros((fea_size,), jnp.float32),
        "w_h": 0.05 * jax.random.normal(ks[0], (fea_size, 2 * hidden), jnp.float32),
        "b_h": 0.01 * jax.random.normal(ks[1], (2 * hidden,), jnp.float32),
        "w_qk": 0.05 * jax.random.normal(ks[2], (fea_size, dk), jnp.float32),
        "b_qk": 0.01 * jax.random.normal(ks[3], (dk,), jnp.float32),
        "gamma": 1.0 + 0.02 * jax.random.normal(ks[4], (4, dk), jnp.float32),
        "beta": jnp.zeros((4, dk), jnp.float32),
        "rel_emb": jax.random.normal(ks[5], (NUM_BUCKETS, 1), jnp.float32),
        "w_o": 0.05 * jax.random.normal(ks[6], (hidden, fea_size), jnp.float32),
        "b_o": 0.01 * jax.random.normal(ks[7], (fea_size,), jnp.float32),
    }


if __name__ == "__main__":
    # pyFLASH(feaSize=32, dk=16, multiNum=4)  -- multiNum is unused by pyFLASH
    B, L, D, dk = 2, 8, 32, 16

    key = jax.random.PRNGKey(0)
    kp, kq, kk, kv = jax.random.split(key, 4)
    params = init_params(kp, D, dk)

    qx = jax.random.normal(kq, (B, L, D), jnp.float32)
    kx = jax.random.normal(kk, (B, L, D), jnp.float32)
    vx = jax.random.normal(kv, (B, L, D), jnp.float32)
    lengths = jnp.array([L, 5])
    maskPAD = jnp.arange(L)[None, :] < lengths[:, None]    # (B, L) bool

    out = py_flash_forward(params, (qx, kx, vx, maskPAD))
    x_out = jax.block_until_ready(out[0])

    ref = flash_reference(params, vx, maskPAD)
    max_err = float(jnp.max(jnp.abs(x_out - ref)))
    # bf16 MXU inputs / weights (f32 accumulation), optional bf16 SiLU + head
    # affines on v6e/v7x, and the tanh-based erf are the only deviations from
    # the f32 exact-erf reference.
    assert jnp.allclose(x_out, ref, atol=4e-3, rtol=4e-3), max_err

    print("KERNEL_OK")
</pallas_src>

<mosaic_0001>
module attributes {stable_mosaic.version = 11 : i64} {
  func.func @_flash_kernel(%arg0: i32, %arg1: memref<2x16x128xf32, #tpu.memory_space<vmem>>, %arg2: memref<2x16x1xf32, #tpu.memory_space<vmem>>, %arg3: memref<16x16xf32, #tpu.memory_space<vmem>>, %arg4: memref<1x128xf32, #tpu.memory_space<vmem>>, %arg5: memref<1x128xf32, #tpu.memory_space<vmem>>, %arg6: memref<128x256xbf16, #tpu.memory_space<vmem>>, %arg7: memref<1x256xf32, #tpu.memory_space<vmem>>, %arg8: memref<128x128xbf16, #tpu.memory_space<vmem>>, %arg9: memref<1x128xf32, #tpu.memory_space<vmem>>, %arg10: memref<4x128xf32, #tpu.memory_space<vmem>>, %arg11: memref<4x128xf32, #tpu.memory_space<vmem>>, %arg12: memref<128x128xbf16, #tpu.memory_space<vmem>>, %arg13: memref<1x128xf32, #tpu.memory_space<vmem>>, %arg14: memref<2x16x128xf32, #tpu.memory_space<vmem>>) attributes {dimension_semantics = [#tpu.dimension_semantics<parallel>], iteration_bounds = array<i64: 1>, scalar_prefetch = 0 : i64, scratch_operands = 0 : i64, tpu.core_type = #tpu.core_type<tc>, window_params = [{transform_indices = @transform_0, window_bounds = array<i64: 2, 16, 128>}, {transform_indices = @transform_1, window_bounds = array<i64: 2, 16, 1>}, {pipeline_mode = #tpu.pipeline_mode<synchronous>, transform_indices = @transform_2, window_bounds = array<i64: 16, 16>}, {pipeline_mode = #tpu.pipeline_mode<synchronous>, transform_indices = @transform_3, window_bounds = array<i64: 1, 128>}, {pipeline_mode = #tpu.pipeline_mode<synchronous>, transform_indices = @transform_4, window_bounds = array<i64: 1, 128>}, {pipeline_mode = #tpu.pipeline_mode<synchronous>, transform_indices = @transform_5, window_bounds = array<i64: 128, 256>}, {pipeline_mode = #tpu.pipeline_mode<synchronous>, transform_indices = @transform_6, window_bounds = array<i64: 1, 256>}, {pipeline_mode = #tpu.pipeline_mode<synchronous>, transform_indices = @transform_7, window_bounds = array<i64: 128, 128>}, {pipeline_mode = #tpu.pipeline_mode<synchronous>, transform_indices = @transform_8, window_bounds = array<i64: 1, 128>}, {pipeline_mode = #tpu.pipeline_mode<synchronous>, transform_indices = @transform_9, window_bounds = array<i64: 4, 128>}, {pipeline_mode = #tpu.pipeline_mode<synchronous>, transform_indices = @transform_10, window_bounds = array<i64: 4, 128>}, {pipeline_mode = #tpu.pipeline_mode<synchronous>, transform_indices = @transform_11, window_bounds = array<i64: 128, 128>}, {pipeline_mode = #tpu.pipeline_mode<synchronous>, transform_indices = @transform_12, window_bounds = array<i64: 1, 128>}, {transform_indices = @transform_13, window_bounds = array<i64: 2, 16, 128>}]} {
    %c0 = arith.constant 0 : index
    %c0_0 = arith.constant 0 : index
    %c0_1 = arith.constant 0 : index
    %0 = vector.load %arg1[%c0, %c0_0, %c0_1] : memref<2x16x128xf32, #tpu.memory_space<vmem>>, vector<2x16x128xf32>
    %1 = vector.shape_cast %0 : vector<2x16x128xf32> to vector<32x128xf32>
    %cst = arith.constant dense<0.000000e+00> : vector<32xf32>
    %2 = vector.multi_reduction <add>, %1, %cst [1] : vector<32x128xf32> to vector<32xf32>
    %3 = vector.shape_cast %2 : vector<32xf32> to vector<32x1xf32>
    %cst_2 = arith.constant 3.125000e-02 : f32
    %4 = vector.broadcast %cst_2 : f32 to vector<32x1xf32>
    %5 = arith.mulf %3, %4 : vector<32x1xf32>
    %6 = vector.broadcast %5 : vector<32x1xf32> to vector<32x128xf32>
    %7 = arith.subf %1, %6 : vector<32x128xf32>
    %8 = tpu.iota {dimensions = array<i32: 1>} : vector<1x128xi32>
    %c32_i32 = arith.constant 32 : i32
    %9 = vector.broadcast %c32_i32 : i32 to vector<1x128xi32>
    %10 = arith.cmpi slt, %8, %9 : vector<1x128xi32>
    %cst_3 = arith.constant 0.000000e+00 : f32
    %11 = vector.shape_cast %10 : vector<1x128xi1> to vector<1x128xi1>
    %12 = vector.broadcast %11 : vector<1x128xi1> to vector<32x128xi1>
    %13 = vector.broadcast %cst_3 : f32 to vector<32x128xf32>
    %14 = arith.select %12, %7, %13 : vector<32x128xi1>, vector<32x128xf32>
    %15 = arith.mulf %14, %14 : vector<32x128xf32>
    %cst_4 = arith.constant dense<0.000000e+00> : vector<32xf32>
    %16 = vector.multi_reduction <add>, %15, %cst_4 [1] : vector<32x128xf32> to vector<32xf32>
    %17 = vector.shape_cast %16 : vector<32xf32> to vector<32x1xf32>
    %cst_5 = arith.constant 3.125000e-02 : f32
    %18 = vector.broadcast %cst_5 : f32 to vector<32x1xf32>
    %19 = arith.mulf %17, %18 : vector<32x1xf32>
    %cst_6 = arith.constant 9.99999974E-6 : f32
    %20 = vector.broadcast %cst_6 : f32 to vector<32x1xf32>
    %21 = arith.addf %19, %20 : vector<32x1xf32>
    %22 = math.rsqrt %21 : vector<32x1xf32>
    %23 = vector.broadcast %22 : vector<32x1xf32> to vector<32x128xf32>
    %24 = arith.mulf %14, %23 : vector<32x128xf32>
    %c0_7 = arith.constant 0 : index
    %c0_8 = arith.constant 0 : index
    %25 = vector.load %arg4[%c0_7, %c0_8] : memref<1x128xf32, #tpu.memory_space<vmem>>, vector<1x128xf32>
    %26 = vector.broadcast %25 : vector<1x128xf32> to vector<32x128xf32>
    %27 = arith.mulf %24, %26 : vector<32x128xf32>
    %c0_9 = arith.constant 0 : index
    %c0_10 = arith.constant 0 : index
    %28 = vector.load %arg5[%c0_9, %c0_10] : memref<1x128xf32, #tpu.memory_space<vmem>>, vector<1x128xf32>
    %29 = vector.broadcast %28 : vector<1x128xf32> to vector<32x128xf32>
    %30 = arith.addf %27, %29 : vector<32x128xf32>
    %31 = arith.truncf %30 : vector<32x128xf32> to vector<32x128xbf16>
    %c0_11 = arith.constant 0 : index
    %c0_12 = arith.constant 0 : index
    %32 = vector.load %arg6[%c0_11, %c0_12] : memref<128x256xbf16, #tpu.memory_space<vmem>>, vector<128x256xbf16>
    %cst_13 = arith.constant dense<0.000000e+00> : vector<32x256xf32>
    %33 = tpu.matmul %31, %32, %cst_13 {dimension_numbers = #tpu.dot_dimension_numbers<[1], [0], [0], [1], [0, 0, 1, 1], [], []>} : vector<32x128xbf16>, vector<128x256xbf16>, vector<32x256xf32> -> vector<32x256xf32>
    %c0_14 = arith.constant 0 : index
    %c0_15 = arith.constant 0 : index
    %34 = vector.load %arg7[%c0_14, %c0_15] : memref<1x256xf32, #tpu.memory_space<vmem>>, vector<1x256xf32>
    %35 = vector.broadcast %34 : vector<1x256xf32> to vector<32x256xf32>
    %36 = arith.addf %33, %35 : vector<32x256xf32>
    %37 = arith.negf %36 : vector<32x256xf32>
    %38 = math.exp %37 : vector<32x256xf32>
    %cst_16 = arith.constant 1.000000e+00 : f32
    %39 = vector.broadcast %cst_16 : f32 to vector<32x256xf32>
    %40 = arith.addf %39, %38 : vector<32x256xf32>
    %41 = arith.divf %39, %40 : vector<32x256xf32>
    %42 = arith.mulf %36, %41 : vector<32x256xf32>
    %43 = vector.extract_strided_slice %42 {offsets = [0, 0], sizes = [32, 128], strides = [1, 1]} : vector<32x256xf32> to vector<32x128xf32>
    %44 = vector.shape_cast %43 : vector<32x128xf32> to vector<2x16x128xf32>
    %45 = vector.extract_strided_slice %42 {offsets = [0, 128], sizes = [32, 128], strides = [1, 1]} : vector<32x256xf32> to vector<32x128xf32>
    %c0_17 = arith.constant 0 : index
    %c0_18 = arith.constant 0 : index
    %46 = vector.load %arg8[%c0_17, %c0_18] : memref<128x128xbf16, #tpu.memory_space<vmem>>, vector<128x128xbf16>
    %cst_19 = arith.constant dense<0.000000e+00> : vector<32x128xf32>
    %47 = tpu.matmul %31, %46, %cst_19 {dimension_numbers = #tpu.dot_dimension_numbers<[1], [0], [0], [1], [0, 0, 1, 1], [], []>} : vector<32x128xbf16>, vector<128x128xbf16>, vector<32x128xf32> -> vector<32x128xf32>
    %c0_20 = arith.constant 0 : index
    %c0_21 = arith.constant 0 : index
    %48 = vector.load %arg9[%c0_20, %c0_21] : memref<1x128xf32, #tpu.memory_space<vmem>>, vector<1x128xf32>
    %49 = vector.broadcast %48 : vector<1x128xf32> to vector<32x128xf32>
    %50 = arith.addf %47, %49 : vector<32x128xf32>
    %51 = arith.negf %50 : vector<32x128xf32>
    %52 = math.exp %51 : vector<32x128xf32>
    %cst_22 = arith.constant 1.000000e+00 : f32
    %53 = vector.broadcast %cst_22 : f32 to vector<32x128xf32>
    %54 = arith.addf %53, %52 : vector<32x128xf32>
    %55 = arith.divf %53, %54 : vector<32x128xf32>
    %56 = arith.mulf %50, %55 : vector<32x128xf32>
    %c0_23 = arith.constant 0 : index
    %c0_24 = arith.constant 0 : index
    %57 = vector.load %arg10[%c0_23, %c0_24] : memref<4x128xf32, #tpu.memory_space<vmem>>, vector<4x128xf32>
    %c0_25 = arith.constant 0 : index
    %c0_26 = arith.constant 0 : index
    %58 = vector.load %arg11[%c0_25, %c0_26] : memref<4x128xf32, #tpu.memory_space<vmem>>, vector<4x128xf32>
    %59 = vector.extract_strided_slice %57 {offsets = [0, 0], sizes = [1, 128], strides = [1, 1]} : vector<4x128xf32> to vector<1x128xf32>
    %60 = vector.broadcast %59 : vector<1x128xf32> to vector<32x128xf32>
    %61 = arith.mulf %56, %60 : vector<32x128xf32>
    %62 = vector.extract_strided_slice %58 {offsets = [0, 0], sizes = [1, 128], strides = [1, 1]} : vector<4x128xf32> to vector<1x128xf32>
    %63 = vector.broadcast %62 : vector<1x128xf32> to vector<32x128xf32>
    %64 = arith.addf %61, %63 : vector<32x128xf32>
    %65 = vector.shape_cast %64 : vector<32x128xf32> to vector<2x16x128xf32>
    %66 = vector.extract_strided_slice %57 {offsets = [1, 0], sizes = [1, 128], strides = [1, 1]} : vector<4x128xf32> to vector<1x128xf32>
    %67 = vector.broadcast %66 : vector<1x128xf32> to vector<32x128xf32>
    %68 = arith.mulf %56, %67 : vector<32x128xf32>
    %69 = vector.extract_strided_slice %58 {offsets = [1, 0], sizes = [1, 128], strides = [1, 1]} : vector<4x128xf32> to vector<1x128xf32>
    %70 = vector.broadcast %69 : vector<1x128xf32> to vector<32x128xf32>
    %71 = arith.addf %68, %70 : vector<32x128xf32>
    %72 = vector.shape_cast %71 : vector<32x128xf32> to vector<2x16x128xf32>
    %73 = vector.extract_strided_slice %57 {offsets = [2, 0], sizes = [1, 128], strides = [1, 1]} : vector<4x128xf32> to vector<1x128xf32>
    %74 = vector.broadcast %73 : vector<1x128xf32> to vector<32x128xf32>
    %75 = arith.mulf %56, %74 : vector<32x128xf32>
    %76 = vector.extract_strided_slice %58 {offsets = [2, 0], sizes = [1, 128], strides = [1, 1]} : vector<4x128xf32> to vector<1x128xf32>
    %77 = vector.broadcast %76 : vector<1x128xf32> to vector<32x128xf32>
    %78 = arith.addf %75, %77 : vector<32x128xf32>
    %79 = vector.shape_cast %78 : vector<32x128xf32> to vector<2x16x128xf32>
    %80 = vector.extract_strided_slice %57 {offsets = [3, 0], sizes = [1, 128], strides = [1, 1]} : vector<4x128xf32> to vector<1x128xf32>
    %81 = vector.broadcast %80 : vector<1x128xf32> to vector<32x128xf32>
    %82 = arith.mulf %56, %81 : vector<32x128xf32>
    %83 = vector.extract_strided_slice %58 {offsets = [3, 0], sizes = [1, 128], strides = [1, 1]} : vector<4x128xf32> to vector<1x128xf32>
    %84 = vector.broadcast %83 : vector<1x128xf32> to vector<32x128xf32>
    %85 = arith.addf %82, %84 : vector<32x128xf32>
    %86 = vector.shape_cast %85 : vector<32x128xf32> to vector<2x16x128xf32>
    %c0_27 = arith.constant 0 : index
    %c0_28 = arith.constant 0 : index
    %c0_29 = arith.constant 0 : index
    %87 = vector.load %arg2[%c0_27, %c0_28, %c0_29] : memref<2x16x1xf32, #tpu.memory_space<vmem>>, vector<2x16x1xf32>
    %88 = vector.broadcast %87 : vector<2x16x1xf32> to vector<2x16x128xf32>
    %89 = arith.mulf %44, %88 : vector<2x16x128xf32>
    %90 = arith.truncf %89 : vector<2x16x128xf32> to vector<2x16x128xbf16>
    %91 = arith.truncf %65 : vector<2x16x128xf32> to vector<2x16x128xbf16>
    %92 = arith.truncf %79 : vector<2x16x128xf32> to vector<2x16x128xbf16>
    "tpu.trace_start"() <{level = 10 : i32, message = "bqd,bkd->bqk"}> : () -> ()
    %cst_30 = arith.constant dense<0.000000e+00> : vector<2x16x16xf32>
    %93 = tpu.matmul %91, %92, %cst_30 {dimension_numbers = #tpu.dot_dimension_numbers<[2], [2], [1], [1], [0, 0, 0, 1, 1, 1], [0], [0]>} : vector<2x16x128xbf16>, vector<2x16x128xbf16>, vector<2x16x16xf32> -> vector<2x16x16xf32>
    "tpu.trace_stop"() : () -> ()
    %cst_31 = arith.constant 0.0110485433 : f32
    %94 = vector.broadcast %cst_31 : f32 to vector<2x16x16xf32>
    %95 = arith.mulf %93, %94 : vector<2x16x16xf32>
    %c0_32 = arith.constant 0 : index
    %c0_33 = arith.constant 0 : index
    %96 = vector.load %arg3[%c0_32, %c0_33] : memref<16x16xf32, #tpu.memory_space<vmem>>, vector<16x16xf32>
    %97 = vector.shape_cast %96 : vector<16x16xf32> to vector<1x16x16xf32>
    %98 = vector.broadcast %97 : vector<1x16x16xf32> to vector<2x16x16xf32>
    %99 = arith.addf %95, %98 : vector<2x16x16xf32>
    %100 = arith.mulf %99, %99 : vector<2x16x16xf32>
    %101 = arith.mulf %100, %99 : vector<2x16x16xf32>
    %cst_34 = arith.constant 0.0702381581 : f32
    %102 = vector.broadcast %cst_34 : f32 to vector<2x16x16xf32>
    %103 = arith.mulf %102, %101 : vector<2x16x16xf32>
    %104 = arith.addf %99, %103 : vector<2x16x16xf32>
    %105 = math.tanh %104 : vector<2x16x16xf32>
    %cst_35 = arith.constant 5.000000e-01 : f32
    %106 = vector.broadcast %cst_35 : f32 to vector<2x16x16xf32>
    %107 = arith.mulf %106, %105 : vector<2x16x16xf32>
    %cst_36 = arith.constant 5.000000e-01 : f32
    %108 = vector.broadcast %cst_36 : f32 to vector<2x16x16xf32>
    %109 = arith.addf %108, %107 : vector<2x16x16xf32>
    %110 = arith.truncf %109 : vector<2x16x16xf32> to vector<2x16x16xbf16>
    "tpu.trace_start"() <{level = 10 : i32, message = "bqk,bkd->bqd"}> : () -> ()
    %cst_37 = arith.constant dense<0.000000e+00> : vector<2x16x128xf32>
    %111 = tpu.matmul %110, %90, %cst_37 {dimension_numbers = #tpu.dot_dimension_numbers<[2], [1], [1], [2], [0, 0, 0, 1, 1, 2], [0], [0]>} : vector<2x16x16xbf16>, vector<2x16x128xbf16>, vector<2x16x128xf32> -> vector<2x16x128xf32>
    "tpu.trace_stop"() : () -> ()
    %112 = tpu.transpose %86, [0, 2, 1] : vector<2x16x128xf32> -> vector<2x128x16xf32>
    %113 = arith.truncf %112 : vector<2x128x16xf32> to vector<2x128x16xbf16>
    "tpu.trace_start"() <{level = 10 : i32, message = "bdn,bne->bde"}> : () -> ()
    %cst_38 = arith.constant dense<0.000000e+00> : vector<2x128x128xf32>
    %114 = tpu.matmul %113, %90, %cst_38 {dimension_numbers = #tpu.dot_dimension_numbers<[2], [1], [1], [2], [0, 0, 0, 1, 1, 2], [0], [0]>} : vector<2x128x16xbf16>, vector<2x16x128xbf16>, vector<2x128x128xf32> -> vector<2x128x128xf32>
    "tpu.trace_stop"() : () -> ()
    %cst_39 = arith.constant 1.250000e-01 : f32
    %115 = vector.broadcast %cst_39 : f32 to vector<2x128x128xf32>
    %116 = arith.mulf %114, %115 : vector<2x128x128xf32>
    %117 = arith.truncf %72 : vector<2x16x128xf32> to vector<2x16x128xbf16>
    %118 = arith.truncf %116 : vector<2x128x128xf32> to vector<2x128x128xbf16>
    "tpu.trace_start"() <{level = 10 : i32, message = "bnd,bde->bne"}> : () -> ()
    %cst_40 = arith.constant dense<0.000000e+00> : vector<2x16x128xf32>
    %119 = tpu.matmul %117, %118, %cst_40 {dimension_numbers = #tpu.dot_dimension_numbers<[2], [1], [1], [2], [0, 0, 0, 1, 1, 2], [0], [0]>} : vector<2x16x128xbf16>, vector<2x128x128xbf16>, vector<2x16x128xf32> -> vector<2x16x128xf32>
    "tpu.trace_stop"() : () -> ()
    %120 = arith.addf %111, %119 : vector<2x16x128xf32>
    %121 = vector.shape_cast %120 : vector<2x16x128xf32> to vector<32x128xf32>
    %122 = arith.mulf %45, %121 : vector<32x128xf32>
    %123 = arith.truncf %122 : vector<32x128xf32> to vector<32x128xbf16>
    %c0_41 = arith.constant 0 : index
    %c0_42 = arith.constant 0 : index
    %124 = vector.load %arg12[%c0_41, %c0_42] : memref<128x128xbf16, #tpu.memory_space<vmem>>, vector<128x128xbf16>
    %cst_43 = arith.constant dense<0.000000e+00> : vector<32x128xf32>
    %125 = tpu.matmul %123, %124, %cst_43 {dimension_numbers = #tpu.dot_dimension_numbers<[1], [0], [0], [1], [0, 0, 1, 1], [], []>} : vector<32x128xbf16>, vector<128x128xbf16>, vector<32x128xf32> -> vector<32x128xf32>
    %126 = arith.addf %1, %125 : vector<32x128xf32>
    %c0_44 = arith.constant 0 : index
    %c0_45 = arith.constant 0 : index
    %127 = vector.load %arg13[%c0_44, %c0_45] : memref<1x128xf32, #tpu.memory_space<vmem>>, vector<1x128xf32>
    %128 = vector.broadcast %127 : vector<1x128xf32> to vector<32x128xf32>
    %129 = arith.addf %126, %128 : vector<32x128xf32>
    %130 = vector.shape_cast %129 : vector<32x128xf32> to vector<2x16x128xf32>
    %c0_46 = arith.constant 0 : index
    %c0_47 = arith.constant 0 : index
    %c0_48 = arith.constant 0 : index
    %131 = vector.load %arg14[%c0_46, %c0_47, %c0_48] : memref<2x16x128xf32, #tpu.memory_space<vmem>>, vector<2x16x128xf32>
    tpu.vector_store %arg14[%c0_46, %c0_47, %c0_48], %130 {strides = array<i32>} : memref<2x16x128xf32, #tpu.memory_space<vmem>>, vector<2x16x128xf32>,
    return
  }
  func.func @transform_0(%arg0: i32) -> (i32, i32, i32) {
    %c0_i32 = arith.constant 0 : i32
    %c0_i32_0 = arith.constant 0 : i32
    %c0_i32_1 = arith.constant 0 : i32
    return %arg0, %c0_i32, %c0_i32_0 : i32, i32, i32
  }
  func.func @transform_1(%arg0: i32) -> (i32, i32, i32) {
    %c0_i32 = arith.constant 0 : i32
    %c0_i32_0 = arith.constant 0 : i32
    %c0_i32_1 = arith.constant 0 : i32
    return %arg0, %c0_i32, %c0_i32_0 : i32, i32, i32
  }
  func.func @transform_2(%arg0: i32) -> (i32, i32) {
    %c0_i32 = arith.constant 0 : i32
    %c0_i32_0 = arith.constant 0 : i32
    %c0_i32_1 = arith.constant 0 : i32
    return %c0_i32, %c0_i32_0 : i32, i32
  }
  func.func @transform_3(%arg0: i32) -> (i32, i32) {
    %c0_i32 = arith.constant 0 : i32
    %c0_i32_0 = arith.constant 0 : i32
    %c0_i32_1 = arith.constant 0 : i32
    return %c0_i32, %c0_i32_0 : i32, i32
  }
  func.func @transform_4(%arg0: i32) -> (i32, i32) {
    %c0_i32 = arith.constant 0 : i32
    %c0_i32_0 = arith.constant 0 : i32
    %c0_i32_1 = arith.constant 0 : i32
    return %c0_i32, %c0_i32_0 : i32, i32
  }
  func.func @transform_5(%arg0: i32) -> (i32, i32) {
    %c0_i32 = arith.constant 0 : i32
    %c0_i32_0 = arith.constant 0 : i32
    %c0_i32_1 = arith.constant 0 : i32
    return %c0_i32, %c0_i32_0 : i32, i32
  }
  func.func @transform_6(%arg0: i32) -> (i32, i32) {
    %c0_i32 = arith.constant 0 : i32
    %c0_i32_0 = arith.constant 0 : i32
    %c0_i32_1 = arith.constant 0 : i32
    return %c0_i32, %c0_i32_0 : i32, i32
  }
  func.func @transform_7(%arg0: i32) -> (i32, i32) {
    %c0_i32 = arith.constant 0 : i32
    %c0_i32_0 = arith.constant 0 : i32
    %c0_i32_1 = arith.constant 0 : i32
    return %c0_i32, %c0_i32_0 : i32, i32
  }
  func.func @transform_8(%arg0: i32) -> (i32, i32) {
    %c0_i32 = arith.constant 0 : i32
    %c0_i32_0 = arith.constant 0 : i32
    %c0_i32_1 = arith.constant 0 : i32
    return %c0_i32, %c0_i32_0 : i32, i32
  }
  func.func @transform_9(%arg0: i32) -> (i32, i32) {
    %c0_i32 = arith.constant 0 : i32
    %c0_i32_0 = arith.constant 0 : i32
    %c0_i32_1 = arith.constant 0 : i32
    return %c0_i32, %c0_i32_0 : i32, i32
  }
  func.func @transform_10(%arg0: i32) -> (i32, i32) {
    %c0_i32 = arith.constant 0 : i32
    %c0_i32_0 = arith.constant 0 : i32
    %c0_i32_1 = arith.constant 0 : i32
    return %c0_i32, %c0_i32_0 : i32, i32
  }
  func.func @transform_11(%arg0: i32) -> (i32, i32) {
    %c0_i32 = arith.constant 0 : i32
    %c0_i32_0 = arith.constant 0 : i32
    %c0_i32_1 = arith.constant 0 : i32
    return %c0_i32, %c0_i32_0 : i32, i32
  }
  func.func @transform_12(%arg0: i32) -> (i32, i32) {
    %c0_i32 = arith.constant 0 : i32
    %c0_i32_0 = arith.constant 0 : i32
    %c0_i32_1 = arith.constant 0 : i32
    return %c0_i32, %c0_i32_0 : i32, i32
  }
  func.func @transform_13(%arg0: i32) -> (i32, i32, i32) {
    %c0_i32 = arith.constant 0 : i32
    %c0_i32_0 = arith.constant 0 : i32
    %c0_i32_1 = arith.constant 0 : i32
    return %arg0, %c0_i32, %c0_i32_0 : i32, i32, i32
  }
}

module attributes {stable_mosaic.version = 11 : i64} {
  func.func @_flash_kernel(%arg0: i32, %arg1: memref<2x16x128xf32, #tpu.memory_space<vmem>>, %arg2: memref<2x16x1xf32, #tpu.memory_space<vmem>>, %arg3: memref<16x16xf32, #tpu.memory_space<vmem>>, %arg4: memref<1x128xf32, #tpu.memory_space<vmem>>, %arg5: memref<1x128xf32, #tpu.memory_space<vmem>>, %arg6: memref<128x256xbf16, #tpu.memory_space<vmem>>, %arg7: memref<1x256xf32, #tpu.memory_space<vmem>>, %arg8: memref<128x128xbf16, #tpu.memory_space<vmem>>, %arg9: memref<1x128xf32, #tpu.memory_space<vmem>>, %arg10: memref<4x128xf32, #tpu.memory_space<vmem>>, %arg11: memref<4x128xf32, #tpu.memory_space<vmem>>, %arg12: memref<128x128xbf16, #tpu.memory_space<vmem>>, %arg13: memref<1x128xf32, #tpu.memory_space<vmem>>, %arg14: memref<2x16x128xf32, #tpu.memory_space<vmem>>) attributes {dimension_semantics = [#tpu.dimension_semantics<parallel>], iteration_bounds = array<i64: 1>, scalar_prefetch = 0 : i64, scratch_operands = 0 : i64, tpu.core_type = #tpu.core_type<tc>, window_params = [{transform_indices = @transform_0, window_bounds = array<i64: 2, 16, 128>}, {transform_indices = @transform_1, window_bounds = array<i64: 2, 16, 1>}, {pipeline_mode = #tpu.pipeline_mode<synchronous>, transform_indices = @transform_2, window_bounds = array<i64: 16, 16>}, {pipeline_mode = #tpu.pipeline_mode<synchronous>, transform_indices = @transform_3, window_bounds = array<i64: 1, 128>}, {pipeline_mode = #tpu.pipeline_mode<synchronous>, transform_indices = @transform_4, window_bounds = array<i64: 1, 128>}, {pipeline_mode = #tpu.pipeline_mode<synchronous>, transform_indices = @transform_5, window_bounds = array<i64: 128, 256>}, {pipeline_mode = #tpu.pipeline_mode<synchronous>, transform_indices = @transform_6, window_bounds = array<i64: 1, 256>}, {pipeline_mode = #tpu.pipeline_mode<synchronous>, transform_indices = @transform_7, window_bounds = array<i64: 128, 128>}, {pipeline_mode = #tpu.pipeline_mode<synchronous>, transform_indices = @transform_8, window_bounds = array<i64: 1, 128>}, {pipeline_mode = #tpu.pipeline_mode<synchronous>, transform_indices = @transform_9, window_bounds = array<i64: 4, 128>}, {pipeline_mode = #tpu.pipeline_mode<synchronous>, transform_indices = @transform_10, window_bounds = array<i64: 4, 128>}, {pipeline_mode = #tpu.pipeline_mode<synchronous>, transform_indices = @transform_11, window_bounds = array<i64: 128, 128>}, {pipeline_mode = #tpu.pipeline_mode<synchronous>, transform_indices = @transform_12, window_bounds = array<i64: 1, 128>}, {transform_indices = @transform_13, window_bounds = array<i64: 2, 16, 128>}]} {
    %c0 = arith.constant 0 : index
    %c0_0 = arith.constant 0 : index
    %c0_1 = arith.constant 0 : index
    %0 = vector.load %arg1[%c0, %c0_0, %c0_1] : memref<2x16x128xf32, #tpu.memory_space<vmem>>, vector<2x16x128xf32>
    %1 = vector.shape_cast %0 : vector<2x16x128xf32> to vector<32x128xf32>
    %cst = arith.constant dense<0.000000e+00> : vector<32xf32>
    %2 = vector.multi_reduction <add>, %1, %cst [1] : vector<32x128xf32> to vector<32xf32>
    %3 = vector.shape_cast %2 : vector<32xf32> to vector<32x1xf32>
    %cst_2 = arith.constant 3.125000e-02 : f32
    %4 = vector.broadcast %cst_2 : f32 to vector<32x1xf32>
    %5 = arith.mulf %3, %4 : vector<32x1xf32>
    %6 = vector.broadcast %5 : vector<32x1xf32> to vector<32x128xf32>
    %7 = arith.subf %1, %6 : vector<32x128xf32>
    %8 = tpu.iota {dimensions = array<i32: 1>} : vector<1x128xi32>
    %c32_i32 = arith.constant 32 : i32
    %9 = vector.broadcast %c32_i32 : i32 to vector<1x128xi32>
    %10 = arith.cmpi slt, %8, %9 : vector<1x128xi32>
    %cst_3 = arith.constant 0.000000e+00 : f32
    %11 = vector.shape_cast %10 : vector<1x128xi1> to vector<1x128xi1>
    %12 = vector.broadcast %11 : vector<1x128xi1> to vector<32x128xi1>
    %13 = vector.broadcast %cst_3 : f32 to vector<32x128xf32>
    %14 = arith.select %12, %7, %13 : vector<32x128xi1>, vector<32x128xf32>
    %15 = arith.mulf %14, %14 : vector<32x128xf32>
    %cst_4 = arith.constant dense<0.000000e+00> : vector<32xf32>
    %16 = vector.multi_reduction <add>, %15, %cst_4 [1] : vector<32x128xf32> to vector<32xf32>
    %17 = vector.shape_cast %16 : vector<32xf32> to vector<32x1xf32>
    %cst_5 = arith.constant 3.125000e-02 : f32
    %18 = vector.broadcast %cst_5 : f32 to vector<32x1xf32>
    %19 = arith.mulf %17, %18 : vector<32x1xf32>
    %cst_6 = arith.constant 9.99999974E-6 : f32
    %20 = vector.broadcast %cst_6 : f32 to vector<32x1xf32>
    %21 = arith.addf %19, %20 : vector<32x1xf32>
    %22 = math.rsqrt %21 : vector<32x1xf32>
    %23 = vector.broadcast %22 : vector<32x1xf32> to vector<32x128xf32>
    %24 = arith.mulf %14, %23 : vector<32x128xf32>
    %c0_7 = arith.constant 0 : index
    %c0_8 = arith.constant 0 : index
    %25 = vector.load %arg4[%c0_7, %c0_8] : memref<1x128xf32, #tpu.memory_space<vmem>>, vector<1x128xf32>
    %26 = vector.broadcast %25 : vector<1x128xf32> to vector<32x128xf32>
    %27 = arith.mulf %24, %26 : vector<32x128xf32>
    %c0_9 = arith.constant 0 : index
    %c0_10 = arith.constant 0 : index
    %28 = vector.load %arg5[%c0_9, %c0_10] : memref<1x128xf32, #tpu.memory_space<vmem>>, vector<1x128xf32>
    %29 = vector.broadcast %28 : vector<1x128xf32> to vector<32x128xf32>
    %30 = arith.addf %27, %29 : vector<32x128xf32>
    %31 = arith.truncf %30 : vector<32x128xf32> to vector<32x128xbf16>
    %c0_11 = arith.constant 0 : index
    %c0_12 = arith.constant 0 : index
    %32 = vector.load %arg6[%c0_11, %c0_12] : memref<128x256xbf16, #tpu.memory_space<vmem>>, vector<128x256xbf16>
    %cst_13 = arith.constant dense<0.000000e+00> : vector<32x256xf32>
    %33 = tpu.matmul %31, %32, %cst_13 {dimension_numbers = #tpu.dot_dimension_numbers<[1], [0], [0], [1], [0, 0, 1, 1], [], []>} : vector<32x128xbf16>, vector<128x256xbf16>, vector<32x256xf32> -> vector<32x256xf32>
    %c0_14 = arith.constant 0 : index
    %c0_15 = arith.constant 0 : index
    %34 = vector.load %arg7[%c0_14, %c0_15] : memref<1x256xf32, #tpu.memory_space<vmem>>, vector<1x256xf32>
    %35 = vector.broadcast %34 : vector<1x256xf32> to vector<32x256xf32>
    %36 = arith.addf %33, %35 : vector<32x256xf32>
    %37 = arith.negf %36 : vector<32x256xf32>
    %38 = math.exp %37 : vector<32x256xf32>
    %cst_16 = arith.constant 1.000000e+00 : f32
    %39 = vector.broadcast %cst_16 : f32 to vector<32x256xf32>
    %40 = arith.addf %39, %38 : vector<32x256xf32>
    %41 = arith.divf %39, %40 : vector<32x256xf32>
    %42 = arith.mulf %36, %41 : vector<32x256xf32>
    %43 = vector.extract_strided_slice %42 {offsets = [0, 0], sizes = [32, 128], strides = [1, 1]} : vector<32x256xf32> to vector<32x128xf32>
    %44 = vector.shape_cast %43 : vector<32x128xf32> to vector<2x16x128xf32>
    %45 = vector.extract_strided_slice %42 {offsets = [0, 128], sizes = [32, 128], strides = [1, 1]} : vector<32x256xf32> to vector<32x128xf32>
    %c0_17 = arith.constant 0 : index
    %c0_18 = arith.constant 0 : index
    %46 = vector.load %arg8[%c0_17, %c0_18] : memref<128x128xbf16, #tpu.memory_space<vmem>>, vector<128x128xbf16>
    %cst_19 = arith.constant dense<0.000000e+00> : vector<32x128xf32>
    %47 = tpu.matmul %31, %46, %cst_19 {dimension_numbers = #tpu.dot_dimension_numbers<[1], [0], [0], [1], [0, 0, 1, 1], [], []>} : vector<32x128xbf16>, vector<128x128xbf16>, vector<32x128xf32> -> vector<32x128xf32>
    %c0_20 = arith.constant 0 : index
    %c0_21 = arith.constant 0 : index
    %48 = vector.load %arg9[%c0_20, %c0_21] : memref<1x128xf32, #tpu.memory_space<vmem>>, vector<1x128xf32>
    %49 = vector.broadcast %48 : vector<1x128xf32> to vector<32x128xf32>
    %50 = arith.addf %47, %49 : vector<32x128xf32>
    %51 = arith.negf %50 : vector<32x128xf32>
    %52 = math.exp %51 : vector<32x128xf32>
    %cst_22 = arith.constant 1.000000e+00 : f32
    %53 = vector.broadcast %cst_22 : f32 to vector<32x128xf32>
    %54 = arith.addf %53, %52 : vector<32x128xf32>
    %55 = arith.divf %53, %54 : vector<32x128xf32>
    %56 = arith.mulf %50, %55 : vector<32x128xf32>
    %c0_23 = arith.constant 0 : index
    %c0_24 = arith.constant 0 : index
    %57 = vector.load %arg10[%c0_23, %c0_24] : memref<4x128xf32, #tpu.memory_space<vmem>>, vector<4x128xf32>
    %c0_25 = arith.constant 0 : index
    %c0_26 = arith.constant 0 : index
    %58 = vector.load %arg11[%c0_25, %c0_26] : memref<4x128xf32, #tpu.memory_space<vmem>>, vector<4x128xf32>
    %59 = vector.extract_strided_slice %57 {offsets = [0, 0], sizes = [1, 128], strides = [1, 1]} : vector<4x128xf32> to vector<1x128xf32>
    %60 = vector.broadcast %59 : vector<1x128xf32> to vector<32x128xf32>
    %61 = arith.mulf %56, %60 : vector<32x128xf32>
    %62 = vector.extract_strided_slice %58 {offsets = [0, 0], sizes = [1, 128], strides = [1, 1]} : vector<4x128xf32> to vector<1x128xf32>
    %63 = vector.broadcast %62 : vector<1x128xf32> to vector<32x128xf32>
    %64 = arith.addf %61, %63 : vector<32x128xf32>
    %65 = vector.shape_cast %64 : vector<32x128xf32> to vector<2x16x128xf32>
    %66 = vector.extract_strided_slice %57 {offsets = [1, 0], sizes = [1, 128], strides = [1, 1]} : vector<4x128xf32> to vector<1x128xf32>
    %67 = vector.broadcast %66 : vector<1x128xf32> to vector<32x128xf32>
    %68 = arith.mulf %56, %67 : vector<32x128xf32>
    %69 = vector.extract_strided_slice %58 {offsets = [1, 0], sizes = [1, 128], strides = [1, 1]} : vector<4x128xf32> to vector<1x128xf32>
    %70 = vector.broadcast %69 : vector<1x128xf32> to vector<32x128xf32>
    %71 = arith.addf %68, %70 : vector<32x128xf32>
    %72 = vector.shape_cast %71 : vector<32x128xf32> to vector<2x16x128xf32>
    %73 = vector.extract_strided_slice %57 {offsets = [2, 0], sizes = [1, 128], strides = [1, 1]} : vector<4x128xf32> to vector<1x128xf32>
    %74 = vector.broadcast %73 : vector<1x128xf32> to vector<32x128xf32>
    %75 = arith.mulf %56, %74 : vector<32x128xf32>
    %76 = vector.extract_strided_slice %58 {offsets = [2, 0], sizes = [1, 128], strides = [1, 1]} : vector<4x128xf32> to vector<1x128xf32>
    %77 = vector.broadcast %76 : vector<1x128xf32> to vector<32x128xf32>
    %78 = arith.addf %75, %77 : vector<32x128xf32>
    %79 = vector.shape_cast %78 : vector<32x128xf32> to vector<2x16x128xf32>
    %80 = vector.extract_strided_slice %57 {offsets = [3, 0], sizes = [1, 128], strides = [1, 1]} : vector<4x128xf32> to vector<1x128xf32>
    %81 = vector.broadcast %80 : vector<1x128xf32> to vector<32x128xf32>
    %82 = arith.mulf %56, %81 : vector<32x128xf32>
    %83 = vector.extract_strided_slice %58 {offsets = [3, 0], sizes = [1, 128], strides = [1, 1]} : vector<4x128xf32> to vector<1x128xf32>
    %84 = vector.broadcast %83 : vector<1x128xf32> to vector<32x128xf32>
    %85 = arith.addf %82, %84 : vector<32x128xf32>
    %86 = vector.shape_cast %85 : vector<32x128xf32> to vector<2x16x128xf32>
    %c0_27 = arith.constant 0 : index
    %c0_28 = arith.constant 0 : index
    %c0_29 = arith.constant 0 : index
    %87 = vector.load %arg2[%c0_27, %c0_28, %c0_29] : memref<2x16x1xf32, #tpu.memory_space<vmem>>, vector<2x16x1xf32>
    %88 = vector.broadcast %87 : vector<2x16x1xf32> to vector<2x16x128xf32>
    %89 = arith.mulf %44, %88 : vector<2x16x128xf32>
    %90 = arith.truncf %89 : vector<2x16x128xf32> to vector<2x16x128xbf16>
    %91 = arith.truncf %65 : vector<2x16x128xf32> to vector<2x16x128xbf16>
    %92 = arith.truncf %79 : vector<2x16x128xf32> to vector<2x16x128xbf16>
    "tpu.trace_start"() <{level = 10 : i32, message = "bqd,bkd->bqk"}> : () -> ()
    %cst_30 = arith.constant dense<0.000000e+00> : vector<2x16x16xf32>
    %93 = tpu.matmul %91, %92, %cst_30 {dimension_numbers = #tpu.dot_dimension_numbers<[2], [2], [1], [1], [0, 0, 0, 1, 1, 1], [0], [0]>} : vector<2x16x128xbf16>, vector<2x16x128xbf16>, vector<2x16x16xf32> -> vector<2x16x16xf32>
    "tpu.trace_stop"() : () -> ()
    %cst_31 = arith.constant 0.0110485433 : f32
    %94 = vector.broadcast %cst_31 : f32 to vector<2x16x16xf32>
    %95 = arith.mulf %93, %94 : vector<2x16x16xf32>
    %c0_32 = arith.constant 0 : index
    %c0_33 = arith.constant 0 : index
    %96 = vector.load %arg3[%c0_32, %c0_33] : memref<16x16xf32, #tpu.memory_space<vmem>>, vector<16x16xf32>
    %97 = vector.shape_cast %96 : vector<16x16xf32> to vector<1x16x16xf32>
    %98 = vector.broadcast %97 : vector<1x16x16xf32> to vector<2x16x16xf32>
    %99 = arith.addf %95, %98 : vector<2x16x16xf32>
    %100 = arith.mulf %99, %99 : vector<2x16x16xf32>
    %101 = arith.mulf %100, %99 : vector<2x16x16xf32>
    %cst_34 = arith.constant 0.0702381581 : f32
    %102 = vector.broadcast %cst_34 : f32 to vector<2x16x16xf32>
    %103 = arith.mulf %102, %101 : vector<2x16x16xf32>
    %104 = arith.addf %99, %103 : vector<2x16x16xf32>
    %105 = math.tanh %104 : vector<2x16x16xf32>
    %cst_35 = arith.constant 5.000000e-01 : f32
    %106 = vector.broadcast %cst_35 : f32 to vector<2x16x16xf32>
    %107 = arith.mulf %106, %105 : vector<2x16x16xf32>
    %cst_36 = arith.constant 5.000000e-01 : f32
    %108 = vector.broadcast %cst_36 : f32 to vector<2x16x16xf32>
    %109 = arith.addf %108, %107 : vector<2x16x16xf32>
    %110 = arith.truncf %109 : vector<2x16x16xf32> to vector<2x16x16xbf16>
    "tpu.trace_start"() <{level = 10 : i32, message = "bqk,bkd->bqd"}> : () -> ()
    %cst_37 = arith.constant dense<0.000000e+00> : vector<2x16x128xf32>
    %111 = tpu.matmul %110, %90, %cst_37 {dimension_numbers = #tpu.dot_dimension_numbers<[2], [1], [1], [2], [0, 0, 0, 1, 1, 2], [0], [0]>} : vector<2x16x16xbf16>, vector<2x16x128xbf16>, vector<2x16x128xf32> -> vector<2x16x128xf32>
    "tpu.trace_stop"() : () -> ()
    %112 = tpu.transpose %86, [0, 2, 1] : vector<2x16x128xf32> -> vector<2x128x16xf32>
    %113 = arith.truncf %112 : vector<2x128x16xf32> to vector<2x128x16xbf16>
    "tpu.trace_start"() <{level = 10 : i32, message = "bdn,bne->bde"}> : () -> ()
    %cst_38 = arith.constant dense<0.000000e+00> : vector<2x128x128xf32>
    %114 = tpu.matmul %113, %90, %cst_38 {dimension_numbers = #tpu.dot_dimension_numbers<[2], [1], [1], [2], [0, 0, 0, 1, 1, 2], [0], [0]>} : vector<2x128x16xbf16>, vector<2x16x128xbf16>, vector<2x128x128xf32> -> vector<2x128x128xf32>
    "tpu.trace_stop"() : () -> ()
    %cst_39 = arith.constant 1.250000e-01 : f32
    %115 = vector.broadcast %cst_39 : f32 to vector<2x128x128xf32>
    %116 = arith.mulf %114, %115 : vector<2x128x128xf32>
    %117 = arith.truncf %72 : vector<2x16x128xf32> to vector<2x16x128xbf16>
    %118 = arith.truncf %116 : vector<2x128x128xf32> to vector<2x128x128xbf16>
    "tpu.trace_start"() <{level = 10 : i32, message = "bnd,bde->bne"}> : () -> ()
    %cst_40 = arith.constant dense<0.000000e+00> : vector<2x16x128xf32>
    %119 = tpu.matmul %117, %118, %cst_40 {dimension_numbers = #tpu.dot_dimension_numbers<[2], [1], [1], [2], [0, 0, 0, 1, 1, 2], [0], [0]>} : vector<2x16x128xbf16>, vector<2x128x128xbf16>, vector<2x16x128xf32> -> vector<2x16x128xf32>
    "tpu.trace_stop"() : () -> ()
    %120 = arith.addf %111, %119 : vector<2x16x128xf32>
    %121 = vector.shape_cast %120 : vector<2x16x128xf32> to vector<32x128xf32>
    %122 = arith.mulf %45, %121 : vector<32x128xf32>
    %123 = arith.truncf %122 : vector<32x128xf32> to vector<32x128xbf16>
    %c0_41 = arith.constant 0 : index
    %c0_42 = arith.constant 0 : index
    %124 = vector.load %arg12[%c0_41, %c0_42] : memref<128x128xbf16, #tpu.memory_space<vmem>>, vector<128x128xbf16>
    %cst_43 = arith.constant dense<0.000000e+00> : vector<32x128xf32>
    %125 = tpu.matmul %123, %124, %cst_43 {dimension_numbers = #tpu.dot_dimension_numbers<[1], [0], [0], [1], [0, 0, 1, 1], [], []>} : vector<32x128xbf16>, vector<128x128xbf16>, vector<32x128xf32> -> vector<32x128xf32>
    %126 = arith.addf %1, %125 : vector<32x128xf32>
    %c0_44 = arith.constant 0 : index
    %c0_45 = arith.constant 0 : index
    %127 = vector.load %arg13[%c0_44, %c0_45] : memref<1x128xf32, #tpu.memory_space<vmem>>, vector<1x128xf32>
    %128 = vector.broadcast %127 : vector<1x128xf32> to vector<32x128xf32>
    %129 = arith.addf %126, %128 : vector<32x128xf32>
    %130 = vector.shape_cast %129 : vector<32x128xf32> to vector<2x16x128xf32>
    %c0_46 = arith.constant 0 : index
    %c0_47 = arith.constant 0 : index
    %c0_48 = arith.constant 0 : index
    %131 = vector.load %arg14[%c0_46, %c0_47, %c0_48] : memref<2x16x128xf32, #tpu.memory_space<vmem>>, vector<2x16x128xf32>
    tpu.vector_store %arg14[%c0_46, %c0_47, %c0_48], %130 {strides = array<i32>} : memref<2x16x128xf32, #tpu.memory_space<vmem>>, vector<2x16x128xf32>,
    return
  }
  func.func @transform_0(%arg0: i32) -> (i32, i32, i32) {
    %c0_i32 = arith.constant 0 : i32
    %c0_i32_0 = arith.constant 0 : i32
    %c0_i32_1 = arith.constant 0 : i32
    return %arg0, %c0_i32, %c0_i32_0 : i32, i32, i32
  }
  func.func @transform_1(%arg0: i32) -> (i32, i32, i32) {
    %c0_i32 = arith.constant 0 : i32
    %c0_i32_0 = arith.constant 0 : i32
    %c0_i32_1 = arith.constant 0 : i32
    return %arg0, %c0_i32, %c0_i32_0 : i32, i32, i32
  }
  func.func @transform_2(%arg0: i32) -> (i32, i32) {
    %c0_i32 = arith.constant 0 : i32
    %c0_i32_0 = arith.constant 0 : i32
    %c0_i32_1 = arith.constant 0 : i32
    return %c0_i32, %c0_i32_0 : i32, i32
  }
  func.func @transform_3(%arg0: i32) -> (i32, i32) {
    %c0_i32 = arith.constant 0 : i32
    %c0_i32_0 = arith.constant 0 : i32
    %c0_i32_1 = arith.constant 0 : i32
    return %c0_i32, %c0_i32_0 : i32, i32
  }
  func.func @transform_4(%arg0: i32) -> (i32, i32) {
    %c0_i32 = arith.constant 0 : i32
    %c0_i32_0 = arith.constant 0 : i32
    %c0_i32_1 = arith.constant 0 : i32
    return %c0_i32, %c0_i32_0 : i32, i32
  }
  func.func @transform_5(%arg0: i32) -> (i32, i32) {
    %c0_i32 = arith.constant 0 : i32
    %c0_i32_0 = arith.constant 0 : i32
    %c0_i32_1 = arith.constant 0 : i32
    return %c0_i32, %c0_i32_0 : i32, i32
  }
  func.func @transform_6(%arg0: i32) -> (i32, i32) {
    %c0_i32 = arith.constant 0 : i32
    %c0_i32_0 = arith.constant 0 : i32
    %c0_i32_1 = arith.constant 0 : i32
    return %c0_i32, %c0_i32_0 : i32, i32
  }
  func.func @transform_7(%arg0: i32) -> (i32, i32) {
    %c0_i32 = arith.constant 0 : i32
    %c0_i32_0 = arith.constant 0 : i32
    %c0_i32_1 = arith.constant 0 : i32
    return %c0_i32, %c0_i32_0 : i32, i32
  }
  func.func @transform_8(%arg0: i32) -> (i32, i32) {
    %c0_i32 = arith.constant 0 : i32
    %c0_i32_0 = arith.constant 0 : i32
    %c0_i32_1 = arith.constant 0 : i32
    return %c0_i32, %c0_i32_0 : i32, i32
  }
  func.func @transform_9(%arg0: i32) -> (i32, i32) {
    %c0_i32 = arith.constant 0 : i32
    %c0_i32_0 = arith.constant 0 : i32
    %c0_i32_1 = arith.constant 0 : i32
    return %c0_i32, %c0_i32_0 : i32, i32
  }
  func.func @transform_10(%arg0: i32) -> (i32, i32) {
    %c0_i32 = arith.constant 0 : i32
    %c0_i32_0 = arith.constant 0 : i32
    %c0_i32_1 = arith.constant 0 : i32
    return %c0_i32, %c0_i32_0 : i32, i32
  }
  func.func @transform_11(%arg0: i32) -> (i32, i32) {
    %c0_i32 = arith.constant 0 : i32
    %c0_i32_0 = arith.constant 0 : i32
    %c0_i32_1 = arith.constant 0 : i32
    return %c0_i32, %c0_i32_0 : i32, i32
  }
  func.func @transform_12(%arg0: i32) -> (i32, i32) {
    %c0_i32 = arith.constant 0 : i32
    %c0_i32_0 = arith.constant 0 : i32
    %c0_i32_1 = arith.constant 0 : i32
    return %c0_i32, %c0_i32_0 : i32, i32
  }
  func.func @transform_13(%arg0: i32) -> (i32, i32, i32) {
    %c0_i32 = arith.constant 0 : i32
    %c0_i32_0 = arith.constant 0 : i32
    %c0_i32_1 = arith.constant 0 : i32
    return %arg0, %c0_i32, %c0_i32_0 : i32, i32, i32
  }
}

</mosaic_0001>

<llo_original>
// kernel: tpu_custom_call.1
$region0: #{tpu_custom_call.1}
  #allocation0 [shape = 'u32[]', space=smem, size = 0x4, offset = 0x4, fixed_abs, tag = 'smem constant byte address 0x4 - core index']
  #allocation1 [shape = 'u32[144,128]{1,0:T(1,128)}', space=vmem, size = 0x12000, scoped, tag = 'internal scratch']
  %s0 = inlined_call_operand.hbm [shape: f32[2,16,128], index: 0, kind: input, shape index: {}]
  %s1 = inlined_call_operand.vmem [shape: f32[2,16,1], index: 1, kind: input, shape index: {}]
  %s2 = inlined_call_operand.hbm [shape: f32[16,16], index: 2, kind: input, shape index: {}]
  %s3 = inlined_call_operand.vmem [shape: f32[1,128], index: 3, kind: input, shape index: {}]
  %s4 = inlined_call_operand.hbm [shape: f32[1,128], index: 4, kind: input, shape index: {}]
  %s5 = inlined_call_operand.hbm [shape: bf16[128,256], index: 5, kind: input, shape index: {}]
  %s6 = inlined_call_operand.vmem [shape: f32[1,256], index: 6, kind: input, shape index: {}]
  %s7 = inlined_call_operand.hbm [shape: bf16[128,128], index: 7, kind: input, shape index: {}]
  %s8 = inlined_call_operand.hbm [shape: f32[1,128], index: 8, kind: input, shape index: {}]
  %s9 = inlined_call_operand.vmem [shape: f32[4,128], index: 9, kind: input, shape index: {}]
  %s10 = inlined_call_operand.vmem [shape: f32[4,128], index: 10, kind: input, shape index: {}]
  %s11 = inlined_call_operand.vmem [shape: bf16[128,128], index: 11, kind: input, shape index: {}]
  %s12 = inlined_call_operand.vmem [shape: f32[1,128], index: 12, kind: input, shape index: {}]
  %s13 = inlined_call_operand.hbm [shape: f32[2,16,128], index: 13, kind: output, shape index: {}]
  %s14 = sld [smem:[#allocation0]]
  $region86: #{tpu_custom_call.1} parent=0
    _
  %s16 = ssub.s32 1, %s14
  %s17 = scalar_select 0, %s16, %s14
  $region1: #{tpu_custom_call.1} parent=0
    #allocation2 [shape = 'u8[16384]{0}', space=vmem, size = 0x4000, scoped, tag = 'input window, operand 0, single buffered']
    #allocation3 [shape = 's32[1]{0}', space=sflag, size = 0x4, scoped, tag = 'scoped memory for tpu_custom_call.1']
    #allocation4 [shape = 's32[1]{0}', space=sflag, size = 0x4, scoped, tag = 'scoped memory for tpu_custom_call.1']
    #allocation5 [shape = 'u8[8192]{0}', space=vmem, size = 0x2000, scoped, tag = 'input window, operand 2, single buffered']
    #allocation6 [shape = 's32[1]{0}', space=sflag, size = 0x4, scoped, tag = 'scoped memory for tpu_custom_call.1']
    #allocation7 [shape = 'u8[512]{0}', space=vmem, size = 0x400, scoped, tag = 'input window, operand 4, single buffered']
    #allocation8 [shape = 'u8[65536]{0}', space=vmem, size = 0x10000, scoped, tag = 'input window, operand 5, single buffered']
    #allocation9 [shape = 's32[1]{0}', space=sflag, size = 0x4, scoped, tag = 'scoped memory for tpu_custom_call.1']
    #allocation10 [shape = 'u8[32768]{0}', space=vmem, size = 0x8000, scoped, tag = 'input window, operand 7, single buffered']
    #allocation11 [shape = 'u8[512]{0}', space=vmem, size = 0x400, scoped, tag = 'input window, operand 8, single buffered']
    #allocation12 [shape = 's32[1]{0}', space=sflag, size = 0x4, scoped, tag = 'scoped memory for tpu_custom_call.1']
    #allocation13 [shape = 'u8[16384]{0}', space=vmem, size = 0x4000, scoped, tag = 'output window, operand 0, single buffered']
    %18 = vsyncpa [#allocation3], 0
    %19 = vsyncpa [#allocation6], 0
    %20 = vsyncpa [#allocation9], 0
    %21 = vsyncpa [#allocation12], 0
    %22 = vsyncpa [#allocation4], 0
    // Predicated region
    $region2: #{tpu_custom_call.1} parent=1 // pred_check
      _
    $region3: #{tpu_custom_call.1} parent=1 // pred_check_branch
      %24 = sbr.rel (0) target = $region5
    $region4: #{tpu_custom_call.1} parent=1 // pred_region
      %s26 = ssub.s32 512, 512
      %27 = vsyncadd [#allocation3], %s26
      %s28 = sshll.u32 [#allocation2], 4
      %s29 = int_to_ptr.vmem [resolvable:$true] %s28
      %34 = dma.hbm_to_vmem [thread:$0]  %s0, 512, %s29, [#allocation3], 128, 128, 8
    $region5: #{tpu_custom_call.1} parent=1 // pred_fallthru
      _
    // Predicated region
    $region6: #{tpu_custom_call.1} parent=1 // pred_check
      _
    $region7: #{tpu_custom_call.1} parent=1 // pred_check_branch
      %36 = sbr.rel (0) target = $region9
    $region8: #{tpu_custom_call.1} parent=1 // pred_region
      _
    $region9: #{tpu_custom_call.1} parent=1 // pred_fallthru
      _
    // Predicated region
    $region10: #{tpu_custom_call.1} parent=1 // pred_check
      _
    $region11: #{tpu_custom_call.1} parent=1 // pred_check_branch
      %38 = sbr.rel (0) target = $region13
    $region12: #{tpu_custom_call.1} parent=1 // pred_region
      %s40 = ssub.s32 256, 256
      %41 = vsyncadd [#allocation6], %s40
      %s42 = sshll.u32 [#allocation5], 4
      %s43 = int_to_ptr.vmem [resolvable:$true] %s42
      %48 = dma.hbm_to_vmem [thread:$0]  %s2, 256, %s43, [#allocation6], 128, 128, 8
    $region13: #{tpu_custom_call.1} parent=1 // pred_fallthru
      _
    // Predicated region
    $region14: #{tpu_custom_call.1} parent=1 // pred_check
      _
    $region15: #{tpu_custom_call.1} parent=1 // pred_check_branch
      %50 = sbr.rel (0) target = $region17
    $region16: #{tpu_custom_call.1} parent=1 // pred_region
      _
    $region17: #{tpu_custom_call.1} parent=1 // pred_fallthru
      _
    // Predicated region
    $region18: #{tpu_custom_call.1} parent=1 // pred_check
      _
    $region19: #{tpu_custom_call.1} parent=1 // pred_check_branch
      %52 = sbr.rel (0) target = $region21
    $region20: #{tpu_custom_call.1} parent=1 // pred_region
      %s54 = ssub.s32 16, 16
      %55 = vsyncadd [#allocation6], %s54
      %s57 = sshll.u32 [#allocation7], 4
      %s58 = int_to_ptr.vmem [resolvable:$true] %s57
      %60 = dma.hbm_to_vmem [thread:$0]  %s4, 16, %s58, [#allocation6]
    $region21: #{tpu_custom_call.1} parent=1 // pred_fallthru
      _
    // Predicated region
    $region22: #{tpu_custom_call.1} parent=1 // pred_check
      _
    $region23: #{tpu_custom_call.1} parent=1 // pred_check_branch
      %62 = sbr.rel (0) target = $region25
    $region24: #{tpu_custom_call.1} parent=1 // pred_region
      %s64 = ssub.s32 2048, 2048
      %65 = vsyncadd [#allocation9], %s64
      %s66 = sshll.u32 [#allocation8], 4
      %s67 = int_to_ptr.vmem [resolvable:$true] %s66
      %72 = dma.hbm_to_vmem [thread:$0]  %s5, 2048, %s67, [#allocation9], 128, 128, 8
    $region25: #{tpu_custom_call.1} parent=1 // pred_fallthru
      _
    // Predicated region
    $region26: #{tpu_custom_call.1} parent=1 // pred_check
      _
    $region27: #{tpu_custom_call.1} parent=1 // pred_check_branch
      %74 = sbr.rel (0) target = $region29
    $region28: #{tpu_custom_call.1} parent=1 // pred_region
      _
    $region29: #{tpu_custom_call.1} parent=1 // pred_fallthru
      _
    // Predicated region
    $region30: #{tpu_custom_call.1} parent=1 // pred_check
      _
    $region31: #{tpu_custom_call.1} parent=1 // pred_check_branch
      %76 = sbr.rel (0) target = $region33
    $region32: #{tpu_custom_call.1} parent=1 // pred_region
      %s78 = ssub.s32 1024, 1024
      %79 = vsyncadd [#allocation9], %s78
      %s80 = sshll.u32 [#allocation10], 4
      %s81 = int_to_ptr.vmem [resolvable:$true] %s80
      %86 = dma.hbm_to_vmem [thread:$0]  %s7, 1024, %s81, [#allocation9], 64, 64, 4
    $region33: #{tpu_custom_call.1} parent=1 // pred_fallthru
      _
    // Predicated region
    $region34: #{tpu_custom_call.1} parent=1 // pred_check
      _
    $region35: #{tpu_custom_call.1} parent=1 // pred_check_branch
      %88 = sbr.rel (0) target = $region37
    $region36: #{tpu_custom_call.1} parent=1 // pred_region
      %s90 = ssub.s32 16, 16
      %91 = vsyncadd [#allocation12], %s90
      %s93 = sshll.u32 [#allocation11], 4
      %s94 = int_to_ptr.vmem [resolvable:$true] %s93
      %96 = dma.hbm_to_vmem [thread:$0]  %s8, 16, %s94, [#allocation12]
    $region37: #{tpu_custom_call.1} parent=1 // pred_fallthru
      _
    // Predicated region
    $region38: #{tpu_custom_call.1} parent=1 // pred_check
      _
    $region39: #{tpu_custom_call.1} parent=1 // pred_check_branch
      %98 = sbr.rel (0) target = $region41
    $region40: #{tpu_custom_call.1} parent=1 // pred_region
      _
    $region41: #{tpu_custom_call.1} parent=1 // pred_fallthru
      _
    // Predicated region
    $region42: #{tpu_custom_call.1} parent=1 // pred_check
      _
    $region43: #{tpu_custom_call.1} parent=1 // pred_check_branch
      %100 = sbr.rel (0) target = $region45
    $region44: #{tpu_custom_call.1} parent=1 // pred_region
      _
    $region45: #{tpu_custom_call.1} parent=1 // pred_fallthru
      _
    // Predicated region
    $region46: #{tpu_custom_call.1} parent=1 // pred_check
      _
    $region47: #{tpu_custom_call.1} parent=1 // pred_check_branch
      %102 = sbr.rel (0) target = $region49
    $region48: #{tpu_custom_call.1} parent=1 // pred_region
      _
    $region49: #{tpu_custom_call.1} parent=1 // pred_fallthru
      _
    // Predicated region
    $region50: #{tpu_custom_call.1} parent=1 // pred_check
      _
    $region51: #{tpu_custom_call.1} parent=1 // pred_check_branch
      %104 = sbr.rel (0) target = $region53
    $region52: #{tpu_custom_call.1} parent=1 // pred_region
      _
    $region53: #{tpu_custom_call.1} parent=1 // pred_fallthru
      _
    // Predicated region
    $region54: #{tpu_custom_call.1} parent=1 // pred_check
      _
    $region55: #{tpu_custom_call.1} parent=1 // pred_check_branch
      %106 = sbr.rel (0) target = $region57
    $region56: #{tpu_custom_call.1} parent=1 // pred_region
      %107 = dma.done [#allocation3], 512
    $region57: #{tpu_custom_call.1} parent=1 // pred_fallthru
      _
    // Predicated region
    $region58: #{tpu_custom_call.1} parent=1 // pred_check
      _
    $region59: #{tpu_custom_call.1} parent=1 // pred_check_branch
      %109 = sbr.rel (0) target = $region61
    $region60: #{tpu_custom_call.1} parent=1 // pred_region
      %110 = dma.done [#allocation6], 256
    $region61: #{tpu_custom_call.1} parent=1 // pred_fallthru
      _
    // Predicated region
    $region62: #{tpu_custom_call.1} parent=1 // pred_check
      _
    $region63: #{tpu_custom_call.1} parent=1 // pred_check_branch
      %112 = sbr.rel (0) target = $region65
    $region64: #{tpu_custom_call.1} parent=1 // pred_region
      %113 = dma.done [#allocation6], 16
    $region65: #{tpu_custom_call.1} parent=1 // pred_fallthru
      _
    // Predicated region
    $region66: #{tpu_custom_call.1} parent=1 // pred_check
      _
    $region67: #{tpu_custom_call.1} parent=1 // pred_check_branch
      %115 = sbr.rel (0) target = $region69
    $region68: #{tpu_custom_call.1} parent=1 // pred_region
      %116 = dma.done [#allocation9], 2048
    $region69: #{tpu_custom_call.1} parent=1 // pred_fallthru
      _
    // Predicated region
    $region70: #{tpu_custom_call.1} parent=1 // pred_check
      _
    $region71: #{tpu_custom_call.1} parent=1 // pred_check_branch
      %118 = sbr.rel (0) target = $region73
    $region72: #{tpu_custom_call.1} parent=1 // pred_region
      %119 = dma.done [#allocation9], 1024
    $region73: #{tpu_custom_call.1} parent=1 // pred_fallthru
      _
    // Predicated region
    $region74: #{tpu_custom_call.1} parent=1 // pred_check
      _
    $region75: #{tpu_custom_call.1} parent=1 // pred_check_branch
      %121 = sbr.rel (0) target = $region77
    $region76: #{tpu_custom_call.1} parent=1 // pred_region
      %122 = dma.done [#allocation12], 16
    $region77: #{tpu_custom_call.1} parent=1 // pred_fallthru
      _
    %v124 = vld [vmem:[#allocation2] sm:$0xff]
    %v125 = vld [vmem:[#allocation2 + $0x8] sm:$0xff]
    %v126 = vld [vmem:[#allocation2 + $0x10] sm:$0xff]
    %v127 = vld [vmem:[#allocation2 + $0x18] sm:$0xff]
    %128 = vadd.xlane.f32.xlu0 %v124
    %v129 = vpop.xlane.xlu0 %128
    %130 = vadd.xlane.f32.xlu0 %v125
    %v131 = vpop.xlane.xlu0 %130
    %132 = vadd.xlane.f32.xlu0 %v126
    %v133 = vpop.xlane.xlu0 %132
    %134 = vadd.xlane.f32.xlu0 %v127
    %v135 = vpop.xlane.xlu0 %134
    %v136 = vmul.f32 %v129, 0.03125
    %v137 = vmul.f32 %v131, 0.03125
    %v138 = vmul.f32 %v133, 0.03125
    %v139 = vmul.f32 %v135, 0.03125
    %v140 = vsub.f32 %v124, %v136
    %v141 = vsub.f32 %v125, %v137
    %v142 = vsub.f32 %v126, %v138
    %v143 = vsub.f32 %v127, %v139
    %v144 = vlaneseq
    %v145 = vand.u32 %v144, 127
    %vm146 = vcmp.lt.s32.totalorder %v145, 32
    %v147 = vsel %vm146, 1, 0
    %vm148 = vcmp.eq.s32.totalorder %v147, 1
    %v149 = vsel %vm148, %v140, 0.0
    %v150 = vsel %vm148, %v141, 0.0
    %v151 = vsel %vm148, %v142, 0.0
    %v152 = vsel %vm148, %v143, 0.0
    %v153 = vmul.f32 %v149, %v149
    %v154 = vmul.f32 %v150, %v150
    %v155 = vmul.f32 %v151, %v151
    %v156 = vmul.f32 %v152, %v152
    %157 = vadd.xlane.f32.xlu0 %v153
    %v158 = vpop.xlane.xlu0 %157
    %159 = vadd.xlane.f32.xlu0 %v154
    %v160 = vpop.xlane.xlu0 %159
    %161 = vadd.xlane.f32.xlu0 %v155
    %v162 = vpop.xlane.xlu0 %161
    %163 = vadd.xlane.f32.xlu0 %v156
    %v164 = vpop.xlane.xlu0 %163
    %v165 = vmul.f32 %v158, 0.03125
    %v166 = vmul.f32 %v160, 0.03125
    %v167 = vmul.f32 %v162, 0.03125
    %v168 = vmul.f32 %v164, 0.03125
    %v169 = vadd.f32 %v165, 1e-05
    %v170 = vadd.f32 %v166, 1e-05
    %v171 = vadd.f32 %v167, 1e-05
    %v172 = vadd.f32 %v168, 1e-05
    %v173 = vrsqrt.pop %v169
    %v174 = vrsqrt.pop %v170
    %v175 = vrsqrt.pop %v171
    %v176 = vrsqrt.pop %v172
    %v177 = vmul.f32 %v149, %v173
    %v178 = vmul.f32 %v150, %v174
    %v179 = vmul.f32 %v151, %v175
    %v180 = vmul.f32 %v152, %v176
    %v181 = vld [vmem:[%s3] sm:$0x1]
    %v183 = vlaneseq
    %v184 = vshrl.u32 %v183, 7
    %v185 = vsub.s32 0, %v184
    %v186 = vrot.slane %v181, %v185
    %v188 = vmul.f32 %v177, %v186
    %v189 = vmul.f32 %v178, %v186
    %v190 = vmul.f32 %v179, %v186
    %v191 = vmul.f32 %v180, %v186
    %v192 = vld [vmem:[#allocation7] sm:$0x1]
    %v194 = vlaneseq
    %v195 = vshrl.u32 %v194, 7
    %v196 = vsub.s32 0, %v195
    %v197 = vrot.slane %v192, %v196
    %v199 = vadd.f32 %v188, %v197
    %v200 = vadd.f32 %v189, %v197
    %v201 = vadd.f32 %v190, %v197
    %v202 = vadd.f32 %v191, %v197
    %v203 = vpack.c.bf16 %v200, %v199
    %v204 = vpack.c.bf16 %v202, %v201
    %v205 = vld [vmem:[#allocation8] sm:$0xff]
    %v206 = vld [vmem:[#allocation8 + $0x8] sm:$0xff]
    %v207 = vld [vmem:[#allocation8 + $0x10] sm:$0xff]
    %v208 = vld [vmem:[#allocation8 + $0x18] sm:$0xff]
    %v209 = vld [vmem:[#allocation8 + $0x20] sm:$0xff]
    %v210 = vld [vmem:[#allocation8 + $0x28] sm:$0xff]
    %v211 = vld [vmem:[#allocation8 + $0x30] sm:$0xff]
    %v212 = vld [vmem:[#allocation8 + $0x38] sm:$0xff]
    %v213 = vld [vmem:[#allocation8 + $0x40] sm:$0xff]
    %v214 = vld [vmem:[#allocation8 + $0x48] sm:$0xff]
    %v215 = vld [vmem:[#allocation8 + $0x50] sm:$0xff]
    %v216 = vld [vmem:[#allocation8 + $0x58] sm:$0xff]
    %v217 = vld [vmem:[#allocation8 + $0x60] sm:$0xff]
    %v218 = vld [vmem:[#allocation8 + $0x68] sm:$0xff]
    %v219 = vld [vmem:[#allocation8 + $0x70] sm:$0xff]
    %v220 = vld [vmem:[#allocation8 + $0x78] sm:$0xff]
    %v221 = vld [vmem:[%s6] sm:$0x3]
    %v223 = vlaneseq
    %v224 = vshrl.u32 %v223, 7
    %v225 = vsub.s32 0, %v224
    %v226 = vrot.slane %v221, %v225
    %v227 = vlaneseq
    %v228 = vshrl.u32 %v227, 7
    %v229 = vsub.s32 1, %v228
    %v230 = vrot.slane %v221, %v229
    %v249 = vunpack.c.l.b16 %v205
    %v250 = vunpack.c.h.b16 %v205
    %v251 = vunpack.c.l.b16 %v206
    %v252 = vunpack.c.h.b16 %v206
    %v253 = vunpack.c.l.b16 %v207
    %v254 = vunpack.c.h.b16 %v207
    %v255 = vunpack.c.l.b16 %v208
    %v256 = vunpack.c.h.b16 %v208
    %v257 = vunpack.c.l.b16 %v209
    %v258 = vunpack.c.h.b16 %v209
    %v259 = vunpack.c.l.b16 %v210
    %v260 = vunpack.c.h.b16 %v210
    %v261 = vunpack.c.l.b16 %v211
    %v262 = vunpack.c.h.b16 %v211
    %v263 = vunpack.c.l.b16 %v212
    %v264 = vunpack.c.h.b16 %v212
    %v265 = vunpack.c.l.b16 %v213
    %v266 = vunpack.c.h.b16 %v213
    %v267 = vunpack.c.l.b16 %v214
    %v268 = vunpack.c.h.b16 %v214
    %v269 = vunpack.c.l.b16 %v215
    %v270 = vunpack.c.h.b16 %v215
    %v271 = vunpack.c.l.b16 %v216
    %v272 = vunpack.c.h.b16 %v216
    %v273 = vunpack.c.l.b16 %v217
    %v274 = vunpack.c.h.b16 %v217
    %v275 = vunpack.c.l.b16 %v218
    %v276 = vunpack.c.h.b16 %v218
    %v277 = vunpack.c.l.b16 %v219
    %v278 = vunpack.c.h.b16 %v219
    %v279 = vunpack.c.l.b16 %v220
    %v280 = vunpack.c.h.b16 %v220
    %v281 = vpack.c.b16 %v251, %v249
    %v282 = vpack.c.b16 %v252, %v250
    %v283 = vpack.c.b16 %v255, %v253
    %v284 = vpack.c.b16 %v256, %v254
    %v285 = vpack.c.b16 %v259, %v257
    %v286 = vpack.c.b16 %v260, %v258
    %v287 = vpack.c.b16 %v263, %v261
    %v288 = vpack.c.b16 %v264, %v262
    %v289 = vpack.c.b16 %v267, %v265
    %v290 = vpack.c.b16 %v268, %v266
    %v291 = vpack.c.b16 %v271, %v269
    %v292 = vpack.c.b16 %v272, %v270
    %v293 = vpack.c.b16 %v275, %v273
    %v294 = vpack.c.b16 %v276, %v274
    %v295 = vpack.c.b16 %v279, %v277
    %v296 = vpack.c.b16 %v280, %v278
    %313 = vmatprep.subr.bf16.mxu0 %v282
    %314 = vmatpush1.bf16.msra.mxu0 %v281
    %315 = vmatprep.subr.bf16.mxu0 %v284
    %316 = vmatpush1.bf16.msra.mxu0 %v283
    %317 = vmatprep.subr.bf16.mxu0 %v286
    %318 = vmatpush1.bf16.msra.mxu0 %v285
    %319 = vmatprep.subr.bf16.mxu0 %v288
    %320 = vmatpush1.bf16.msra.mxu0 %v287
    %321 = vmatprep.subr.bf16.mxu0 %v290
    %322 = vmatpush1.bf16.msra.mxu0 %v289
    %323 = vmatprep.subr.bf16.mxu0 %v292
    %324 = vmatpush1.bf16.msra.mxu0 %v291
    %325 = vmatprep.subr.bf16.mxu0 %v294
    %326 = vmatpush1.bf16.msra.mxu0 %v293
    %327 = vmatprep.subr.bf16.mxu0 %v296
    %328 = vmatpush1.bf16.msra.mxu0 %v295
    %329 = vmatprep.subr.bf16.mxu0 0
    %330 = vmatpush1.bf16.msra.mxu0 0
    %331 = vmatprep.subr.bf16.mxu0 0
    %332 = vmatpush1.bf16.msra.mxu0 0
    %333 = vmatprep.subr.bf16.mxu0 0
    %334 = vmatpush1.bf16.msra.mxu0 0
    %335 = vmatprep.subr.bf16.mxu0 0
    %336 = vmatpush1.bf16.msra.mxu0 0
    %337 = vmatprep.subr.bf16.mxu0 0
    %338 = vmatpush1.bf16.msra.mxu0 0
    %339 = vmatprep.subr.bf16.mxu0 0
    %340 = vmatpush1.bf16.msra.mxu0 0
    %341 = vmatprep.subr.bf16.mxu0 0
    %342 = vmatpush1.bf16.msra.mxu0 0
    %343 = vmatprep.subr.bf16.mxu0 0
    %344 = vmatpush1.bf16.msra.mxu0 0
    %345 = vmatprep.mubr.bf16.mxu0 0
    %346 = vmatmul.mubr.bf16.gmra.mrb[0].mxu0 %v203
    %v347 = vpop.f32.mrb[0].mxu0
    %v348 = vadd.f32 %v226, %v347
    %v349 = vpop.f32.mrb[0].mxu0
    %v350 = vadd.f32 %v230, %v349
    %v351 = vpop.f32.mrb[0].mxu0
    %v352 = vadd.f32 %v226, %v351
    %v353 = vpop.f32.mrb[0].mxu0
    %v354 = vadd.f32 %v230, %v353
    %355 = vmatprep.mubr.bf16.mxu0 0
    %356 = vmatmul.mubr.bf16.gmra.mrb[0].mxu0 %v204
    %v357 = vpop.f32.mrb[0].mxu0
    %v358 = vadd.f32 %v226, %v357
    %v359 = vpop.f32.mrb[0].mxu0
    %v360 = vadd.f32 %v230, %v359
    %v361 = vpop.f32.mrb[0].mxu0
    %v362 = vadd.f32 %v226, %v361
    %v363 = vpop.f32.mrb[0].mxu0
    %v364 = vadd.f32 %v230, %v363
    %365 = vdwg.mxu0
    %v366 = vxor.u32 %v348, 2147483648
    %v367 = vxor.u32 %v350, 2147483648
    %v368 = vxor.u32 %v352, 2147483648
    %v369 = vxor.u32 %v354, 2147483648
    %v370 = vxor.u32 %v358, 2147483648
    %v371 = vxor.u32 %v360, 2147483648
    %v372 = vxor.u32 %v362, 2147483648
    %v373 = vxor.u32 %v364, 2147483648
    %v374 = vmul.f32 %v366, 1.442695
    %v375 = vpow.pop %v374
    %v376 = vmul.f32 %v367, 1.442695
    %v377 = vpow.pop %v376
    %v378 = vmul.f32 %v368, 1.442695
    %v379 = vpow.pop %v378
    %v380 = vmul.f32 %v369, 1.442695
    %v381 = vpow.pop %v380
    %v382 = vmul.f32 %v370, 1.442695
    %v383 = vpow.pop %v382
    %v384 = vmul.f32 %v371, 1.442695
    %v385 = vpow.pop %v384
    %v386 = vmul.f32 %v372, 1.442695
    %v387 = vpow.pop %v386
    %v388 = vmul.f32 %v373, 1.442695
    %v389 = vpow.pop %v388
    %v390 = vadd.f32 %v375, 1.0
    %v391 = vadd.f32 %v377, 1.0
    %v392 = vadd.f32 %v379, 1.0
    %v393 = vadd.f32 %v381, 1.0
    %v394 = vadd.f32 %v383, 1.0
    %v395 = vadd.f32 %v385, 1.0
    %v396 = vadd.f32 %v387, 1.0
    %v397 = vadd.f32 %v389, 1.0
    %v398 = vrcp.pop %v390
    %v399 = vmul.f32 1.0, %v398
    %v400 = vrcp.pop %v391
    %v401 = vmul.f32 1.0, %v400
    %v402 = vrcp.pop %v392
    %v403 = vmul.f32 1.0, %v402
    %v404 = vrcp.pop %v393
    %v405 = vmul.f32 1.0, %v404
    %v406 = vrcp.pop %v394
    %v407 = vmul.f32 1.0, %v406
    %v408 = vrcp.pop %v395
    %v409 = vmul.f32 1.0, %v408
    %v410 = vrcp.pop %v396
    %v411 = vmul.f32 1.0, %v410
    %v412 = vrcp.pop %v397
    %v413 = vmul.f32 1.0, %v412
    %v414 = vmul.f32 %v348, %v399
    %v415 = vmul.f32 %v350, %v401
    %v416 = vmul.f32 %v352, %v403
    %v417 = vmul.f32 %v354, %v405
    %v418 = vmul.f32 %v358, %v407
    %v419 = vmul.f32 %v360, %v409
    %v420 = vmul.f32 %v362, %v411
    %v421 = vmul.f32 %v364, %v413
    %v422 = vld [vmem:[#allocation10] sm:$0xf]
    %v423 = vld [vmem:[#allocation10 + $0x4] sm:$0xf]
    %v424 = vld [vmem:[#allocation10 + $0x8] sm:$0xf]
    %v425 = vld [vmem:[#allocation10 + $0xc] sm:$0xf]
    %v426 = vld [vmem:[#allocation10 + $0x10] sm:$0xf]
    %v427 = vld [vmem:[#allocation10 + $0x14] sm:$0xf]
    %v428 = vld [vmem:[#allocation10 + $0x18] sm:$0xf]
    %v429 = vld [vmem:[#allocation10 + $0x1c] sm:$0xf]
    %v430 = vld [vmem:[#allocation10 + $0x20] sm:$0xf]
    %v431 = vld [vmem:[#allocation10 + $0x24] sm:$0xf]
    %v432 = vld [vmem:[#allocation10 + $0x28] sm:$0xf]
    %v433 = vld [vmem:[#allocation10 + $0x2c] sm:$0xf]
    %v434 = vld [vmem:[#allocation10 + $0x30] sm:$0xf]
    %v435 = vld [vmem:[#allocation10 + $0x34] sm:$0xf]
    %v436 = vld [vmem:[#allocation10 + $0x38] sm:$0xf]
    %v437 = vld [vmem:[#allocation10 + $0x3c] sm:$0xf]
    %v438 = vld [vmem:[#allocation11] sm:$0x1]
    %v440 = vlaneseq
    %v441 = vshrl.u32 %v440, 7
    %v442 = vsub.s32 0, %v441
    %v443 = vrot.slane %v438, %v442
    %v461 = vunpack.c.l.b16 %v422
    %v462 = vunpack.c.l.b16 %v423
    %v463 = vunpack.c.l.b16 %v424
    %v464 = vunpack.c.l.b16 %v425
    %v465 = vunpack.c.l.b16 %v426
    %v466 = vunpack.c.l.b16 %v427
    %v467 = vunpack.c.l.b16 %v428
    %v468 = vunpack.c.l.b16 %v429
    %v469 = vunpack.c.l.b16 %v430
    %v470 = vunpack.c.l.b16 %v431
    %v471 = vunpack.c.l.b16 %v432
    %v472 = vunpack.c.l.b16 %v433
    %v473 = vunpack.c.l.b16 %v434
    %v474 = vunpack.c.l.b16 %v435
    %v475 = vunpack.c.l.b16 %v436
    %v476 = vunpack.c.l.b16 %v437
    %v477 = vpack.c.b16 %v462, %v461
    %v478 = vpack.c.b16 %v464, %v463
    %v479 = vpack.c.b16 %v466, %v465
    %v480 = vpack.c.b16 %v468, %v467
    %v481 = vpack.c.b16 %v470, %v469
    %v482 = vpack.c.b16 %v472, %v471
    %v483 = vpack.c.b16 %v474, %v473
    %v484 = vpack.c.b16 %v476, %v475
    %493 = vmatprep.subr.bf16.mxu0 0
    %494 = vmatpush1.bf16.msra.mxu0 %v477
    %495 = vmatprep.subr.bf16.mxu0 0
    %496 = vmatpush1.bf16.msra.mxu0 %v478
    %497 = vmatprep.subr.bf16.mxu0 0
    %498 = vmatpush1.bf16.msra.mxu0 %v479
    %499 = vmatprep.subr.bf16.mxu0 0
    %500 = vmatpush1.bf16.msra.mxu0 %v480
    %501 = vmatprep.subr.bf16.mxu0 0
    %502 = vmatpush1.bf16.msra.mxu0 %v481
    %503 = vmatprep.subr.bf16.mxu0 0
    %504 = vmatpush1.bf16.msra.mxu0 %v482
    %505 = vmatprep.subr.bf16.mxu0 0
    %506 = vmatpush1.bf16.msra.mxu0 %v483
    %507 = vmatprep.subr.bf16.mxu0 0
    %508 = vmatpush1.bf16.msra.mxu0 %v484
    %509 = vmatprep.subr.bf16.mxu0 0
    %510 = vmatpush1.bf16.msra.mxu0 0
    %511 = vmatprep.subr.bf16.mxu0 0
    %512 = vmatpush1.bf16.msra.mxu0 0
    %513 = vmatprep.subr.bf16.mxu0 0
    %514 = vmatpush1.bf16.msra.mxu0 0
    %515 = vmatprep.subr.bf16.mxu0 0
    %516 = vmatpush1.bf16.msra.mxu0 0
    %517 = vmatprep.subr.bf16.mxu0 0
    %518 = vmatpush1.bf16.msra.mxu0 0
    %519 = vmatprep.subr.bf16.mxu0 0
    %520 = vmatpush1.bf16.msra.mxu0 0
    %521 = vmatprep.subr.bf16.mxu0 0
    %522 = vmatpush1.bf16.msra.mxu0 0
    %523 = vmatprep.subr.bf16.mxu0 0
    %524 = vmatpush1.bf16.msra.mxu0 0
    %525 = vmatprep.mubr.bf16.mxu0 0
    %526 = vmatmul.mubr.bf16.gmra.mrb[0].mxu0 %v203
    %v527 = vpop.f32.mrb[0].mxu0
    %v528 = vadd.f32 %v443, %v527
    %v529 = vpop.f32.mrb[0].mxu0
    %v530 = vpop.f32.mrb[0].mxu0
    %v531 = vadd.f32 %v443, %v530
    %v532 = vpop.f32.mrb[0].mxu0
    %533 = vmatprep.mubr.bf16.mxu0 0
    %534 = vmatmul.mubr.bf16.gmra.mrb[0].mxu0 %v204
    %v535 = vpop.f32.mrb[0].mxu0
    %v536 = vadd.f32 %v443, %v535
    %v537 = vpop.f32.mrb[0].mxu0
    %v538 = vpop.f32.mrb[0].mxu0
    %v539 = vadd.f32 %v443, %v538
    %v540 = vpop.f32.mrb[0].mxu0
    %541 = vdwg.mxu0
    %v542 = vxor.u32 %v528, 2147483648
    %v543 = vxor.u32 %v531, 2147483648
    %v544 = vxor.u32 %v536, 2147483648
    %v545 = vxor.u32 %v539, 2147483648
    %v546 = vmul.f32 %v542, 1.442695
    %v547 = vpow.pop %v546
    %v548 = vmul.f32 %v543, 1.442695
    %v549 = vpow.pop %v548
    %v550 = vmul.f32 %v544, 1.442695
    %v551 = vpow.pop %v550
    %v552 = vmul.f32 %v545, 1.442695
    %v553 = vpow.pop %v552
    %v554 = vadd.f32 %v547, 1.0
    %v555 = vadd.f32 %v549, 1.0
    %v556 = vadd.f32 %v551, 1.0
    %v557 = vadd.f32 %v553, 1.0
    %v558 = vrcp.pop %v554
    %v559 = vmul.f32 1.0, %v558
    %v560 = vrcp.pop %v555
    %v561 = vmul.f32 1.0, %v560
    %v562 = vrcp.pop %v556
    %v563 = vmul.f32 1.0, %v562
    %v564 = vrcp.pop %v557
    %v565 = vmul.f32 1.0, %v564
    %v566 = vmul.f32 %v528, %v559
    %v567 = vmul.f32 %v531, %v561
    %v568 = vmul.f32 %v536, %v563
    %v569 = vmul.f32 %v539, %v565
    %v570 = vld [vmem:[%s9] sm:$0xf]
    %v571 = vld [vmem:[%s10] sm:$0xf]
    %v572 = vlaneseq
    %v573 = vshrl.u32 %v572, 7
    %v574 = vsub.s32 0, %v573
    %v575 = vrot.slane %v570, %v574
    %v576 = vmul.f32 %v566, %v575
    %v577 = vmul.f32 %v567, %v575
    %v578 = vmul.f32 %v568, %v575
    %v579 = vmul.f32 %v569, %v575
    %v580 = vlaneseq
    %v581 = vshrl.u32 %v580, 7
    %v582 = vsub.s32 0, %v581
    %v583 = vrot.slane %v571, %v582
    %v584 = vadd.f32 %v576, %v583
    %v585 = vadd.f32 %v577, %v583
    %v586 = vadd.f32 %v578, %v583
    %v587 = vadd.f32 %v579, %v583
    %v588 = vlaneseq
    %v589 = vshrl.u32 %v588, 7
    %v590 = vsub.s32 1, %v589
    %v591 = vrot.slane %v570, %v590
    %v592 = vmul.f32 %v566, %v591
    %v593 = vmul.f32 %v567, %v591
    %v594 = vmul.f32 %v568, %v591
    %v595 = vmul.f32 %v569, %v591
    %v596 = vlaneseq
    %v597 = vshrl.u32 %v596, 7
    %v598 = vsub.s32 1, %v597
    %v599 = vrot.slane %v571, %v598
    %v600 = vadd.f32 %v592, %v599
    %v601 = vadd.f32 %v593, %v599
    %v602 = vadd.f32 %v594, %v599
    %v603 = vadd.f32 %v595, %v599
    %v604 = vlaneseq
    %v605 = vshrl.u32 %v604, 7
    %v606 = vsub.s32 2, %v605
    %v607 = vrot.slane %v570, %v606
    %v608 = vmul.f32 %v566, %v607
    %v609 = vmul.f32 %v567, %v607
    %v610 = vmul.f32 %v568, %v607
    %v611 = vmul.f32 %v569, %v607
    %v612 = vlaneseq
    %v613 = vshrl.u32 %v612, 7
    %v614 = vsub.s32 2, %v613
    %v615 = vrot.slane %v571, %v614
    %v616 = vadd.f32 %v608, %v615
    %v617 = vadd.f32 %v609, %v615
    %v618 = vadd.f32 %v610, %v615
    %v619 = vadd.f32 %v611, %v615
    %v620 = vlaneseq
    %v621 = vshrl.u32 %v620, 7
    %v622 = vsub.s32 3, %v621
    %v623 = vrot.slane %v570, %v622
    %v624 = vmul.f32 %v566, %v623
    %v625 = vmul.f32 %v567, %v623
    %v626 = vmul.f32 %v568, %v623
    %v627 = vmul.f32 %v569, %v623
    %v628 = vlaneseq
    %v629 = vshrl.u32 %v628, 7
    %v630 = vsub.s32 3, %v629
    %v631 = vrot.slane %v571, %v630
    %v632 = vadd.f32 %v624, %v631
    %v633 = vadd.f32 %v625, %v631
    %v634 = vadd.f32 %v626, %v631
    %v635 = vadd.f32 %v627, %v631
    %v636 = vld [vmem:[%s1] sm:$0xff]
    %v637 = vld [vmem:[%s1 + $0x8] sm:$0xff]
    %v638 = vld [vmem:[%s1 + $0x10] sm:$0xff]
    %v639 = vld [vmem:[%s1 + $0x18] sm:$0xff]
    %641 = vset.pattern.permute.xlu0 0
    %642 = vperm.xlu0 %641, %v636
    %v643 = vpop.permute.xlu0 %642
    %646 = vset.pattern.permute.xlu0 0
    %647 = vperm.xlu0 %646, %v637
    %v648 = vpop.permute.xlu0 %647
    %651 = vset.pattern.permute.xlu0 0
    %652 = vperm.xlu0 %651, %v638
    %v653 = vpop.permute.xlu0 %652
    %656 = vset.pattern.permute.xlu0 0
    %657 = vperm.xlu0 %656, %v639
    %v658 = vpop.permute.xlu0 %657
    %v660 = vmul.f32 %v414, %v643
    %v661 = vmul.f32 %v416, %v648
    %v662 = vmul.f32 %v418, %v653
    %v663 = vmul.f32 %v420, %v658
    %v664 = vpack.c.bf16 %v661, %v660
    %v665 = vpack.c.bf16 %v663, %v662
    %v666 = vpack.c.bf16 %v585, %v584
    %v667 = vpack.c.bf16 %v587, %v586
    %v668 = vpack.c.bf16 %v617, %v616
    %v669 = vpack.c.bf16 %v619, %v618
    %670 = vmatprep.subr.bf16.mxu0 0
    %671 = vmatpush1.bf16.xpose.msra.mxu0 %v668
    %672 = vmatprep.subr.bf16.mxu0 0
    %673 = vmatpush1.bf16.xpose.msra.mxu0 0
    %674 = vmatprep.subr.bf16.mxu0 0
    %675 = vmatpush1.bf16.xpose.msra.mxu0 0
    %676 = vmatprep.subr.bf16.mxu0 0
    %677 = vmatpush1.bf16.xpose.msra.mxu0 0
    %678 = vmatprep.subr.bf16.mxu0 0
    %679 = vmatpush1.bf16.xpose.msra.mxu0 0
    %680 = vmatprep.subr.bf16.mxu0 0
    %681 = vmatpush1.bf16.xpose.msra.mxu0 0
    %682 = vmatprep.subr.bf16.mxu0 0
    %683 = vmatpush1.bf16.xpose.msra.mxu0 0
    %684 = vmatprep.subr.bf16.mxu0 0
    %685 = vmatpush1.bf16.xpose.msra.mxu0 0
    %686 = vmatprep.subr.bf16.mxu0 0
    %687 = vmatpush1.bf16.xpose.msra.mxu0 0
    %688 = vmatprep.subr.bf16.mxu0 0
    %689 = vmatpush1.bf16.xpose.msra.mxu0 0
    %690 = vmatprep.subr.bf16.mxu0 0
    %691 = vmatpush1.bf16.xpose.msra.mxu0 0
    %692 = vmatprep.subr.bf16.mxu0 0
    %693 = vmatpush1.bf16.xpose.msra.mxu0 0
    %694 = vmatprep.subr.bf16.mxu0 0
    %695 = vmatpush1.bf16.xpose.msra.mxu0 0
    %696 = vmatprep.subr.bf16.mxu0 0
    %697 = vmatpush1.bf16.xpose.msra.mxu0 0
    %698 = vmatprep.subr.bf16.mxu0 0
    %699 = vmatpush1.bf16.xpose.msra.mxu0 0
    %700 = vmatprep.subr.bf16.mxu0 0
    %701 = vmatpush1.bf16.xpose.msra.mxu0 0
    %702 = vmatprep.mubr.bf16.mxu0 0
    %703 = vmatmul.mubr.bf16.gmra.mrb[0].mxu0 %v666
    %v704 = vpop.f32.mrb[0].mxu0
    %v705 = vadd.f32 0.0, %v704
    %v706 = vpop.f32.mrb[0].mxu0
    %v707 = vpop.f32.mrb[0].mxu0
    %v708 = vadd.f32 0.0, %v707
    %v709 = vpop.f32.mrb[0].mxu0
    %710 = vdwg.mxu0
    %711 = vmatprep.subr.bf16.mxu0 0
    %712 = vmatpush1.bf16.xpose.msra.mxu0 %v669
    %713 = vmatprep.subr.bf16.mxu0 0
    %714 = vmatpush1.bf16.xpose.msra.mxu0 0
    %715 = vmatprep.subr.bf16.mxu0 0
    %716 = vmatpush1.bf16.xpose.msra.mxu0 0
    %717 = vmatprep.subr.bf16.mxu0 0
    %718 = vmatpush1.bf16.xpose.msra.mxu0 0
    %719 = vmatprep.subr.bf16.mxu0 0
    %720 = vmatpush1.bf16.xpose.msra.mxu0 0
    %721 = vmatprep.subr.bf16.mxu0 0
    %722 = vmatpush1.bf16.xpose.msra.mxu0 0
    %723 = vmatprep.subr.bf16.mxu0 0
    %724 = vmatpush1.bf16.xpose.msra.mxu0 0
    %725 = vmatprep.subr.bf16.mxu0 0
    %726 = vmatpush1.bf16.xpose.msra.mxu0 0
    %727 = vmatprep.subr.bf16.mxu0 0
    %728 = vmatpush1.bf16.xpose.msra.mxu0 0
    %729 = vmatprep.subr.bf16.mxu0 0
    %730 = vmatpush1.bf16.xpose.msra.mxu0 0
    %731 = vmatprep.subr.bf16.mxu0 0
    %732 = vmatpush1.bf16.xpose.msra.mxu0 0
    %733 = vmatprep.subr.bf16.mxu0 0
    %734 = vmatpush1.bf16.xpose.msra.mxu0 0
    %735 = vmatprep.subr.bf16.mxu0 0
    %736 = vmatpush1.bf16.xpose.msra.mxu0 0
    %737 = vmatprep.subr.bf16.mxu0 0
    %738 = vmatpush1.bf16.xpose.msra.mxu0 0
    %739 = vmatprep.subr.bf16.mxu0 0
    %740 = vmatpush1.bf16.xpose.msra.mxu0 0
    %741 = vmatprep.subr.bf16.mxu0 0
    %742 = vmatpush1.bf16.xpose.msra.mxu0 0
    %743 = vmatprep.mubr.bf16.mxu0 0
    %744 = vmatmul.mubr.bf16.gmra.mrb[0].mxu0 %v667
    %v745 = vpop.f32.mrb[0].mxu0
    %v746 = vadd.f32 0.0, %v745
    %v747 = vpop.f32.mrb[0].mxu0
    %v748 = vpop.f32.mrb[0].mxu0
    %v749 = vadd.f32 0.0, %v748
    %v750 = vpop.f32.mrb[0].mxu0
    %751 = vdwg.mxu0
    %v752 = vmul.f32 %v705, 0.011048543
    %v753 = vmul.f32 %v708, 0.011048543
    %v754 = vmul.f32 %v746, 0.011048543
    %v755 = vmul.f32 %v749, 0.011048543
    %v756 = vld [vmem:[#allocation5] sm:$0xff]
    %v757 = vld [vmem:[#allocation5 + $0x8] sm:$0xff]
    %v758 = vadd.f32 %v752, %v756
    %v759 = vadd.f32 %v753, %v757
    %v760 = vadd.f32 %v754, %v756
    %v761 = vadd.f32 %v755, %v757
    %v762 = vmul.f32 %v758, %v758
    %v763 = vmul.f32 %v759, %v759
    %v764 = vmul.f32 %v760, %v760
    %v765 = vmul.f32 %v761, %v761
    %v766 = vmul.f32 %v762, %v758
    %v767 = vmul.f32 %v763, %v759
    %v768 = vmul.f32 %v764, %v760
    %v769 = vmul.f32 %v765, %v761
    %v770 = vmul.f32 %v766, 0.07023816
    %v771 = vmul.f32 %v767, 0.07023816
    %v772 = vmul.f32 %v768, 0.07023816
    %v773 = vmul.f32 %v769, 0.07023816
    %v774 = vadd.f32 %v758, %v770
    %v775 = vadd.f32 %v759, %v771
    %v776 = vadd.f32 %v760, %v772
    %v777 = vadd.f32 %v761, %v773
    %v778 = vtanh.pop %v774
    %v779 = vtanh.pop %v775
    %v780 = vtanh.pop %v776
    %v781 = vtanh.pop %v777
    %v782 = vmul.f32 %v778, 0.5
    %v783 = vmul.f32 %v779, 0.5
    %v784 = vmul.f32 %v780, 0.5
    %v785 = vmul.f32 %v781, 0.5
    %v786 = vadd.f32 %v782, 0.5
    %v787 = vadd.f32 %v783, 0.5
    %v788 = vadd.f32 %v784, 0.5
    %v789 = vadd.f32 %v785, 0.5
    %v790 = vpack.c.bf16 %v787, %v786
    %v791 = vpack.c.bf16 %v789, %v788
    %792 = vxpose.xlu0.b32.start [1/16] %v632, 128
    %793 = vxpose.xlu0.b32.cont [2/16] %v633, 128
    %794 = vxpose.xlu0.b32.cont [3/16] 0.0, 128
    %795 = vxpose.xlu0.b32.cont [4/16] 0.0, 128
    %796 = vxpose.xlu0.b32.cont [5/16] 0.0, 128
    %797 = vxpose.xlu0.b32.cont [6/16] 0.0, 128
    %798 = vxpose.xlu0.b32.cont [7/16] 0.0, 128
    %799 = vxpose.xlu0.b32.cont [8/16] 0.0, 128
    %800 = vxpose.xlu0.b32.cont [9/16] 0.0, 128
    %801 = vxpose.xlu0.b32.cont [10/16] 0.0, 128
    %802 = vxpose.xlu0.b32.cont [11/16] 0.0, 128
    %803 = vxpose.xlu0.b32.cont [12/16] 0.0, 128
    %804 = vxpose.xlu0.b32.cont [13/16] 0.0, 128
    %805 = vxpose.xlu0.b32.cont [14/16] 0.0, 128
    %806 = vxpose.xlu0.b32.cont [15/16] 0.0, 128
    %807 = vxpose.xlu0.b32.end [16/16] 0.0, 128
    %v808 = vpop.trf.xlu0
    %v809 = vpop.trf.xlu0
    %v810 = vpop.trf.xlu0
    %v811 = vpop.trf.xlu0
    %v812 = vpop.trf.xlu0
    %v813 = vpop.trf.xlu0
    %v814 = vpop.trf.xlu0
    %v815 = vpop.trf.xlu0
    %v816 = vpop.trf.xlu0
    %v817 = vpop.trf.xlu0
    %v818 = vpop.trf.xlu0
    %v819 = vpop.trf.xlu0
    %v820 = vpop.trf.xlu0
    %v821 = vpop.trf.xlu0
    %v822 = vpop.trf.xlu0
    %v823 = vpop.trf.xlu0
    %824 = vxpose.xlu0.b32.start [1/16] %v634, 128
    %825 = vxpose.xlu0.b32.cont [2/16] %v635, 128
    %826 = vxpose.xlu0.b32.cont [3/16] 0.0, 128
    %827 = vxpose.xlu0.b32.cont [4/16] 0.0, 128
    %828 = vxpose.xlu0.b32.cont [5/16] 0.0, 128
    %829 = vxpose.xlu0.b32.cont [6/16] 0.0, 128
    %830 = vxpose.xlu0.b32.cont [7/16] 0.0, 128
    %831 = vxpose.xlu0.b32.cont [8/16] 0.0, 128
    %832 = vxpose.xlu0.b32.cont [9/16] 0.0, 128
    %833 = vxpose.xlu0.b32.cont [10/16] 0.0, 128
    %834 = vxpose.xlu0.b32.cont [11/16] 0.0, 128
    %835 = vxpose.xlu0.b32.cont [12/16] 0.0, 128
    %836 = vxpose.xlu0.b32.cont [13/16] 0.0, 128
    %837 = vxpose.xlu0.b32.cont [14/16] 0.0, 128
    %838 = vxpose.xlu0.b32.cont [15/16] 0.0, 128
    %839 = vxpose.xlu0.b32.end [16/16] 0.0, 128
    %v840 = vpop.trf.xlu0
    %v841 = vpop.trf.xlu0
    %v842 = vpop.trf.xlu0
    %v843 = vpop.trf.xlu0
    %v844 = vpop.trf.xlu0
    %v845 = vpop.trf.xlu0
    %v846 = vpop.trf.xlu0
    %v847 = vpop.trf.xlu0
    %v848 = vpop.trf.xlu0
    %v849 = vpop.trf.xlu0
    %v850 = vpop.trf.xlu0
    %v851 = vpop.trf.xlu0
    %v852 = vpop.trf.xlu0
    %v853 = vpop.trf.xlu0
    %v854 = vpop.trf.xlu0
    %v855 = vpop.trf.xlu0
    %v856 = vpack.c.bf16 %v809, %v808
    %v857 = vpack.c.bf16 %v811, %v810
    %v858 = vpack.c.bf16 %v813, %v812
    %v859 = vpack.c.bf16 %v815, %v814
    %v860 = vpack.c.bf16 %v817, %v816
    %v861 = vpack.c.bf16 %v819, %v818
    %v862 = vpack.c.bf16 %v821, %v820
    %v863 = vpack.c.bf16 %v823, %v822
    %v864 = vpack.c.bf16 %v841, %v840
    %v865 = vpack.c.bf16 %v843, %v842
    %v866 = vpack.c.bf16 %v845, %v844
    %v867 = vpack.c.bf16 %v847, %v846
    %v868 = vpack.c.bf16 %v849, %v848
    %v869 = vpack.c.bf16 %v851, %v850
    %v870 = vpack.c.bf16 %v853, %v852
    %v871 = vpack.c.bf16 %v855, %v854
    %vm872 = vcmask 130048
    %v874 = vsel %vm872, %v856, 0
    %v877 = vsel %vm872, %v857, 0
    %v880 = vsel %vm872, %v858, 0
    %v883 = vsel %vm872, %v859, 0
    %v886 = vsel %vm872, %v860, 0
    %v889 = vsel %vm872, %v861, 0
    %v892 = vsel %vm872, %v862, 0
    %v895 = vsel %vm872, %v863, 0
    %897 = vmatprep.subr.bf16.mxu0 0
    %898 = vmatpush1.bf16.msra.mxu0 %v664
    %899 = vmatprep.subr.bf16.mxu0 0
    %900 = vmatpush1.bf16.msra.mxu0 0
    %901 = vmatprep.subr.bf16.mxu0 0
    %902 = vmatpush1.bf16.msra.mxu0 0
    %903 = vmatprep.subr.bf16.mxu0 0
    %904 = vmatpush1.bf16.msra.mxu0 0
    %905 = vmatprep.subr.bf16.mxu0 0
    %906 = vmatpush1.bf16.msra.mxu0 0
    %907 = vmatprep.subr.bf16.mxu0 0
    %908 = vmatpush1.bf16.msra.mxu0 0
    %909 = vmatprep.subr.bf16.mxu0 0
    %910 = vmatpush1.bf16.msra.mxu0 0
    %911 = vmatprep.subr.bf16.mxu0 0
    %912 = vmatpush1.bf16.msra.mxu0 0
    %913 = vmatprep.subr.bf16.mxu0 0
    %914 = vmatpush1.bf16.msra.mxu0 0
    %915 = vmatprep.subr.bf16.mxu0 0
    %916 = vmatpush1.bf16.msra.mxu0 0
    %917 = vmatprep.subr.bf16.mxu0 0
    %918 = vmatpush1.bf16.msra.mxu0 0
    %919 = vmatprep.subr.bf16.mxu0 0
    %920 = vmatpush1.bf16.msra.mxu0 0
    %921 = vmatprep.subr.bf16.mxu0 0
    %922 = vmatpush1.bf16.msra.mxu0 0
    %923 = vmatprep.subr.bf16.mxu0 0
    %924 = vmatpush1.bf16.msra.mxu0 0
    %925 = vmatprep.subr.bf16.mxu0 0
    %926 = vmatpush1.bf16.msra.mxu0 0
    %927 = vmatprep.subr.bf16.mxu0 0
    %928 = vmatpush1.bf16.msra.mxu0 0
    %929 = vmatprep.mubr.bf16.mxu0 0
    %930 = vmatmul.mubr.bf16.gmra.mrb[0].mxu0 %v874
    %v931 = vpop.f32.mrb[0].mxu0
    %v932 = vadd.f32 0.0, %v931
    %v933 = vpop.f32.mrb[0].mxu0
    %v934 = vpop.f32.mrb[0].mxu0
    %v935 = vadd.f32 0.0, %v934
    %v936 = vpop.f32.mrb[0].mxu0
    %937 = vmatprep.mubr.bf16.mxu0 0
    %938 = vmatmul.mubr.bf16.gmra.mrb[0].mxu0 %v877
    %v939 = vpop.f32.mrb[0].mxu0
    %v940 = vadd.f32 0.0, %v939
    %v941 = vpop.f32.mrb[0].mxu0
    %v942 = vpop.f32.mrb[0].mxu0
    %v943 = vadd.f32 0.0, %v942
    %v944 = vpop.f32.mrb[0].mxu0
    %945 = vmatprep.mubr.bf16.mxu0 0
    %946 = vmatmul.mubr.bf16.gmra.mrb[0].mxu0 %v880
    %v947 = vpop.f32.mrb[0].mxu0
    %v948 = vadd.f32 0.0, %v947
    %v949 = vpop.f32.mrb[0].mxu0
    %v950 = vpop.f32.mrb[0].mxu0
    %v951 = vadd.f32 0.0, %v950
    %v952 = vpop.f32.mrb[0].mxu0
    %953 = vmatprep.mubr.bf16.mxu0 0
    %954 = vmatmul.mubr.bf16.gmra.mrb[0].mxu0 %v883
    %v955 = vpop.f32.mrb[0].mxu0
    %v956 = vadd.f32 0.0, %v955
    %v957 = vpop.f32.mrb[0].mxu0
    %v958 = vpop.f32.mrb[0].mxu0
    %v959 = vadd.f32 0.0, %v958
    %v960 = vpop.f32.mrb[0].mxu0
    %961 = vmatprep.mubr.bf16.mxu0 0
    %962 = vmatmul.mubr.bf16.gmra.mrb[0].mxu0 %v886
    %v963 = vpop.f32.mrb[0].mxu0
    %v964 = vadd.f32 0.0, %v963
    %v965 = vpop.f32.mrb[0].mxu0
    %v966 = vpop.f32.mrb[0].mxu0
    %v967 = vadd.f32 0.0, %v966
    %v968 = vpop.f32.mrb[0].mxu0
    %969 = vmatprep.mubr.bf16.mxu0 0
    %970 = vmatmul.mubr.bf16.gmra.mrb[0].mxu0 %v889
    %v971 = vpop.f32.mrb[0].mxu0
    %v972 = vadd.f32 0.0, %v971
    %v973 = vpop.f32.mrb[0].mxu0
    %v974 = vpop.f32.mrb[0].mxu0
    %v975 = vadd.f32 0.0, %v974
    %v976 = vpop.f32.mrb[0].mxu0
    %977 = vmatprep.mubr.bf16.mxu0 0
    %978 = vmatmul.mubr.bf16.gmra.mrb[0].mxu0 %v892
    %v979 = vpop.f32.mrb[0].mxu0
    %v980 = vadd.f32 0.0, %v979
    %v981 = vpop.f32.mrb[0].mxu0
    %v982 = vpop.f32.mrb[0].mxu0
    %v983 = vadd.f32 0.0, %v982
    %v984 = vpop.f32.mrb[0].mxu0
    %985 = vmatprep.mubr.bf16.mxu0 0
    %986 = vmatmul.mubr.bf16.gmra.mrb[0].mxu0 %v895
    %v987 = vpop.f32.mrb[0].mxu0
    %v988 = vadd.f32 0.0, %v987
    %v989 = vpop.f32.mrb[0].mxu0
    %v990 = vpop.f32.mrb[0].mxu0
    %v991 = vadd.f32 0.0, %v990
    %v992 = vpop.f32.mrb[0].mxu0
    %993 = vdwg.mxu0
    %v995 = vsel %vm872, %v864, 0
    %v998 = vsel %vm872, %v865, 0
    %v1001 = vsel %vm872, %v866, 0
    %v1004 = vsel %vm872, %v867, 0
    %v1007 = vsel %vm872, %v868, 0
    %v1010 = vsel %vm872, %v869, 0
    %v1013 = vsel %vm872, %v870, 0
    %v1016 = vsel %vm872, %v871, 0
    %1018 = vmatprep.subr.bf16.mxu0 0
    %1019 = vmatpush1.bf16.msra.mxu0 %v665
    %1020 = vmatprep.subr.bf16.mxu0 0
    %1021 = vmatpush1.bf16.msra.mxu0 0
    %1022 = vmatprep.subr.bf16.mxu0 0
    %1023 = vmatpush1.bf16.msra.mxu0 0
    %1024 = vmatprep.subr.bf16.mxu0 0
    %1025 = vmatpush1.bf16.msra.mxu0 0
    %1026 = vmatprep.subr.bf16.mxu0 0
    %1027 = vmatpush1.bf16.msra.mxu0 0
    %1028 = vmatprep.subr.bf16.mxu0 0
    %1029 = vmatpush1.bf16.msra.mxu0 0
    %1030 = vmatprep.subr.bf16.mxu0 0
    %1031 = vmatpush1.bf16.msra.mxu0 0
    %1032 = vmatprep.subr.bf16.mxu0 0
    %1033 = vmatpush1.bf16.msra.mxu0 0
    %1034 = vmatprep.subr.bf16.mxu0 0
    %1035 = vmatpush1.bf16.msra.mxu0 0
    %1036 = vmatprep.subr.bf16.mxu0 0
    %1037 = vmatpush1.bf16.msra.mxu0 0
    %1038 = vmatprep.subr.bf16.mxu0 0
    %1039 = vmatpush1.bf16.msra.mxu0 0
    %1040 = vmatprep.subr.bf16.mxu0 0
    %1041 = vmatpush1.bf16.msra.mxu0 0
    %1042 = vmatprep.subr.bf16.mxu0 0
    %1043 = vmatpush1.bf16.msra.mxu0 0
    %1044 = vmatprep.subr.bf16.mxu0 0
    %1045 = vmatpush1.bf16.msra.mxu0 0
    %1046 = vmatprep.subr.bf16.mxu0 0
    %1047 = vmatpush1.bf16.msra.mxu0 0
    %1048 = vmatprep.subr.bf16.mxu0 0
    %1049 = vmatpush1.bf16.msra.mxu0 0
    %1050 = vmatprep.mubr.bf16.mxu0 0
    %1051 = vmatmul.mubr.bf16.gmra.mrb[0].mxu0 %v995
    %v1052 = vpop.f32.mrb[0].mxu0
    %v1053 = vadd.f32 0.0, %v1052
    %v1054 = vpop.f32.mrb[0].mxu0
    %v1055 = vpop.f32.mrb[0].mxu0
    %v1056 = vadd.f32 0.0, %v1055
    %v1057 = vpop.f32.mrb[0].mxu0
    %1058 = vmatprep.mubr.bf16.mxu0 0
    %1059 = vmatmul.mubr.bf16.gmra.mrb[0].mxu0 %v998
    %v1060 = vpop.f32.mrb[0].mxu0
    %v1061 = vadd.f32 0.0, %v1060
    %v1062 = vpop.f32.mrb[0].mxu0
    %v1063 = vpop.f32.mrb[0].mxu0
    %v1064 = vadd.f32 0.0, %v1063
    %v1065 = vpop.f32.mrb[0].mxu0
    %1066 = vmatprep.mubr.bf16.mxu0 0
    %1067 = vmatmul.mubr.bf16.gmra.mrb[0].mxu0 %v1001
    %v1068 = vpop.f32.mrb[0].mxu0
    %v1069 = vadd.f32 0.0, %v1068
    %v1070 = vpop.f32.mrb[0].mxu0
    %v1071 = vpop.f32.mrb[0].mxu0
    %v1072 = vadd.f32 0.0, %v1071
    %v1073 = vpop.f32.mrb[0].mxu0
    %1074 = vmatprep.mubr.bf16.mxu0 0
    %1075 = vmatmul.mubr.bf16.gmra.mrb[0].mxu0 %v1004
    %v1076 = vpop.f32.mrb[0].mxu0
    %v1077 = vadd.f32 0.0, %v1076
    %v1078 = vpop.f32.mrb[0].mxu0
    %v1079 = vpop.f32.mrb[0].mxu0
    %v1080 = vadd.f32 0.0, %v1079
    %v1081 = vpop.f32.mrb[0].mxu0
    %1082 = vmatprep.mubr.bf16.mxu0 0
    %1083 = vmatmul.mubr.bf16.gmra.mrb[0].mxu0 %v1007
    %v1084 = vpop.f32.mrb[0].mxu0
    %v1085 = vadd.f32 0.0, %v1084
    %v1086 = vpop.f32.mrb[0].mxu0
    %v1087 = vpop.f32.mrb[0].mxu0
    %v1088 = vadd.f32 0.0, %v1087
    %v1089 = vpop.f32.mrb[0].mxu0
    %1090 = vmatprep.mubr.bf16.mxu0 0
    %1091 = vmatmul.mubr.bf16.gmra.mrb[0].mxu0 %v1010
    %v1092 = vpop.f32.mrb[0].mxu0
    %v1093 = vadd.f32 0.0, %v1092
    %v1094 = vpop.f32.mrb[0].mxu0
    %v1095 = vpop.f32.mrb[0].mxu0
    %v1096 = vadd.f32 0.0, %v1095
    %v1097 = vpop.f32.mrb[0].mxu0
    %1098 = vmatprep.mubr.bf16.mxu0 0
    %1099 = vmatmul.mubr.bf16.gmra.mrb[0].mxu0 %v1013
    %v1100 = vpop.f32.mrb[0].mxu0
    %v1101 = vadd.f32 0.0, %v1100
    %v1102 = vpop.f32.mrb[0].mxu0
    %v1103 = vpop.f32.mrb[0].mxu0
    %v1104 = vadd.f32 0.0, %v1103
    %v1105 = vpop.f32.mrb[0].mxu0
    %1106 = vmatprep.mubr.bf16.mxu0 0
    %1107 = vmatmul.mubr.bf16.gmra.mrb[0].mxu0 %v1016
    %v1108 = vpop.f32.mrb[0].mxu0
    %v1109 = vadd.f32 0.0, %v1108
    %v1110 = vpop.f32.mrb[0].mxu0
    %v1111 = vpop.f32.mrb[0].mxu0
    %v1112 = vadd.f32 0.0, %v1111
    %v1113 = vpop.f32.mrb[0].mxu0
    %1114 = vdwg.mxu0
    %v1115 = vmul.f32 %v932, 0.125
    %v1116 = vmul.f32 %v935, 0.125
    %v1117 = vmul.f32 %v940, 0.125
    %v1118 = vmul.f32 %v943, 0.125
    %v1119 = vmul.f32 %v948, 0.125
    %v1120 = vmul.f32 %v951, 0.125
    %v1121 = vmul.f32 %v956, 0.125
    %v1122 = vmul.f32 %v959, 0.125
    %v1123 = vmul.f32 %v964, 0.125
    %v1124 = vmul.f32 %v967, 0.125
    %v1125 = vmul.f32 %v972, 0.125
    %v1126 = vmul.f32 %v975, 0.125
    %v1127 = vmul.f32 %v980, 0.125
    %v1128 = vmul.f32 %v983, 0.125
    %v1129 = vmul.f32 %v988, 0.125
    %v1130 = vmul.f32 %v991, 0.125
    %v1131 = vmul.f32 %v1053, 0.125
    %v1132 = vmul.f32 %v1056, 0.125
    %v1133 = vmul.f32 %v1061, 0.125
    %v1134 = vmul.f32 %v1064, 0.125
    %v1135 = vmul.f32 %v1069, 0.125
    %v1136 = vmul.f32 %v1072, 0.125
    %v1137 = vmul.f32 %v1077, 0.125
    %v1138 = vmul.f32 %v1080, 0.125
    %v1139 = vmul.f32 %v1085, 0.125
    %v1140 = vmul.f32 %v1088, 0.125
    %v1141 = vmul.f32 %v1093, 0.125
    %v1142 = vmul.f32 %v1096, 0.125
    %v1143 = vmul.f32 %v1101, 0.125
    %v1144 = vmul.f32 %v1104, 0.125
    %v1145 = vmul.f32 %v1109, 0.125
    %v1146 = vmul.f32 %v1112, 0.125
    %v1147 = vpack.c.bf16 %v601, %v600
    %v1148 = vpack.c.bf16 %v603, %v602
    %v1149 = vpack.c.bf16 %v1116, %v1115
    %v1150 = vpack.c.bf16 %v1118, %v1117
    %v1151 = vpack.c.bf16 %v1120, %v1119
    %v1152 = vpack.c.bf16 %v1122, %v1121
    %v1153 = vpack.c.bf16 %v1124, %v1123
    %v1154 = vpack.c.bf16 %v1126, %v1125
    %v1155 = vpack.c.bf16 %v1128, %v1127
    %v1156 = vpack.c.bf16 %v1130, %v1129
    %v1157 = vpack.c.bf16 %v1132, %v1131
    %v1158 = vpack.c.bf16 %v1134, %v1133
    %v1159 = vpack.c.bf16 %v1136, %v1135
    %v1160 = vpack.c.bf16 %v1138, %v1137
    %v1161 = vpack.c.bf16 %v1140, %v1139
    %v1162 = vpack.c.bf16 %v1142, %v1141
    %v1163 = vpack.c.bf16 %v1144, %v1143
    %v1164 = vpack.c.bf16 %v1146, %v1145
    %1165 = vmatprep.subr.bf16.mxu0 0
    %1166 = vmatpush1.bf16.msra.mxu0 %v1149
    %1167 = vmatprep.subr.bf16.mxu0 0
    %1168 = vmatpush1.bf16.msra.mxu0 %v1150
    %1169 = vmatprep.subr.bf16.mxu0 0
    %1170 = vmatpush1.bf16.msra.mxu0 %v1151
    %1171 = vmatprep.subr.bf16.mxu0 0
    %1172 = vmatpush1.bf16.msra.mxu0 %v1152
    %1173 = vmatprep.subr.bf16.mxu0 0
    %1174 = vmatpush1.bf16.msra.mxu0 %v1153
    %1175 = vmatprep.subr.bf16.mxu0 0
    %1176 = vmatpush1.bf16.msra.mxu0 %v1154
    %1177 = vmatprep.subr.bf16.mxu0 0
    %1178 = vmatpush1.bf16.msra.mxu0 %v1155
    %1179 = vmatprep.subr.bf16.mxu0 0
    %1180 = vmatpush1.bf16.msra.mxu0 %v1156
    %1181 = vmatprep.subr.bf16.mxu0 0
    %1182 = vmatpush1.bf16.msra.mxu0 0
    %1183 = vmatprep.subr.bf16.mxu0 0
    %1184 = vmatpush1.bf16.msra.mxu0 0
    %1185 = vmatprep.subr.bf16.mxu0 0
    %1186 = vmatpush1.bf16.msra.mxu0 0
    %1187 = vmatprep.subr.bf16.mxu0 0
    %1188 = vmatpush1.bf16.msra.mxu0 0
    %1189 = vmatprep.subr.bf16.mxu0 0
    %1190 = vmatpush1.bf16.msra.mxu0 0
    %1191 = vmatprep.subr.bf16.mxu0 0
    %1192 = vmatpush1.bf16.msra.mxu0 0
    %1193 = vmatprep.subr.bf16.mxu0 0
    %1194 = vmatpush1.bf16.msra.mxu0 0
    %1195 = vmatprep.subr.bf16.mxu0 0
    %1196 = vmatpush1.bf16.msra.mxu0 0
    %1197 = vmatprep.mubr.bf16.mxu0 0
    %1198 = vmatmul.mubr.bf16.gmra.mrb[0].mxu0 %v1147
    %v1199 = vpop.f32.mrb[0].mxu0
    %v1200 = vadd.f32 0.0, %v1199
    %v1201 = vpop.f32.mrb[0].mxu0
    %v1202 = vpop.f32.mrb[0].mxu0
    %v1203 = vadd.f32 0.0, %v1202
    %v1204 = vpop.f32.mrb[0].mxu0
    %1205 = vdwg.mxu0
    %1206 = vmatprep.subr.bf16.mxu0 0
    %1207 = vmatpush1.bf16.msra.mxu0 %v1157
    %1208 = vmatprep.subr.bf16.mxu0 0
    %1209 = vmatpush1.bf16.msra.mxu0 %v1158
    %1210 = vmatprep.subr.bf16.mxu0 0
    %1211 = vmatpush1.bf16.msra.mxu0 %v1159
    %1212 = vmatprep.subr.bf16.mxu0 0
    %1213 = vmatpush1.bf16.msra.mxu0 %v1160
    %1214 = vmatprep.subr.bf16.mxu0 0
    %1215 = vmatpush1.bf16.msra.mxu0 %v1161
    %1216 = vmatprep.subr.bf16.mxu0 0
    %1217 = vmatpush1.bf16.msra.mxu0 %v1162
    %1218 = vmatprep.subr.bf16.mxu0 0
    %1219 = vmatpush1.bf16.msra.mxu0 %v1163
    %1220 = vmatprep.subr.bf16.mxu0 0
    %1221 = vmatpush1.bf16.msra.mxu0 %v1164
    %1222 = vmatprep.subr.bf16.mxu0 0
    %1223 = vmatpush1.bf16.msra.mxu0 0
    %1224 = vmatprep.subr.bf16.mxu0 0
    %1225 = vmatpush1.bf16.msra.mxu0 0
    %1226 = vmatprep.subr.bf16.mxu0 0
    %1227 = vmatpush1.bf16.msra.mxu0 0
    %1228 = vmatprep.subr.bf16.mxu0 0
    %1229 = vmatpush1.bf16.msra.mxu0 0
    %1230 = vmatprep.subr.bf16.mxu0 0
    %1231 = vmatpush1.bf16.msra.mxu0 0
    %1232 = vmatprep.subr.bf16.mxu0 0
    %1233 = vmatpush1.bf16.msra.mxu0 0
    %1234 = vmatprep.subr.bf16.mxu0 0
    %1235 = vmatpush1.bf16.msra.mxu0 0
    %1236 = vmatprep.subr.bf16.mxu0 0
    %1237 = vmatpush1.bf16.msra.mxu0 0
    %1238 = vmatprep.mubr.bf16.mxu0 0
    %1239 = vmatmul.mubr.bf16.gmra.mrb[0].mxu0 %v1148
    %v1240 = vpop.f32.mrb[0].mxu0
    %v1241 = vadd.f32 0.0, %v1240
    %v1242 = vpop.f32.mrb[0].mxu0
    %v1243 = vpop.f32.mrb[0].mxu0
    %v1244 = vadd.f32 0.0, %v1243
    %v1245 = vpop.f32.mrb[0].mxu0
    %1246 = vdwg.mxu0
    %v1248 = vsel %vm872, %v790, 0
    %1250 = vmatprep.subr.bf16.mxu0 0
    %1251 = vmatpush1.bf16.msra.mxu0 %v664
    %1252 = vmatprep.subr.bf16.mxu0 0
    %1253 = vmatpush1.bf16.msra.mxu0 0
    %1254 = vmatprep.subr.bf16.mxu0 0
    %1255 = vmatpush1.bf16.msra.mxu0 0
    %1256 = vmatprep.subr.bf16.mxu0 0
    %1257 = vmatpush1.bf16.msra.mxu0 0
    %1258 = vmatprep.subr.bf16.mxu0 0
    %1259 = vmatpush1.bf16.msra.mxu0 0
    %1260 = vmatprep.subr.bf16.mxu0 0
    %1261 = vmatpush1.bf16.msra.mxu0 0
    %1262 = vmatprep.subr.bf16.mxu0 0
    %1263 = vmatpush1.bf16.msra.mxu0 0
    %1264 = vmatprep.subr.bf16.mxu0 0
    %1265 = vmatpush1.bf16.msra.mxu0 0
    %1266 = vmatprep.subr.bf16.mxu0 0
    %1267 = vmatpush1.bf16.msra.mxu0 0
    %1268 = vmatprep.subr.bf16.mxu0 0
    %1269 = vmatpush1.bf16.msra.mxu0 0
    %1270 = vmatprep.subr.bf16.mxu0 0
    %1271 = vmatpush1.bf16.msra.mxu0 0
    %1272 = vmatprep.subr.bf16.mxu0 0
    %1273 = vmatpush1.bf16.msra.mxu0 0
    %1274 = vmatprep.subr.bf16.mxu0 0
    %1275 = vmatpush1.bf16.msra.mxu0 0
    %1276 = vmatprep.subr.bf16.mxu0 0
    %1277 = vmatpush1.bf16.msra.mxu0 0
    %1278 = vmatprep.subr.bf16.mxu0 0
    %1279 = vmatpush1.bf16.msra.mxu0 0
    %1280 = vmatprep.subr.bf16.mxu0 0
    %1281 = vmatpush1.bf16.msra.mxu0 0
    %1282 = vmatprep.mubr.bf16.mxu0 0
    %1283 = vmatmul.mubr.bf16.gmra.mrb[0].mxu0 %v1248
    %v1284 = vpop.f32.mrb[0].mxu0
    %v1285 = vadd.f32 %v1200, %v1284
    %v1286 = vpop.f32.mrb[0].mxu0
    %v1287 = vpop.f32.mrb[0].mxu0
    %v1288 = vadd.f32 %v1203, %v1287
    %v1289 = vpop.f32.mrb[0].mxu0
    %1290 = vdwg.mxu0
    %v1292 = vsel %vm872, %v791, 0
    %1294 = vmatprep.subr.bf16.mxu0 0
    %1295 = vmatpush1.bf16.msra.mxu0 %v665
    %1296 = vmatprep.subr.bf16.mxu0 0
    %1297 = vmatpush1.bf16.msra.mxu0 0
    %1298 = vmatprep.subr.bf16.mxu0 0
    %1299 = vmatpush1.bf16.msra.mxu0 0
    %1300 = vmatprep.subr.bf16.mxu0 0
    %1301 = vmatpush1.bf16.msra.mxu0 0
    %1302 = vmatprep.subr.bf16.mxu0 0
    %1303 = vmatpush1.bf16.msra.mxu0 0
    %1304 = vmatprep.subr.bf16.mxu0 0
    %1305 = vmatpush1.bf16.msra.mxu0 0
    %1306 = vmatprep.subr.bf16.mxu0 0
    %1307 = vmatpush1.bf16.msra.mxu0 0
    %1308 = vmatprep.subr.bf16.mxu0 0
    %1309 = vmatpush1.bf16.msra.mxu0 0
    %1310 = vmatprep.subr.bf16.mxu0 0
    %1311 = vmatpush1.bf16.msra.mxu0 0
    %1312 = vmatprep.subr.bf16.mxu0 0
    %1313 = vmatpush1.bf16.msra.mxu0 0
    %1314 = vmatprep.subr.bf16.mxu0 0
    %1315 = vmatpush1.bf16.msra.mxu0 0
    %1316 = vmatprep.subr.bf16.mxu0 0
    %1317 = vmatpush1.bf16.msra.mxu0 0
    %1318 = vmatprep.subr.bf16.mxu0 0
    %1319 = vmatpush1.bf16.msra.mxu0 0
    %1320 = vmatprep.subr.bf16.mxu0 0
    %1321 = vmatpush1.bf16.msra.mxu0 0
    %1322 = vmatprep.subr.bf16.mxu0 0
    %1323 = vmatpush1.bf16.msra.mxu0 0
    %1324 = vmatprep.subr.bf16.mxu0 0
    %1325 = vmatpush1.bf16.msra.mxu0 0
    %1326 = vmatprep.mubr.bf16.mxu0 0
    %1327 = vmatmul.mubr.bf16.gmra.mrb[0].mxu0 %v1292
    %v1328 = vpop.f32.mrb[0].mxu0
    %v1329 = vadd.f32 %v1241, %v1328
    %v1330 = vpop.f32.mrb[0].mxu0
    %v1331 = vpop.f32.mrb[0].mxu0
    %v1332 = vadd.f32 %v1244, %v1331
    %v1333 = vpop.f32.mrb[0].mxu0
    %1334 = vdwg.mxu0
    %v1335 = vmul.f32 %v415, %v1285
    %v1336 = vmul.f32 %v417, %v1288
    %v1337 = vmul.f32 %v419, %v1329
    %v1338 = vmul.f32 %v421, %v1332
    %v1339 = vpack.c.bf16 %v1336, %v1335
    %v1340 = vpack.c.bf16 %v1338, %v1337
    %v1341 = vld [vmem:[%s11] sm:$0xf]
    %v1342 = vld [vmem:[%s11 + $0x4] sm:$0xf]
    %v1343 = vld [vmem:[%s11 + $0x8] sm:$0xf]
    %v1344 = vld [vmem:[%s11 + $0xc] sm:$0xf]
    %v1345 = vld [vmem:[%s11 + $0x10] sm:$0xf]
    %v1346 = vld [vmem:[%s11 + $0x14] sm:$0xf]
    %v1347 = vld [vmem:[%s11 + $0x18] sm:$0xf]
    %v1348 = vld [vmem:[%s11 + $0x1c] sm:$0xf]
    %v1349 = vld [vmem:[%s11 + $0x20] sm:$0xf]
    %v1350 = vld [vmem:[%s11 + $0x24] sm:$0xf]
    %v1351 = vld [vmem:[%s11 + $0x28] sm:$0xf]
    %v1352 = vld [vmem:[%s11 + $0x2c] sm:$0xf]
    %v1353 = vld [vmem:[%s11 + $0x30] sm:$0xf]
    %v1354 = vld [vmem:[%s11 + $0x34] sm:$0xf]
    %v1355 = vld [vmem:[%s11 + $0x38] sm:$0xf]
    %v1356 = vld [vmem:[%s11 + $0x3c] sm:$0xf]
    %v1373 = vunpack.c.l.b16 %v1341
    %v1374 = vunpack.c.l.b16 %v1342
    %v1375 = vunpack.c.l.b16 %v1343
    %v1376 = vunpack.c.l.b16 %v1344
    %v1377 = vunpack.c.l.b16 %v1345
    %v1378 = vunpack.c.l.b16 %v1346
    %v1379 = vunpack.c.l.b16 %v1347
    %v1380 = vunpack.c.l.b16 %v1348
    %v1381 = vunpack.c.l.b16 %v1349
    %v1382 = vunpack.c.l.b16 %v1350
    %v1383 = vunpack.c.l.b16 %v1351
    %v1384 = vunpack.c.l.b16 %v1352
    %v1385 = vunpack.c.l.b16 %v1353
    %v1386 = vunpack.c.l.b16 %v1354
    %v1387 = vunpack.c.l.b16 %v1355
    %v1388 = vunpack.c.l.b16 %v1356
    %v1389 = vpack.c.b16 %v1374, %v1373
    %v1390 = vpack.c.b16 %v1376, %v1375
    %v1391 = vpack.c.b16 %v1378, %v1377
    %v1392 = vpack.c.b16 %v1380, %v1379
    %v1393 = vpack.c.b16 %v1382, %v1381
    %v1394 = vpack.c.b16 %v1384, %v1383
    %v1395 = vpack.c.b16 %v1386, %v1385
    %v1396 = vpack.c.b16 %v1388, %v1387
    %1405 = vmatprep.subr.bf16.mxu0 0
    %1406 = vmatpush1.bf16.msra.mxu0 %v1389
    %1407 = vmatprep.subr.bf16.mxu0 0
    %1408 = vmatpush1.bf16.msra.mxu0 %v1390
    %1409 = vmatprep.subr.bf16.mxu0 0
    %1410 = vmatpush1.bf16.msra.mxu0 %v1391
    %1411 = vmatprep.subr.bf16.mxu0 0
    %1412 = vmatpush1.bf16.msra.mxu0 %v1392
    %1413 = vmatprep.subr.bf16.mxu0 0
    %1414 = vmatpush1.bf16.msra.mxu0 %v1393
    %1415 = vmatprep.subr.bf16.mxu0 0
    %1416 = vmatpush1.bf16.msra.mxu0 %v1394
    %1417 = vmatprep.subr.bf16.mxu0 0
    %1418 = vmatpush1.bf16.msra.mxu0 %v1395
    %1419 = vmatprep.subr.bf16.mxu0 0
    %1420 = vmatpush1.bf16.msra.mxu0 %v1396
    %1421 = vmatprep.subr.bf16.mxu0 0
    %1422 = vmatpush1.bf16.msra.mxu0 0
    %1423 = vmatprep.subr.bf16.mxu0 0
    %1424 = vmatpush1.bf16.msra.mxu0 0
    %1425 = vmatprep.subr.bf16.mxu0 0
    %1426 = vmatpush1.bf16.msra.mxu0 0
    %1427 = vmatprep.subr.bf16.mxu0 0
    %1428 = vmatpush1.bf16.msra.mxu0 0
    %1429 = vmatprep.subr.bf16.mxu0 0
    %1430 = vmatpush1.bf16.msra.mxu0 0
    %1431 = vmatprep.subr.bf16.mxu0 0
    %1432 = vmatpush1.bf16.msra.mxu0 0
    %1433 = vmatprep.subr.bf16.mxu0 0
    %1434 = vmatpush1.bf16.msra.mxu0 0
    %1435 = vmatprep.subr.bf16.mxu0 0
    %1436 = vmatpush1.bf16.msra.mxu0 0
    %1437 = vmatprep.mubr.bf16.mxu0 0
    %1438 = vmatmul.mubr.bf16.gmra.mrb[0].mxu0 %v1339
    %v1439 = vpop.f32.mrb[0].mxu0
    %v1440 = vadd.f32 0.0, %v1439
    %v1441 = vpop.f32.mrb[0].mxu0
    %v1442 = vpop.f32.mrb[0].mxu0
    %v1443 = vadd.f32 0.0, %v1442
    %v1444 = vpop.f32.mrb[0].mxu0
    %1445 = vmatprep.mubr.bf16.mxu0 0
    %1446 = vmatmul.mubr.bf16.gmra.mrb[0].mxu0 %v1340
    %v1447 = vpop.f32.mrb[0].mxu0
    %v1448 = vadd.f32 0.0, %v1447
    %v1449 = vpop.f32.mrb[0].mxu0
    %v1450 = vpop.f32.mrb[0].mxu0
    %v1451 = vadd.f32 0.0, %v1450
    %v1452 = vpop.f32.mrb[0].mxu0
    %1453 = vdwg.mxu0
    %v1454 = vadd.f32 %v124, %v1440
    %v1455 = vadd.f32 %v125, %v1443
    %v1456 = vadd.f32 %v126, %v1448
    %v1457 = vadd.f32 %v127, %v1451
    %v1458 = vld [vmem:[%s12] sm:$0x1]
    %v1460 = vlaneseq
    %v1461 = vshrl.u32 %v1460, 7
    %v1462 = vsub.s32 0, %v1461
    %v1463 = vrot.slane %v1458, %v1462
    %v1465 = vadd.f32 %v1454, %v1463
    %v1466 = vadd.f32 %v1455, %v1463
    %v1467 = vadd.f32 %v1456, %v1463
    %v1468 = vadd.f32 %v1457, %v1463
    %1469 = vst [vmem:[#allocation13] sm:$0xff] %v1465
    %1470 = vst [vmem:[#allocation13 + $0x8] sm:$0xff] %v1466
    %1471 = vst [vmem:[#allocation13 + $0x10] sm:$0xff] %v1467
    %1472 = vst [vmem:[#allocation13 + $0x18] sm:$0xff] %v1468
    // Predicated region
    $region78: #{tpu_custom_call.1} parent=1 // pred_check
      _
    $region79: #{tpu_custom_call.1} parent=1 // pred_check_branch
      %1474 = sbr.rel (0) target = $region81
    $region80: #{tpu_custom_call.1} parent=1 // pred_region
      %s1476 = ssub.s32 512, 512
      %1477 = vsyncadd [#allocation4], %s1476
      %s1478 = sshll.u32 [#allocation13], 4
      %s1479 = int_to_ptr.vmem [resolvable:$true] %s1478
      %1484 = dma.vmem_to_hbm [thread:$0]  %s1479, 512, %s13, [#allocation4], 128, 128, 8
    $region81: #{tpu_custom_call.1} parent=1 // pred_fallthru
      _
    // Predicated region
    $region82: #{tpu_custom_call.1} parent=1 // pred_check
      _
    $region83: #{tpu_custom_call.1} parent=1 // pred_check_branch
      %1486 = sbr.rel (0) target = $region85
    $region84: #{tpu_custom_call.1} parent=1 // pred_region
      %1487 = dma.done [#allocation4], 512
    $region85: #{tpu_custom_call.1} parent=1 // pred_fallthru
      _
    %1488 = vsyncpa [#allocation3], 1
    %1489 = vsyncpa [#allocation6], 1
    %1490 = vsyncpa [#allocation9], 1
    %1491 = vsyncpa [#allocation12], 1
    %1492 = vsyncpa [#allocation4], 1

// kernel: tpu_custom_call.1
$region0: #{tpu_custom_call.1}
  #allocation0 [shape = 'u32[]', space=smem, size = 0x4, offset = 0x4, fixed_abs, tag = 'smem constant byte address 0x4 - core index']
  #allocation1 [shape = 'u32[144,128]{1,0:T(1,128)}', space=vmem, size = 0x12000, scoped, tag = 'internal scratch']
  %s0 = inlined_call_operand.hbm [shape: f32[2,16,128], index: 0, kind: input, shape index: {}]
  %s1 = inlined_call_operand.vmem [shape: f32[2,16,1], index: 1, kind: input, shape index: {}]
  %s2 = inlined_call_operand.hbm [shape: f32[16,16], index: 2, kind: input, shape index: {}]
  %s3 = inlined_call_operand.vmem [shape: f32[1,128], index: 3, kind: input, shape index: {}]
  %s4 = inlined_call_operand.hbm [shape: f32[1,128], index: 4, kind: input, shape index: {}]
  %s5 = inlined_call_operand.hbm [shape: bf16[128,256], index: 5, kind: input, shape index: {}]
  %s6 = inlined_call_operand.vmem [shape: f32[1,256], index: 6, kind: input, shape index: {}]
  %s7 = inlined_call_operand.hbm [shape: bf16[128,128], index: 7, kind: input, shape index: {}]
  %s8 = inlined_call_operand.hbm [shape: f32[1,128], index: 8, kind: input, shape index: {}]
  %s9 = inlined_call_operand.vmem [shape: f32[4,128], index: 9, kind: input, shape index: {}]
  %s10 = inlined_call_operand.vmem [shape: f32[4,128], index: 10, kind: input, shape index: {}]
  %s11 = inlined_call_operand.vmem [shape: bf16[128,128], index: 11, kind: input, shape index: {}]
  %s12 = inlined_call_operand.vmem [shape: f32[1,128], index: 12, kind: input, shape index: {}]
  %s13 = inlined_call_operand.hbm [shape: f32[2,16,128], index: 13, kind: output, shape index: {}]
  %s14 = sld [smem:[#allocation0]]
  $region86: #{tpu_custom_call.1} parent=0
    _
  %s16 = ssub.s32 1, %s14
  %s17 = scalar_select 0, %s16, %s14
  $region1: #{tpu_custom_call.1} parent=0
    #allocation2 [shape = 'u8[16384]{0}', space=vmem, size = 0x4000, scoped, tag = 'input window, operand 0, single buffered']
    #allocation3 [shape = 's32[1]{0}', space=sflag, size = 0x4, scoped, tag = 'scoped memory for tpu_custom_call.1']
    #allocation4 [shape = 's32[1]{0}', space=sflag, size = 0x4, scoped, tag = 'scoped memory for tpu_custom_call.1']
    #allocation5 [shape = 'u8[8192]{0}', space=vmem, size = 0x2000, scoped, tag = 'input window, operand 2, single buffered']
    #allocation6 [shape = 's32[1]{0}', space=sflag, size = 0x4, scoped, tag = 'scoped memory for tpu_custom_call.1']
    #allocation7 [shape = 'u8[512]{0}', space=vmem, size = 0x400, scoped, tag = 'input window, operand 4, single buffered']
    #allocation8 [shape = 'u8[65536]{0}', space=vmem, size = 0x10000, scoped, tag = 'input window, operand 5, single buffered']
    #allocation9 [shape = 's32[1]{0}', space=sflag, size = 0x4, scoped, tag = 'scoped memory for tpu_custom_call.1']
    #allocation10 [shape = 'u8[32768]{0}', space=vmem, size = 0x8000, scoped, tag = 'input window, operand 7, single buffered']
    #allocation11 [shape = 'u8[512]{0}', space=vmem, size = 0x400, scoped, tag = 'input window, operand 8, single buffered']
    #allocation12 [shape = 's32[1]{0}', space=sflag, size = 0x4, scoped, tag = 'scoped memory for tpu_custom_call.1']
    #allocation13 [shape = 'u8[16384]{0}', space=vmem, size = 0x4000, scoped, tag = 'output window, operand 0, single buffered']
    %18 = vsyncpa [#allocation3], 0
    %19 = vsyncpa [#allocation6], 0
    %20 = vsyncpa [#allocation9], 0
    %21 = vsyncpa [#allocation12], 0
    %22 = vsyncpa [#allocation4], 0
    // Predicated region
    $region2: #{tpu_custom_call.1} parent=1 // pred_check
      _
    $region3: #{tpu_custom_call.1} parent=1 // pred_check_branch
      %24 = sbr.rel (0) target = $region5
    $region4: #{tpu_custom_call.1} parent=1 // pred_region
      %s26 = ssub.s32 512, 512
      %27 = vsyncadd [#allocation3], %s26
      %s28 = sshll.u32 [#allocation2], 4
      %s29 = int_to_ptr.vmem [resolvable:$true] %s28
      %34 = dma.hbm_to_vmem [thread:$0]  %s0, 512, %s29, [#allocation3], 128, 128, 8
    $region5: #{tpu_custom_call.1} parent=1 // pred_fallthru
      _
    // Predicated region
    $region6: #{tpu_custom_call.1} parent=1 // pred_check
      _
    $region7: #{tpu_custom_call.1} parent=1 // pred_check_branch
      %36 = sbr.rel (0) target = $region9
    $region8: #{tpu_custom_call.1} parent=1 // pred_region
      _
    $region9: #{tpu_custom_call.1} parent=1 // pred_fallthru
      _
    // Predicated region
    $region10: #{tpu_custom_call.1} parent=1 // pred_check
      _
    $region11: #{tpu_custom_call.1} parent=1 // pred_check_branch
      %38 = sbr.rel (0) target = $region13
    $region12: #{tpu_custom_call.1} parent=1 // pred_region
      %s40 = ssub.s32 256, 256
      %41 = vsyncadd [#allocation6], %s40
      %s42 = sshll.u32 [#allocation5], 4
      %s43 = int_to_ptr.vmem [resolvable:$true] %s42
      %48 = dma.hbm_to_vmem [thread:$0]  %s2, 256, %s43, [#allocation6], 128, 128, 8
    $region13: #{tpu_custom_call.1} parent=1 // pred_fallthru
      _
    // Predicated region
    $region14: #{tpu_custom_call.1} parent=1 // pred_check
      _
    $region15: #{tpu_custom_call.1} parent=1 // pred_check_branch
      %50 = sbr.rel (0) target = $region17
    $region16: #{tpu_custom_call.1} parent=1 // pred_region
      _
    $region17: #{tpu_custom_call.1} parent=1 // pred_fallthru
      _
    // Predicated region
    $region18: #{tpu_custom_call.1} parent=1 // pred_check
      _
    $region19: #{tpu_custom_call.1} parent=1 // pred_check_branch
      %52 = sbr.rel (0) target = $region21
    $region20: #{tpu_custom_call.1} parent=1 // pred_region
      %s54 = ssub.s32 16, 16
      %55 = vsyncadd [#allocation6], %s54
      %s57 = sshll.u32 [#allocation7], 4
      %s58 = int_to_ptr.vmem [resolvable:$true] %s57
      %60 = dma.hbm_to_vmem [thread:$0]  %s4, 16, %s58, [#allocation6]
    $region21: #{tpu_custom_call.1} parent=1 // pred_fallthru
      _
    // Predicated region
    $region22: #{tpu_custom_call.1} parent=1 // pred_check
      _
    $region23: #{tpu_custom_call.1} parent=1 // pred_check_branch
      %62 = sbr.rel (0) target = $region25
    $region24: #{tpu_custom_call.1} parent=1 // pred_region
      %s64 = ssub.s32 2048, 2048
      %65 = vsyncadd [#allocation9], %s64
      %s66 = sshll.u32 [#allocation8], 4
      %s67 = int_to_ptr.vmem [resolvable:$true] %s66
      %72 = dma.hbm_to_vmem [thread:$0]  %s5, 2048, %s67, [#allocation9], 128, 128, 8
    $region25: #{tpu_custom_call.1} parent=1 // pred_fallthru
      _
    // Predicated region
    $region26: #{tpu_custom_call.1} parent=1 // pred_check
      _
    $region27: #{tpu_custom_call.1} parent=1 // pred_check_branch
      %74 = sbr.rel (0) target = $region29
    $region28: #{tpu_custom_call.1} parent=1 // pred_region
      _
    $region29: #{tpu_custom_call.1} parent=1 // pred_fallthru
      _
    // Predicated region
    $region30: #{tpu_custom_call.1} parent=1 // pred_check
      _
    $region31: #{tpu_custom_call.1} parent=1 // pred_check_branch
      %76 = sbr.rel (0) target = $region33
    $region32: #{tpu_custom_call.1} parent=1 // pred_region
      %s78 = ssub.s32 1024, 1024
      %79 = vsyncadd [#allocation9], %s78
      %s80 = sshll.u32 [#allocation10], 4
      %s81 = int_to_ptr.vmem [resolvable:$true] %s80
      %86 = dma.hbm_to_vmem [thread:$0]  %s7, 1024, %s81, [#allocation9], 64, 64, 4
    $region33: #{tpu_custom_call.1} parent=1 // pred_fallthru
      _
    // Predicated region
    $region34: #{tpu_custom_call.1} parent=1 // pred_check
      _
    $region35: #{tpu_custom_call.1} parent=1 // pred_check_branch
      %88 = sbr.rel (0) target = $region37
    $region36: #{tpu_custom_call.1} parent=1 // pred_region
      %s90 = ssub.s32 16, 16
      %91 = vsyncadd [#allocation12], %s90
      %s93 = sshll.u32 [#allocation11], 4
      %s94 = int_to_ptr.vmem [resolvable:$true] %s93
      %96 = dma.hbm_to_vmem [thread:$0]  %s8, 16, %s94, [#allocation12]
    $region37: #{tpu_custom_call.1} parent=1 // pred_fallthru
      _
    // Predicated region
    $region38: #{tpu_custom_call.1} parent=1 // pred_check
      _
    $region39: #{tpu_custom_call.1} parent=1 // pred_check_branch
      %98 = sbr.rel (0) target = $region41
    $region40: #{tpu_custom_call.1} parent=1 // pred_region
      _
    $region41: #{tpu_custom_call.1} parent=1 // pred_fallthru
      _
    // Predicated region
    $region42: #{tpu_custom_call.1} parent=1 // pred_check
      _
    $region43: #{tpu_custom_call.1} parent=1 // pred_check_branch
      %100 = sbr.rel (0) target = $region45
    $region44: #{tpu_custom_call.1} parent=1 // pred_region
      _
    $region45: #{tpu_custom_call.1} parent=1 // pred_fallthru
      _
    // Predicated region
    $region46: #{tpu_custom_call.1} parent=1 // pred_check
      _
    $region47: #{tpu_custom_call.1} parent=1 // pred_check_branch
      %102 = sbr.rel (0) target = $region49
    $region48: #{tpu_custom_call.1} parent=1 // pred_region
      _
    $region49: #{tpu_custom_call.1} parent=1 // pred_fallthru
      _
    // Predicated region
    $region50: #{tpu_custom_call.1} parent=1 // pred_check
      _
    $region51: #{tpu_custom_call.1} parent=1 // pred_check_branch
      %104 = sbr.rel (0) target = $region53
    $region52: #{tpu_custom_call.1} parent=1 // pred_region
      _
    $region53: #{tpu_custom_call.1} parent=1 // pred_fallthru
      _
    // Predicated region
    $region54: #{tpu_custom_call.1} parent=1 // pred_check
      _
    $region55: #{tpu_custom_call.1} parent=1 // pred_check_branch
      %106 = sbr.rel (0) target = $region57
    $region56: #{tpu_custom_call.1} parent=1 // pred_region
      %107 = dma.done [#allocation3], 512
    $region57: #{tpu_custom_call.1} parent=1 // pred_fallthru
      _
    // Predicated region
    $region58: #{tpu_custom_call.1} parent=1 // pred_check
      _
    $region59: #{tpu_custom_call.1} parent=1 // pred_check_branch
      %109 = sbr.rel (0) target = $region61
    $region60: #{tpu_custom_call.1} parent=1 // pred_region
      %110 = dma.done [#allocation6], 256
    $region61: #{tpu_custom_call.1} parent=1 // pred_fallthru
      _
    // Predicated region
    $region62: #{tpu_custom_call.1} parent=1 // pred_check
      _
    $region63: #{tpu_custom_call.1} parent=1 // pred_check_branch
      %112 = sbr.rel (0) target = $region65
    $region64: #{tpu_custom_call.1} parent=1 // pred_region
      %113 = dma.done [#allocation6], 16
    $region65: #{tpu_custom_call.1} parent=1 // pred_fallthru
      _
    // Predicated region
    $region66: #{tpu_custom_call.1} parent=1 // pred_check
      _
    $region67: #{tpu_custom_call.1} parent=1 // pred_check_branch
      %115 = sbr.rel (0) target = $region69
    $region68: #{tpu_custom_call.1} parent=1 // pred_region
      %116 = dma.done [#allocation9], 2048
    $region69: #{tpu_custom_call.1} parent=1 // pred_fallthru
      _
    // Predicated region
    $region70: #{tpu_custom_call.1} parent=1 // pred_check
      _
    $region71: #{tpu_custom_call.1} parent=1 // pred_check_branch
      %118 = sbr.rel (0) target = $region73
    $region72: #{tpu_custom_call.1} parent=1 // pred_region
      %119 = dma.done [#allocation9], 1024
    $region73: #{tpu_custom_call.1} parent=1 // pred_fallthru
      _
    // Predicated region
    $region74: #{tpu_custom_call.1} parent=1 // pred_check
      _
    $region75: #{tpu_custom_call.1} parent=1 // pred_check_branch
      %121 = sbr.rel (0) target = $region77
    $region76: #{tpu_custom_call.1} parent=1 // pred_region
      %122 = dma.done [#allocation12], 16
    $region77: #{tpu_custom_call.1} parent=1 // pred_fallthru
      _
    %v124 = vld [vmem:[#allocation2] sm:$0xff]
    %v125 = vld [vmem:[#allocation2 + $0x8] sm:$0xff]
    %v126 = vld [vmem:[#allocation2 + $0x10] sm:$0xff]
    %v127 = vld [vmem:[#allocation2 + $0x18] sm:$0xff]
    %128 = vadd.xlane.f32.xlu0 %v124
    %v129 = vpop.xlane.xlu0 %128
    %130 = vadd.xlane.f32.xlu0 %v125
    %v131 = vpop.xlane.xlu0 %130
    %132 = vadd.xlane.f32.xlu0 %v126
    %v133 = vpop.xlane.xlu0 %132
    %134 = vadd.xlane.f32.xlu0 %v127
    %v135 = vpop.xlane.xlu0 %134
    %v136 = vmul.f32 %v129, 0.03125
    %v137 = vmul.f32 %v131, 0.03125
    %v138 = vmul.f32 %v133, 0.03125
    %v139 = vmul.f32 %v135, 0.03125
    %v140 = vsub.f32 %v124, %v136
    %v141 = vsub.f32 %v125, %v137
    %v142 = vsub.f32 %v126, %v138
    %v143 = vsub.f32 %v127, %v139
    %v144 = vlaneseq
    %v145 = vand.u32 %v144, 127
    %vm146 = vcmp.lt.s32.totalorder %v145, 32
    %v147 = vsel %vm146, 1, 0
    %vm148 = vcmp.eq.s32.totalorder %v147, 1
    %v149 = vsel %vm148, %v140, 0.0
    %v150 = vsel %vm148, %v141, 0.0
    %v151 = vsel %vm148, %v142, 0.0
    %v152 = vsel %vm148, %v143, 0.0
    %v153 = vmul.f32 %v149, %v149
    %v154 = vmul.f32 %v150, %v150
    %v155 = vmul.f32 %v151, %v151
    %v156 = vmul.f32 %v152, %v152
    %157 = vadd.xlane.f32.xlu0 %v153
    %v158 = vpop.xlane.xlu0 %157
    %159 = vadd.xlane.f32.xlu0 %v154
    %v160 = vpop.xlane.xlu0 %159
    %161 = vadd.xlane.f32.xlu0 %v155
    %v162 = vpop.xlane.xlu0 %161
    %163 = vadd.xlane.f32.xlu0 %v156
    %v164 = vpop.xlane.xlu0 %163
    %v165 = vmul.f32 %v158, 0.03125
    %v166 = vmul.f32 %v160, 0.03125
    %v167 = vmul.f32 %v162, 0.03125
    %v168 = vmul.f32 %v164, 0.03125
    %v169 = vadd.f32 %v165, 1e-05
    %v170 = vadd.f32 %v166, 1e-05
    %v171 = vadd.f32 %v167, 1e-05
    %v172 = vadd.f32 %v168, 1e-05
    %v173 = vrsqrt.pop %v169
    %v174 = vrsqrt.pop %v170
    %v175 = vrsqrt.pop %v171
    %v176 = vrsqrt.pop %v172
    %v177 = vmul.f32 %v149, %v173
    %v178 = vmul.f32 %v150, %v174
    %v179 = vmul.f32 %v151, %v175
    %v180 = vmul.f32 %v152, %v176
    %v181 = vld [vmem:[%s3] sm:$0x1]
    %v183 = vlaneseq
    %v184 = vshrl.u32 %v183, 7
    %v185 = vsub.s32 0, %v184
    %v186 = vrot.slane %v181, %v185
    %v188 = vmul.f32 %v177, %v186
    %v189 = vmul.f32 %v178, %v186
    %v190 = vmul.f32 %v179, %v186
    %v191 = vmul.f32 %v180, %v186
    %v192 = vld [vmem:[#allocation7] sm:$0x1]
    %v194 = vlaneseq
    %v195 = vshrl.u32 %v194, 7
    %v196 = vsub.s32 0, %v195
    %v197 = vrot.slane %v192, %v196
    %v199 = vadd.f32 %v188, %v197
    %v200 = vadd.f32 %v189, %v197
    %v201 = vadd.f32 %v190, %v197
    %v202 = vadd.f32 %v191, %v197
    %v203 = vpack.c.bf16 %v200, %v199
    %v204 = vpack.c.bf16 %v202, %v201
    %v205 = vld [vmem:[#allocation8] sm:$0xff]
    %v206 = vld [vmem:[#allocation8 + $0x8] sm:$0xff]
    %v207 = vld [vmem:[#allocation8 + $0x10] sm:$0xff]
    %v208 = vld [vmem:[#allocation8 + $0x18] sm:$0xff]
    %v209 = vld [vmem:[#allocation8 + $0x20] sm:$0xff]
    %v210 = vld [vmem:[#allocation8 + $0x28] sm:$0xff]
    %v211 = vld [vmem:[#allocation8 + $0x30] sm:$0xff]
    %v212 = vld [vmem:[#allocation8 + $0x38] sm:$0xff]
    %v213 = vld [vmem:[#allocation8 + $0x40] sm:$0xff]
    %v214 = vld [vmem:[#allocation8 + $0x48] sm:$0xff]
    %v215 = vld [vmem:[#allocation8 + $0x50] sm:$0xff]
    %v216 = vld [vmem:[#allocation8 + $0x58] sm:$0xff]
    %v217 = vld [vmem:[#allocation8 + $0x60] sm:$0xff]
    %v218 = vld [vmem:[#allocation8 + $0x68] sm:$0xff]
    %v219 = vld [vmem:[#allocation8 + $0x70] sm:$0xff]
    %v220 = vld [vmem:[#allocation8 + $0x78] sm:$0xff]
    %v221 = vld [vmem:[%s6] sm:$0x3]
    %v223 = vlaneseq
    %v224 = vshrl.u32 %v223, 7
    %v225 = vsub.s32 0, %v224
    %v226 = vrot.slane %v221, %v225
    %v227 = vlaneseq
    %v228 = vshrl.u32 %v227, 7
    %v229 = vsub.s32 1, %v228
    %v230 = vrot.slane %v221, %v229
    %v249 = vunpack.c.l.b16 %v205
    %v250 = vunpack.c.h.b16 %v205
    %v251 = vunpack.c.l.b16 %v206
    %v252 = vunpack.c.h.b16 %v206
    %v253 = vunpack.c.l.b16 %v207
    %v254 = vunpack.c.h.b16 %v207
    %v255 = vunpack.c.l.b16 %v208
    %v256 = vunpack.c.h.b16 %v208
    %v257 = vunpack.c.l.b16 %v209
    %v258 = vunpack.c.h.b16 %v209
    %v259 = vunpack.c.l.b16 %v210
    %v260 = vunpack.c.h.b16 %v210
    %v261 = vunpack.c.l.b16 %v211
    %v262 = vunpack.c.h.b16 %v211
    %v263 = vunpack.c.l.b16 %v212
    %v264 = vunpack.c.h.b16 %v212
    %v265 = vunpack.c.l.b16 %v213
    %v266 = vunpack.c.h.b16 %v213
    %v267 = vunpack.c.l.b16 %v214
    %v268 = vunpack.c.h.b16 %v214
    %v269 = vunpack.c.l.b16 %v215
    %v270 = vunpack.c.h.b16 %v215
    %v271 = vunpack.c.l.b16 %v216
    %v272 = vunpack.c.h.b16 %v216
    %v273 = vunpack.c.l.b16 %v217
    %v274 = vunpack.c.h.b16 %v217
    %v275 = vunpack.c.l.b16 %v218
    %v276 = vunpack.c.h.b16 %v218
    %v277 = vunpack.c.l.b16 %v219
    %v278 = vunpack.c.h.b16 %v219
    %v279 = vunpack.c.l.b16 %v220
    %v280 = vunpack.c.h.b16 %v220
    %v281 = vpack.c.b16 %v251, %v249
    %v282 = vpack.c.b16 %v252, %v250
    %v283 = vpack.c.b16 %v255, %v253
    %v284 = vpack.c.b16 %v256, %v254
    %v285 = vpack.c.b16 %v259, %v257
    %v286 = vpack.c.b16 %v260, %v258
    %v287 = vpack.c.b16 %v263, %v261
    %v288 = vpack.c.b16 %v264, %v262
    %v289 = vpack.c.b16 %v267, %v265
    %v290 = vpack.c.b16 %v268, %v266
    %v291 = vpack.c.b16 %v271, %v269
    %v292 = vpack.c.b16 %v272, %v270
    %v293 = vpack.c.b16 %v275, %v273
    %v294 = vpack.c.b16 %v276, %v274
    %v295 = vpack.c.b16 %v279, %v277
    %v296 = vpack.c.b16 %v280, %v278
    %313 = vmatprep.subr.bf16.mxu0 %v282
    %314 = vmatpush1.bf16.msra.mxu0 %v281
    %315 = vmatprep.subr.bf16.mxu0 %v284
    %316 = vmatpush1.bf16.msra.mxu0 %v283
    %317 = vmatprep.subr.bf16.mxu0 %v286
    %318 = vmatpush1.bf16.msra.mxu0 %v285
    %319 = vmatprep.subr.bf16.mxu0 %v288
    %320 = vmatpush1.bf16.msra.mxu0 %v287
    %321 = vmatprep.subr.bf16.mxu0 %v290
    %322 = vmatpush1.bf16.msra.mxu0 %v289
    %323 = vmatprep.subr.bf16.mxu0 %v292
    %324 = vmatpush1.bf16.msra.mxu0 %v291
    %325 = vmatprep.subr.bf16.mxu0 %v294
    %326 = vmatpush1.bf16.msra.mxu0 %v293
    %327 = vmatprep.subr.bf16.mxu0 %v296
    %328 = vmatpush1.bf16.msra.mxu0 %v295
    %329 = vmatprep.subr.bf16.mxu0 0
    %330 = vmatpush1.bf16.msra.mxu0 0
    %331 = vmatprep.subr.bf16.mxu0 0
    %332 = vmatpush1.bf16.msra.mxu0 0
    %333 = vmatprep.subr.bf16.mxu0 0
    %334 = vmatpush1.bf16.msra.mxu0 0
    %335 = vmatprep.subr.bf16.mxu0 0
    %336 = vmatpush1.bf16.msra.mxu0 0
    %337 = vmatprep.subr.bf16.mxu0 0
    %338 = vmatpush1.bf16.msra.mxu0 0
    %339 = vmatprep.subr.bf16.mxu0 0
    %340 = vmatpush1.bf16.msra.mxu0 0
    %341 = vmatprep.subr.bf16.mxu0 0
    %342 = vmatpush1.bf16.msra.mxu0 0
    %343 = vmatprep.subr.bf16.mxu0 0
    %344 = vmatpush1.bf16.msra.mxu0 0
    %345 = vmatprep.mubr.bf16.mxu0 0
    %346 = vmatmul.mubr.bf16.gmra.mrb[0].mxu0 %v203
    %v347 = vpop.f32.mrb[0].mxu0
    %v348 = vadd.f32 %v226, %v347
    %v349 = vpop.f32.mrb[0].mxu0
    %v350 = vadd.f32 %v230, %v349
    %v351 = vpop.f32.mrb[0].mxu0
    %v352 = vadd.f32 %v226, %v351
    %v353 = vpop.f32.mrb[0].mxu0
    %v354 = vadd.f32 %v230, %v353
    %355 = vmatprep.mubr.bf16.mxu0 0
    %356 = vmatmul.mubr.bf16.gmra.mrb[0].mxu0 %v204
    %v357 = vpop.f32.mrb[0].mxu0
    %v358 = vadd.f32 %v226, %v357
    %v359 = vpop.f32.mrb[0].mxu0
    %v360 = vadd.f32 %v230, %v359
    %v361 = vpop.f32.mrb[0].mxu0
    %v362 = vadd.f32 %v226, %v361
    %v363 = vpop.f32.mrb[0].mxu0
    %v364 = vadd.f32 %v230, %v363
    %365 = vdwg.mxu0
    %v366 = vxor.u32 %v348, 2147483648
    %v367 = vxor.u32 %v350, 2147483648
    %v368 = vxor.u32 %v352, 2147483648
    %v369 = vxor.u32 %v354, 2147483648
    %v370 = vxor.u32 %v358, 2147483648
    %v371 = vxor.u32 %v360, 2147483648
    %v372 = vxor.u32 %v362, 2147483648
    %v373 = vxor.u32 %v364, 2147483648
    %v374 = vmul.f32 %v366, 1.442695
    %v375 = vpow.pop %v374
    %v376 = vmul.f32 %v367, 1.442695
    %v377 = vpow.pop %v376
    %v378 = vmul.f32 %v368, 1.442695
    %v379 = vpow.pop %v378
    %v380 = vmul.f32 %v369, 1.442695
    %v381 = vpow.pop %v380
    %v382 = vmul.f32 %v370, 1.442695
    %v383 = vpow.pop %v382
    %v384 = vmul.f32 %v371, 1.442695
    %v385 = vpow.pop %v384
    %v386 = vmul.f32 %v372, 1.442695
    %v387 = vpow.pop %v386
    %v388 = vmul.f32 %v373, 1.442695
    %v389 = vpow.pop %v388
    %v390 = vadd.f32 %v375, 1.0
    %v391 = vadd.f32 %v377, 1.0
    %v392 = vadd.f32 %v379, 1.0
    %v393 = vadd.f32 %v381, 1.0
    %v394 = vadd.f32 %v383, 1.0
    %v395 = vadd.f32 %v385, 1.0
    %v396 = vadd.f32 %v387, 1.0
    %v397 = vadd.f32 %v389, 1.0
    %v398 = vrcp.pop %v390
    %v399 = vmul.f32 1.0, %v398
    %v400 = vrcp.pop %v391
    %v401 = vmul.f32 1.0, %v400
    %v402 = vrcp.pop %v392
    %v403 = vmul.f32 1.0, %v402
    %v404 = vrcp.pop %v393
    %v405 = vmul.f32 1.0, %v404
    %v406 = vrcp.pop %v394
    %v407 = vmul.f32 1.0, %v406
    %v408 = vrcp.pop %v395
    %v409 = vmul.f32 1.0, %v408
    %v410 = vrcp.pop %v396
    %v411 = vmul.f32 1.0, %v410
    %v412 = vrcp.pop %v397
    %v413 = vmul.f32 1.0, %v412
    %v414 = vmul.f32 %v348, %v399
    %v415 = vmul.f32 %v350, %v401
    %v416 = vmul.f32 %v352, %v403
    %v417 = vmul.f32 %v354, %v405
    %v418 = vmul.f32 %v358, %v407
    %v419 = vmul.f32 %v360, %v409
    %v420 = vmul.f32 %v362, %v411
    %v421 = vmul.f32 %v364, %v413
    %v422 = vld [vmem:[#allocation10] sm:$0xf]
    %v423 = vld [vmem:[#allocation10 + $0x4] sm:$0xf]
    %v424 = vld [vmem:[#allocation10 + $0x8] sm:$0xf]
    %v425 = vld [vmem:[#allocation10 + $0xc] sm:$0xf]
    %v426 = vld [vmem:[#allocation10 + $0x10] sm:$0xf]
    %v427 = vld [vmem:[#allocation10 + $0x14] sm:$0xf]
    %v428 = vld [vmem:[#allocation10 + $0x18] sm:$0xf]
    %v429 = vld [vmem:[#allocation10 + $0x1c] sm:$0xf]
    %v430 = vld [vmem:[#allocation10 + $0x20] sm:$0xf]
    %v431 = vld [vmem:[#allocation10 + $0x24] sm:$0xf]
    %v432 = vld [vmem:[#allocation10 + $0x28] sm:$0xf]
    %v433 = vld [vmem:[#allocation10 + $0x2c] sm:$0xf]
    %v434 = vld [vmem:[#allocation10 + $0x30] sm:$0xf]
    %v435 = vld [vmem:[#allocation10 + $0x34] sm:$0xf]
    %v436 = vld [vmem:[#allocation10 + $0x38] sm:$0xf]
    %v437 = vld [vmem:[#allocation10 + $0x3c] sm:$0xf]
    %v438 = vld [vmem:[#allocation11] sm:$0x1]
    %v440 = vlaneseq
    %v441 = vshrl.u32 %v440, 7
    %v442 = vsub.s32 0, %v441
    %v443 = vrot.slane %v438, %v442
    %v461 = vunpack.c.l.b16 %v422
    %v462 = vunpack.c.l.b16 %v423
    %v463 = vunpack.c.l.b16 %v424
    %v464 = vunpack.c.l.b16 %v425
    %v465 = vunpack.c.l.b16 %v426
    %v466 = vunpack.c.l.b16 %v427
    %v467 = vunpack.c.l.b16 %v428
    %v468 = vunpack.c.l.b16 %v429
    %v469 = vunpack.c.l.b16 %v430
    %v470 = vunpack.c.l.b16 %v431
    %v471 = vunpack.c.l.b16 %v432
    %v472 = vunpack.c.l.b16 %v433
    %v473 = vunpack.c.l.b16 %v434
    %v474 = vunpack.c.l.b16 %v435
    %v475 = vunpack.c.l.b16 %v436
    %v476 = vunpack.c.l.b16 %v437
    %v477 = vpack.c.b16 %v462, %v461
    %v478 = vpack.c.b16 %v464, %v463
    %v479 = vpack.c.b16 %v466, %v465
    %v480 = vpack.c.b16 %v468, %v467
    %v481 = vpack.c.b16 %v470, %v469
    %v482 = vpack.c.b16 %v472, %v471
    %v483 = vpack.c.b16 %v474, %v473
    %v484 = vpack.c.b16 %v476, %v475
    %493 = vmatprep.subr.bf16.mxu0 0
    %494 = vmatpush1.bf16.msra.mxu0 %v477
    %495 = vmatprep.subr.bf16.mxu0 0
    %496 = vmatpush1.bf16.msra.mxu0 %v478
    %497 = vmatprep.subr.bf16.mxu0 0
    %498 = vmatpush1.bf16.msra.mxu0 %v479
    %499 = vmatprep.subr.bf16.mxu0 0
    %500 = vmatpush1.bf16.msra.mxu0 %v480
    %501 = vmatprep.subr.bf16.mxu0 0
    %502 = vmatpush1.bf16.msra.mxu0 %v481
    %503 = vmatprep.subr.bf16.mxu0 0
    %504 = vmatpush1.bf16.msra.mxu0 %v482
    %505 = vmatprep.subr.bf16.mxu0 0
    %506 = vmatpush1.bf16.msra.mxu0 %v483
    %507 = vmatprep.subr.bf16.mxu0 0
    %508 = vmatpush1.bf16.msra.mxu0 %v484
    %509 = vmatprep.subr.bf16.mxu0 0
    %510 = vmatpush1.bf16.msra.mxu0 0
    %511 = vmatprep.subr.bf16.mxu0 0
    %512 = vmatpush1.bf16.msra.mxu0 0
    %513 = vmatprep.subr.bf16.mxu0 0
    %514 = vmatpush1.bf16.msra.mxu0 0
    %515 = vmatprep.subr.bf16.mxu0 0
    %516 = vmatpush1.bf16.msra.mxu0 0
    %517 = vmatprep.subr.bf16.mxu0 0
    %518 = vmatpush1.bf16.msra.mxu0 0
    %519 = vmatprep.subr.bf16.mxu0 0
    %520 = vmatpush1.bf16.msra.mxu0 0
    %521 = vmatprep.subr.bf16.mxu0 0
    %522 = vmatpush1.bf16.msra.mxu0 0
    %523 = vmatprep.subr.bf16.mxu0 0
    %524 = vmatpush1.bf16.msra.mxu0 0
    %525 = vmatprep.mubr.bf16.mxu0 0
    %526 = vmatmul.mubr.bf16.gmra.mrb[0].mxu0 %v203
    %v527 = vpop.f32.mrb[0].mxu0
    %v528 = vadd.f32 %v443, %v527
    %v529 = vpop.f32.mrb[0].mxu0
    %v530 = vpop.f32.mrb[0].mxu0
    %v531 = vadd.f32 %v443, %v530
    %v532 = vpop.f32.mrb[0].mxu0
    %533 = vmatprep.mubr.bf16.mxu0 0
    %534 = vmatmul.mubr.bf16.gmra.mrb[0].mxu0 %v204
    %v535 = vpop.f32.mrb[0].mxu0
    %v536 = vadd.f32 %v443, %v535
    %v537 = vpop.f32.mrb[0].mxu0
    %v538 = vpop.f32.mrb[0].mxu0
    %v539 = vadd.f32 %v443, %v538
    %v540 = vpop.f32.mrb[0].mxu0
    %541 = vdwg.mxu0
    %v542 = vxor.u32 %v528, 2147483648
    %v543 = vxor.u32 %v531, 2147483648
    %v544 = vxor.u32 %v536, 2147483648
    %v545 = vxor.u32 %v539, 2147483648
    %v546 = vmul.f32 %v542, 1.442695
    %v547 = vpow.pop %v546
    %v548 = vmul.f32 %v543, 1.442695
    %v549 = vpow.pop %v548
    %v550 = vmul.f32 %v544, 1.442695
    %v551 = vpow.pop %v550
    %v552 = vmul.f32 %v545, 1.442695
    %v553 = vpow.pop %v552
    %v554 = vadd.f32 %v547, 1.0
    %v555 = vadd.f32 %v549, 1.0
    %v556 = vadd.f32 %v551, 1.0
    %v557 = vadd.f32 %v553, 1.0
    %v558 = vrcp.pop %v554
    %v559 = vmul.f32 1.0, %v558
    %v560 = vrcp.pop %v555
    %v561 = vmul.f32 1.0, %v560
    %v562 = vrcp.pop %v556
    %v563 = vmul.f32 1.0, %v562
    %v564 = vrcp.pop %v557
    %v565 = vmul.f32 1.0, %v564
    %v566 = vmul.f32 %v528, %v559
    %v567 = vmul.f32 %v531, %v561
    %v568 = vmul.f32 %v536, %v563
    %v569 = vmul.f32 %v539, %v565
    %v570 = vld [vmem:[%s9] sm:$0xf]
    %v571 = vld [vmem:[%s10] sm:$0xf]
    %v572 = vlaneseq
    %v573 = vshrl.u32 %v572, 7
    %v574 = vsub.s32 0, %v573
    %v575 = vrot.slane %v570, %v574
    %v576 = vmul.f32 %v566, %v575
    %v577 = vmul.f32 %v567, %v575
    %v578 = vmul.f32 %v568, %v575
    %v579 = vmul.f32 %v569, %v575
    %v580 = vlaneseq
    %v581 = vshrl.u32 %v580, 7
    %v582 = vsub.s32 0, %v581
    %v583 = vrot.slane %v571, %v582
    %v584 = vadd.f32 %v576, %v583
    %v585 = vadd.f32 %v577, %v583
    %v586 = vadd.f32 %v578, %v583
    %v587 = vadd.f32 %v579, %v583
    %v588 = vlaneseq
    %v589 = vshrl.u32 %v588, 7
    %v590 = vsub.s32 1, %v589
    %v591 = vrot.slane %v570, %v590
    %v592 = vmul.f32 %v566, %v591
    %v593 = vmul.f32 %v567, %v591
    %v594 = vmul.f32 %v568, %v591
    %v595 = vmul.f32 %v569, %v591
    %v596 = vlaneseq
    %v597 = vshrl.u32 %v596, 7
    %v598 = vsub.s32 1, %v597
    %v599 = vrot.slane %v571, %v598
    %v600 = vadd.f32 %v592, %v599
    %v601 = vadd.f32 %v593, %v599
    %v602 = vadd.f32 %v594, %v599
    %v603 = vadd.f32 %v595, %v599
    %v604 = vlaneseq
    %v605 = vshrl.u32 %v604, 7
    %v606 = vsub.s32 2, %v605
    %v607 = vrot.slane %v570, %v606
    %v608 = vmul.f32 %v566, %v607
    %v609 = vmul.f32 %v567, %v607
    %v610 = vmul.f32 %v568, %v607
    %v611 = vmul.f32 %v569, %v607
    %v612 = vlaneseq
    %v613 = vshrl.u32 %v612, 7
    %v614 = vsub.s32 2, %v613
    %v615 = vrot.slane %v571, %v614
    %v616 = vadd.f32 %v608, %v615
    %v617 = vadd.f32 %v609, %v615
    %v618 = vadd.f32 %v610, %v615
    %v619 = vadd.f32 %v611, %v615
    %v620 = vlaneseq
    %v621 = vshrl.u32 %v620, 7
    %v622 = vsub.s32 3, %v621
    %v623 = vrot.slane %v570, %v622
    %v624 = vmul.f32 %v566, %v623
    %v625 = vmul.f32 %v567, %v623
    %v626 = vmul.f32 %v568, %v623
    %v627 = vmul.f32 %v569, %v623
    %v628 = vlaneseq
    %v629 = vshrl.u32 %v628, 7
    %v630 = vsub.s32 3, %v629
    %v631 = vrot.slane %v571, %v630
    %v632 = vadd.f32 %v624, %v631
    %v633 = vadd.f32 %v625, %v631
    %v634 = vadd.f32 %v626, %v631
    %v635 = vadd.f32 %v627, %v631
    %v636 = vld [vmem:[%s1] sm:$0xff]
    %v637 = vld [vmem:[%s1 + $0x8] sm:$0xff]
    %v638 = vld [vmem:[%s1 + $0x10] sm:$0xff]
    %v639 = vld [vmem:[%s1 + $0x18] sm:$0xff]
    %641 = vset.pattern.permute.xlu0 0
    %642 = vperm.xlu0 %641, %v636
    %v643 = vpop.permute.xlu0 %642
    %646 = vset.pattern.permute.xlu0 0
    %647 = vperm.xlu0 %646, %v637
    %v648 = vpop.permute.xlu0 %647
    %651 = vset.pattern.permute.xlu0 0
    %652 = vperm.xlu0 %651, %v638
    %v653 = vpop.permute.xlu0 %652
    %656 = vset.pattern.permute.xlu0 0
    %657 = vperm.xlu0 %656, %v639
    %v658 = vpop.permute.xlu0 %657
    %v660 = vmul.f32 %v414, %v643
    %v661 = vmul.f32 %v416, %v648
    %v662 = vmul.f32 %v418, %v653
    %v663 = vmul.f32 %v420, %v658
    %v664 = vpack.c.bf16 %v661, %v660
    %v665 = vpack.c.bf16 %v663, %v662
    %v666 = vpack.c.bf16 %v585, %v584
    %v667 = vpack.c.bf16 %v587, %v586
    %v668 = vpack.c.bf16 %v617, %v616
    %v669 = vpack.c.bf16 %v619, %v618
    %670 = vmatprep.subr.bf16.mxu0 0
    %671 = vmatpush1.bf16.xpose.msra.mxu0 %v668
    %672 = vmatprep.subr.bf16.mxu0 0
    %673 = vmatpush1.bf16.xpose.msra.mxu0 0
    %674 = vmatprep.subr.bf16.mxu0 0
    %675 = vmatpush1.bf16.xpose.msra.mxu0 0
    %676 = vmatprep.subr.bf16.mxu0 0
    %677 = vmatpush1.bf16.xpose.msra.mxu0 0
    %678 = vmatprep.subr.bf16.mxu0 0
    %679 = vmatpush1.bf16.xpose.msra.mxu0 0
    %680 = vmatprep.subr.bf16.mxu0 0
    %681 = vmatpush1.bf16.xpose.msra.mxu0 0
    %682 = vmatprep.subr.bf16.mxu0 0
    %683 = vmatpush1.bf16.xpose.msra.mxu0 0
    %684 = vmatprep.subr.bf16.mxu0 0
    %685 = vmatpush1.bf16.xpose.msra.mxu0 0
    %686 = vmatprep.subr.bf16.mxu0 0
    %687 = vmatpush1.bf16.xpose.msra.mxu0 0
    %688 = vmatprep.subr.bf16.mxu0 0
    %689 = vmatpush1.bf16.xpose.msra.mxu0 0
    %690 = vmatprep.subr.bf16.mxu0 0
    %691 = vmatpush1.bf16.xpose.msra.mxu0 0
    %692 = vmatprep.subr.bf16.mxu0 0
    %693 = vmatpush1.bf16.xpose.msra.mxu0 0
    %694 = vmatprep.subr.bf16.mxu0 0
    %695 = vmatpush1.bf16.xpose.msra.mxu0 0
    %696 = vmatprep.subr.bf16.mxu0 0
    %697 = vmatpush1.bf16.xpose.msra.mxu0 0
    %698 = vmatprep.subr.bf16.mxu0 0
    %699 = vmatpush1.bf16.xpose.msra.mxu0 0
    %700 = vmatprep.subr.bf16.mxu0 0
    %701 = vmatpush1.bf16.xpose.msra.mxu0 0
    %702 = vmatprep.mubr.bf16.mxu0 0
    %703 = vmatmul.mubr.bf16.gmra.mrb[0].mxu0 %v666
    %v704 = vpop.f32.mrb[0].mxu0
    %v705 = vadd.f32 0.0, %v704
    %v706 = vpop.f32.mrb[0].mxu0
    %v707 = vpop.f32.mrb[0].mxu0
    %v708 = vadd.f32 0.0, %v707
    %v709 = vpop.f32.mrb[0].mxu0
    %710 = vdwg.mxu0
    %711 = vmatprep.subr.bf16.mxu0 0
    %712 = vmatpush1.bf16.xpose.msra.mxu0 %v669
    %713 = vmatprep.subr.bf16.mxu0 0
    %714 = vmatpush1.bf16.xpose.msra.mxu0 0
    %715 = vmatprep.subr.bf16.mxu0 0
    %716 = vmatpush1.bf16.xpose.msra.mxu0 0
    %717 = vmatprep.subr.bf16.mxu0 0
    %718 = vmatpush1.bf16.xpose.msra.mxu0 0
    %719 = vmatprep.subr.bf16.mxu0 0
    %720 = vmatpush1.bf16.xpose.msra.mxu0 0
    %721 = vmatprep.subr.bf16.mxu0 0
    %722 = vmatpush1.bf16.xpose.msra.mxu0 0
    %723 = vmatprep.subr.bf16.mxu0 0
    %724 = vmatpush1.bf16.xpose.msra.mxu0 0
    %725 = vmatprep.subr.bf16.mxu0 0
    %726 = vmatpush1.bf16.xpose.msra.mxu0 0
    %727 = vmatprep.subr.bf16.mxu0 0
    %728 = vmatpush1.bf16.xpose.msra.mxu0 0
    %729 = vmatprep.subr.bf16.mxu0 0
    %730 = vmatpush1.bf16.xpose.msra.mxu0 0
    %731 = vmatprep.subr.bf16.mxu0 0
    %732 = vmatpush1.bf16.xpose.msra.mxu0 0
    %733 = vmatprep.subr.bf16.mxu0 0
    %734 = vmatpush1.bf16.xpose.msra.mxu0 0
    %735 = vmatprep.subr.bf16.mxu0 0
    %736 = vmatpush1.bf16.xpose.msra.mxu0 0
    %737 = vmatprep.subr.bf16.mxu0 0
    %738 = vmatpush1.bf16.xpose.msra.mxu0 0
    %739 = vmatprep.subr.bf16.mxu0 0
    %740 = vmatpush1.bf16.xpose.msra.mxu0 0
    %741 = vmatprep.subr.bf16.mxu0 0
    %742 = vmatpush1.bf16.xpose.msra.mxu0 0
    %743 = vmatprep.mubr.bf16.mxu0 0
    %744 = vmatmul.mubr.bf16.gmra.mrb[0].mxu0 %v667
    %v745 = vpop.f32.mrb[0].mxu0
    %v746 = vadd.f32 0.0, %v745
    %v747 = vpop.f32.mrb[0].mxu0
    %v748 = vpop.f32.mrb[0].mxu0
    %v749 = vadd.f32 0.0, %v748
    %v750 = vpop.f32.mrb[0].mxu0
    %751 = vdwg.mxu0
    %v752 = vmul.f32 %v705, 0.011048543
    %v753 = vmul.f32 %v708, 0.011048543
    %v754 = vmul.f32 %v746, 0.011048543
    %v755 = vmul.f32 %v749, 0.011048543
    %v756 = vld [vmem:[#allocation5] sm:$0xff]
    %v757 = vld [vmem:[#allocation5 + $0x8] sm:$0xff]
    %v758 = vadd.f32 %v752, %v756
    %v759 = vadd.f32 %v753, %v757
    %v760 = vadd.f32 %v754, %v756
    %v761 = vadd.f32 %v755, %v757
    %v762 = vmul.f32 %v758, %v758
    %v763 = vmul.f32 %v759, %v759
    %v764 = vmul.f32 %v760, %v760
    %v765 = vmul.f32 %v761, %v761
    %v766 = vmul.f32 %v762, %v758
    %v767 = vmul.f32 %v763, %v759
    %v768 = vmul.f32 %v764, %v760
    %v769 = vmul.f32 %v765, %v761
    %v770 = vmul.f32 %v766, 0.07023816
    %v771 = vmul.f32 %v767, 0.07023816
    %v772 = vmul.f32 %v768, 0.07023816
    %v773 = vmul.f32 %v769, 0.07023816
    %v774 = vadd.f32 %v758, %v770
    %v775 = vadd.f32 %v759, %v771
    %v776 = vadd.f32 %v760, %v772
    %v777 = vadd.f32 %v761, %v773
    %v778 = vtanh.pop %v774
    %v779 = vtanh.pop %v775
    %v780 = vtanh.pop %v776
    %v781 = vtanh.pop %v777
    %v782 = vmul.f32 %v778, 0.5
    %v783 = vmul.f32 %v779, 0.5
    %v784 = vmul.f32 %v780, 0.5
    %v785 = vmul.f32 %v781, 0.5
    %v786 = vadd.f32 %v782, 0.5
    %v787 = vadd.f32 %v783, 0.5
    %v788 = vadd.f32 %v784, 0.5
    %v789 = vadd.f32 %v785, 0.5
    %v790 = vpack.c.bf16 %v787, %v786
    %v791 = vpack.c.bf16 %v789, %v788
    %792 = vxpose.xlu0.b32.start [1/16] %v632, 128
    %793 = vxpose.xlu0.b32.cont [2/16] %v633, 128
    %794 = vxpose.xlu0.b32.cont [3/16] 0.0, 128
    %795 = vxpose.xlu0.b32.cont [4/16] 0.0, 128
    %796 = vxpose.xlu0.b32.cont [5/16] 0.0, 128
    %797 = vxpose.xlu0.b32.cont [6/16] 0.0, 128
    %798 = vxpose.xlu0.b32.cont [7/16] 0.0, 128
    %799 = vxpose.xlu0.b32.cont [8/16] 0.0, 128
    %800 = vxpose.xlu0.b32.cont [9/16] 0.0, 128
    %801 = vxpose.xlu0.b32.cont [10/16] 0.0, 128
    %802 = vxpose.xlu0.b32.cont [11/16] 0.0, 128
    %803 = vxpose.xlu0.b32.cont [12/16] 0.0, 128
    %804 = vxpose.xlu0.b32.cont [13/16] 0.0, 128
    %805 = vxpose.xlu0.b32.cont [14/16] 0.0, 128
    %806 = vxpose.xlu0.b32.cont [15/16] 0.0, 128
    %807 = vxpose.xlu0.b32.end [16/16] 0.0, 128
    %v808 = vpop.trf.xlu0
    %v809 = vpop.trf.xlu0
    %v810 = vpop.trf.xlu0
    %v811 = vpop.trf.xlu0
    %v812 = vpop.trf.xlu0
    %v813 = vpop.trf.xlu0
    %v814 = vpop.trf.xlu0
    %v815 = vpop.trf.xlu0
    %v816 = vpop.trf.xlu0
    %v817 = vpop.trf.xlu0
    %v818 = vpop.trf.xlu0
    %v819 = vpop.trf.xlu0
    %v820 = vpop.trf.xlu0
    %v821 = vpop.trf.xlu0
    %v822 = vpop.trf.xlu0
    %v823 = vpop.trf.xlu0
    %824 = vxpose.xlu0.b32.start [1/16] %v634, 128
    %825 = vxpose.xlu0.b32.cont [2/16] %v635, 128
    %826 = vxpose.xlu0.b32.cont [3/16] 0.0, 128
    %827 = vxpose.xlu0.b32.cont [4/16] 0.0, 128
    %828 = vxpose.xlu0.b32.cont [5/16] 0.0, 128
    %829 = vxpose.xlu0.b32.cont [6/16] 0.0, 128
    %830 = vxpose.xlu0.b32.cont [7/16] 0.0, 128
    %831 = vxpose.xlu0.b32.cont [8/16] 0.0, 128
    %832 = vxpose.xlu0.b32.cont [9/16] 0.0, 128
    %833 = vxpose.xlu0.b32.cont [10/16] 0.0, 128
    %834 = vxpose.xlu0.b32.cont [11/16] 0.0, 128
    %835 = vxpose.xlu0.b32.cont [12/16] 0.0, 128
    %836 = vxpose.xlu0.b32.cont [13/16] 0.0, 128
    %837 = vxpose.xlu0.b32.cont [14/16] 0.0, 128
    %838 = vxpose.xlu0.b32.cont [15/16] 0.0, 128
    %839 = vxpose.xlu0.b32.end [16/16] 0.0, 128
    %v840 = vpop.trf.xlu0
    %v841 = vpop.trf.xlu0
    %v842 = vpop.trf.xlu0
    %v843 = vpop.trf.xlu0
    %v844 = vpop.trf.xlu0
    %v845 = vpop.trf.xlu0
    %v846 = vpop.trf.xlu0
    %v847 = vpop.trf.xlu0
    %v848 = vpop.trf.xlu0
    %v849 = vpop.trf.xlu0
    %v850 = vpop.trf.xlu0
    %v851 = vpop.trf.xlu0
    %v852 = vpop.trf.xlu0
    %v853 = vpop.trf.xlu0
    %v854 = vpop.trf.xlu0
    %v855 = vpop.trf.xlu0
    %v856 = vpack.c.bf16 %v809, %v808
    %v857 = vpack.c.bf16 %v811, %v810
    %v858 = vpack.c.bf16 %v813, %v812
    %v859 = vpack.c.bf16 %v815, %v814
    %v860 = vpack.c.bf16 %v817, %v816
    %v861 = vpack.c.bf16 %v819, %v818
    %v862 = vpack.c.bf16 %v821, %v820
    %v863 = vpack.c.bf16 %v823, %v822
    %v864 = vpack.c.bf16 %v841, %v840
    %v865 = vpack.c.bf16 %v843, %v842
    %v866 = vpack.c.bf16 %v845, %v844
    %v867 = vpack.c.bf16 %v847, %v846
    %v868 = vpack.c.bf16 %v849, %v848
    %v869 = vpack.c.bf16 %v851, %v850
    %v870 = vpack.c.bf16 %v853, %v852
    %v871 = vpack.c.bf16 %v855, %v854
    %vm872 = vcmask 130048
    %v874 = vsel %vm872, %v856, 0
    %v877 = vsel %vm872, %v857, 0
    %v880 = vsel %vm872, %v858, 0
    %v883 = vsel %vm872, %v859, 0
    %v886 = vsel %vm872, %v860, 0
    %v889 = vsel %vm872, %v861, 0
    %v892 = vsel %vm872, %v862, 0
    %v895 = vsel %vm872, %v863, 0
    %897 = vmatprep.subr.bf16.mxu0 0
    %898 = vmatpush1.bf16.msra.mxu0 %v664
    %899 = vmatprep.subr.bf16.mxu0 0
    %900 = vmatpush1.bf16.msra.mxu0 0
    %901 = vmatprep.subr.bf16.mxu0 0
    %902 = vmatpush1.bf16.msra.mxu0 0
    %903 = vmatprep.subr.bf16.mxu0 0
    %904 = vmatpush1.bf16.msra.mxu0 0
    %905 = vmatprep.subr.bf16.mxu0 0
    %906 = vmatpush1.bf16.msra.mxu0 0
    %907 = vmatprep.subr.bf16.mxu0 0
    %908 = vmatpush1.bf16.msra.mxu0 0
    %909 = vmatprep.subr.bf16.mxu0 0
    %910 = vmatpush1.bf16.msra.mxu0 0
    %911 = vmatprep.subr.bf16.mxu0 0
    %912 = vmatpush1.bf16.msra.mxu0 0
    %913 = vmatprep.subr.bf16.mxu0 0
    %914 = vmatpush1.bf16.msra.mxu0 0
    %915 = vmatprep.subr.bf16.mxu0 0
    %916 = vmatpush1.bf16.msra.mxu0 0
    %917 = vmatprep.subr.bf16.mxu0 0
    %918 = vmatpush1.bf16.msra.mxu0 0
    %919 = vmatprep.subr.bf16.mxu0 0
    %920 = vmatpush1.bf16.msra.mxu0 0
    %921 = vmatprep.subr.bf16.mxu0 0
    %922 = vmatpush1.bf16.msra.mxu0 0
    %923 = vmatprep.subr.bf16.mxu0 0
    %924 = vmatpush1.bf16.msra.mxu0 0
    %925 = vmatprep.subr.bf16.mxu0 0
    %926 = vmatpush1.bf16.msra.mxu0 0
    %927 = vmatprep.subr.bf16.mxu0 0
    %928 = vmatpush1.bf16.msra.mxu0 0
    %929 = vmatprep.mubr.bf16.mxu0 0
    %930 = vmatmul.mubr.bf16.gmra.mrb[0].mxu0 %v874
    %v931 = vpop.f32.mrb[0].mxu0
    %v932 = vadd.f32 0.0, %v931
    %v933 = vpop.f32.mrb[0].mxu0
    %v934 = vpop.f32.mrb[0].mxu0
    %v935 = vadd.f32 0.0, %v934
    %v936 = vpop.f32.mrb[0].mxu0
    %937 = vmatprep.mubr.bf16.mxu0 0
    %938 = vmatmul.mubr.bf16.gmra.mrb[0].mxu0 %v877
    %v939 = vpop.f32.mrb[0].mxu0
    %v940 = vadd.f32 0.0, %v939
    %v941 = vpop.f32.mrb[0].mxu0
    %v942 = vpop.f32.mrb[0].mxu0
    %v943 = vadd.f32 0.0, %v942
    %v944 = vpop.f32.mrb[0].mxu0
    %945 = vmatprep.mubr.bf16.mxu0 0
    %946 = vmatmul.mubr.bf16.gmra.mrb[0].mxu0 %v880
    %v947 = vpop.f32.mrb[0].mxu0
    %v948 = vadd.f32 0.0, %v947
    %v949 = vpop.f32.mrb[0].mxu0
    %v950 = vpop.f32.mrb[0].mxu0
    %v951 = vadd.f32 0.0, %v950
    %v952 = vpop.f32.mrb[0].mxu0
    %953 = vmatprep.mubr.bf16.mxu0 0
    %954 = vmatmul.mubr.bf16.gmra.mrb[0].mxu0 %v883
    %v955 = vpop.f32.mrb[0].mxu0
    %v956 = vadd.f32 0.0, %v955
    %v957 = vpop.f32.mrb[0].mxu0
    %v958 = vpop.f32.mrb[0].mxu0
    %v959 = vadd.f32 0.0, %v958
    %v960 = vpop.f32.mrb[0].mxu0
    %961 = vmatprep.mubr.bf16.mxu0 0
    %962 = vmatmul.mubr.bf16.gmra.mrb[0].mxu0 %v886
    %v963 = vpop.f32.mrb[0].mxu0
    %v964 = vadd.f32 0.0, %v963
    %v965 = vpop.f32.mrb[0].mxu0
    %v966 = vpop.f32.mrb[0].mxu0
    %v967 = vadd.f32 0.0, %v966
    %v968 = vpop.f32.mrb[0].mxu0
    %969 = vmatprep.mubr.bf16.mxu0 0
    %970 = vmatmul.mubr.bf16.gmra.mrb[0].mxu0 %v889
    %v971 = vpop.f32.mrb[0].mxu0
    %v972 = vadd.f32 0.0, %v971
    %v973 = vpop.f32.mrb[0].mxu0
    %v974 = vpop.f32.mrb[0].mxu0
    %v975 = vadd.f32 0.0, %v974
    %v976 = vpop.f32.mrb[0].mxu0
    %977 = vmatprep.mubr.bf16.mxu0 0
    %978 = vmatmul.mubr.bf16.gmra.mrb[0].mxu0 %v892
    %v979 = vpop.f32.mrb[0].mxu0
    %v980 = vadd.f32 0.0, %v979
    %v981 = vpop.f32.mrb[0].mxu0
    %v982 = vpop.f32.mrb[0].mxu0
    %v983 = vadd.f32 0.0, %v982
    %v984 = vpop.f32.mrb[0].mxu0
    %985 = vmatprep.mubr.bf16.mxu0 0
    %986 = vmatmul.mubr.bf16.gmra.mrb[0].mxu0 %v895
    %v987 = vpop.f32.mrb[0].mxu0
    %v988 = vadd.f32 0.0, %v987
    %v989 = vpop.f32.mrb[0].mxu0
    %v990 = vpop.f32.mrb[0].mxu0
    %v991 = vadd.f32 0.0, %v990
    %v992 = vpop.f32.mrb[0].mxu0
    %993 = vdwg.mxu0
    %v995 = vsel %vm872, %v864, 0
    %v998 = vsel %vm872, %v865, 0
    %v1001 = vsel %vm872, %v866, 0
    %v1004 = vsel %vm872, %v867, 0
    %v1007 = vsel %vm872, %v868, 0
    %v1010 = vsel %vm872, %v869, 0
    %v1013 = vsel %vm872, %v870, 0
    %v1016 = vsel %vm872, %v871, 0
    %1018 = vmatprep.subr.bf16.mxu0 0
    %1019 = vmatpush1.bf16.msra.mxu0 %v665
    %1020 = vmatprep.subr.bf16.mxu0 0
    %1021 = vmatpush1.bf16.msra.mxu0 0
    %1022 = vmatprep.subr.bf16.mxu0 0
    %1023 = vmatpush1.bf16.msra.mxu0 0
    %1024 = vmatprep.subr.bf16.mxu0 0
    %1025 = vmatpush1.bf16.msra.mxu0 0
    %1026 = vmatprep.subr.bf16.mxu0 0
    %1027 = vmatpush1.bf16.msra.mxu0 0
    %1028 = vmatprep.subr.bf16.mxu0 0
    %1029 = vmatpush1.bf16.msra.mxu0 0
    %1030 = vmatprep.subr.bf16.mxu0 0
    %1031 = vmatpush1.bf16.msra.mxu0 0
    %1032 = vmatprep.subr.bf16.mxu0 0
    %1033 = vmatpush1.bf16.msra.mxu0 0
    %1034 = vmatprep.subr.bf16.mxu0 0
    %1035 = vmatpush1.bf16.msra.mxu0 0
    %1036 = vmatprep.subr.bf16.mxu0 0
    %1037 = vmatpush1.bf16.msra.mxu0 0
    %1038 = vmatprep.subr.bf16.mxu0 0
    %1039 = vmatpush1.bf16.msra.mxu0 0
    %1040 = vmatprep.subr.bf16.mxu0 0
    %1041 = vmatpush1.bf16.msra.mxu0 0
    %1042 = vmatprep.subr.bf16.mxu0 0
    %1043 = vmatpush1.bf16.msra.mxu0 0
    %1044 = vmatprep.subr.bf16.mxu0 0
    %1045 = vmatpush1.bf16.msra.mxu0 0
    %1046 = vmatprep.subr.bf16.mxu0 0
    %1047 = vmatpush1.bf16.msra.mxu0 0
    %1048 = vmatprep.subr.bf16.mxu0 0
    %1049 = vmatpush1.bf16.msra.mxu0 0
    %1050 = vmatprep.mubr.bf16.mxu0 0
    %1051 = vmatmul.mubr.bf16.gmra.mrb[0].mxu0 %v995
    %v1052 = vpop.f32.mrb[0].mxu0
    %v1053 = vadd.f32 0.0, %v1052
    %v1054 = vpop.f32.mrb[0].mxu0
    %v1055 = vpop.f32.mrb[0].mxu0
    %v1056 = vadd.f32 0.0, %v1055
    %v1057 = vpop.f32.mrb[0].mxu0
    %1058 = vmatprep.mubr.bf16.mxu0 0
    %1059 = vmatmul.mubr.bf16.gmra.mrb[0].mxu0 %v998
    %v1060 = vpop.f32.mrb[0].mxu0
    %v1061 = vadd.f32 0.0, %v1060
    %v1062 = vpop.f32.mrb[0].mxu0
    %v1063 = vpop.f32.mrb[0].mxu0
    %v1064 = vadd.f32 0.0, %v1063
    %v1065 = vpop.f32.mrb[0].mxu0
    %1066 = vmatprep.mubr.bf16.mxu0 0
    %1067 = vmatmul.mubr.bf16.gmra.mrb[0].mxu0 %v1001
    %v1068 = vpop.f32.mrb[0].mxu0
    %v1069 = vadd.f32 0.0, %v1068
    %v1070 = vpop.f32.mrb[0].mxu0
    %v1071 = vpop.f32.mrb[0].mxu0
    %v1072 = vadd.f32 0.0, %v1071
    %v1073 = vpop.f32.mrb[0].mxu0
    %1074 = vmatprep.mubr.bf16.mxu0 0
    %1075 = vmatmul.mubr.bf16.gmra.mrb[0].mxu0 %v1004
    %v1076 = vpop.f32.mrb[0].mxu0
    %v1077 = vadd.f32 0.0, %v1076
    %v1078 = vpop.f32.mrb[0].mxu0
    %v1079 = vpop.f32.mrb[0].mxu0
    %v1080 = vadd.f32 0.0, %v1079
    %v1081 = vpop.f32.mrb[0].mxu0
    %1082 = vmatprep.mubr.bf16.mxu0 0
    %1083 = vmatmul.mubr.bf16.gmra.mrb[0].mxu0 %v1007
    %v1084 = vpop.f32.mrb[0].mxu0
    %v1085 = vadd.f32 0.0, %v1084
    %v1086 = vpop.f32.mrb[0].mxu0
    %v1087 = vpop.f32.mrb[0].mxu0
    %v1088 = vadd.f32 0.0, %v1087
    %v1089 = vpop.f32.mrb[0].mxu0
    %1090 = vmatprep.mubr.bf16.mxu0 0
    %1091 = vmatmul.mubr.bf16.gmra.mrb[0].mxu0 %v1010
    %v1092 = vpop.f32.mrb[0].mxu0
    %v1093 = vadd.f32 0.0, %v1092
    %v1094 = vpop.f32.mrb[0].mxu0
    %v1095 = vpop.f32.mrb[0].mxu0
    %v1096 = vadd.f32 0.0, %v1095
    %v1097 = vpop.f32.mrb[0].mxu0
    %1098 = vmatprep.mubr.bf16.mxu0 0
    %1099 = vmatmul.mubr.bf16.gmra.mrb[0].mxu0 %v1013
    %v1100 = vpop.f32.mrb[0].mxu0
    %v1101 = vadd.f32 0.0, %v1100
    %v1102 = vpop.f32.mrb[0].mxu0
    %v1103 = vpop.f32.mrb[0].mxu0
    %v1104 = vadd.f32 0.0, %v1103
    %v1105 = vpop.f32.mrb[0].mxu0
    %1106 = vmatprep.mubr.bf16.mxu0 0
    %1107 = vmatmul.mubr.bf16.gmra.mrb[0].mxu0 %v1016
    %v1108 = vpop.f32.mrb[0].mxu0
    %v1109 = vadd.f32 0.0, %v1108
    %v1110 = vpop.f32.mrb[0].mxu0
    %v1111 = vpop.f32.mrb[0].mxu0
    %v1112 = vadd.f32 0.0, %v1111
    %v1113 = vpop.f32.mrb[0].mxu0
    %1114 = vdwg.mxu0
    %v1115 = vmul.f32 %v932, 0.125
    %v1116 = vmul.f32 %v935, 0.125
    %v1117 = vmul.f32 %v940, 0.125
    %v1118 = vmul.f32 %v943, 0.125
    %v1119 = vmul.f32 %v948, 0.125
    %v1120 = vmul.f32 %v951, 0.125
    %v1121 = vmul.f32 %v956, 0.125
    %v1122 = vmul.f32 %v959, 0.125
    %v1123 = vmul.f32 %v964, 0.125
    %v1124 = vmul.f32 %v967, 0.125
    %v1125 = vmul.f32 %v972, 0.125
    %v1126 = vmul.f32 %v975, 0.125
    %v1127 = vmul.f32 %v980, 0.125
    %v1128 = vmul.f32 %v983, 0.125
    %v1129 = vmul.f32 %v988, 0.125
    %v1130 = vmul.f32 %v991, 0.125
    %v1131 = vmul.f32 %v1053, 0.125
    %v1132 = vmul.f32 %v1056, 0.125
    %v1133 = vmul.f32 %v1061, 0.125
    %v1134 = vmul.f32 %v1064, 0.125
    %v1135 = vmul.f32 %v1069, 0.125
    %v1136 = vmul.f32 %v1072, 0.125
    %v1137 = vmul.f32 %v1077, 0.125
    %v1138 = vmul.f32 %v1080, 0.125
    %v1139 = vmul.f32 %v1085, 0.125
    %v1140 = vmul.f32 %v1088, 0.125
    %v1141 = vmul.f32 %v1093, 0.125
    %v1142 = vmul.f32 %v1096, 0.125
    %v1143 = vmul.f32 %v1101, 0.125
    %v1144 = vmul.f32 %v1104, 0.125
    %v1145 = vmul.f32 %v1109, 0.125
    %v1146 = vmul.f32 %v1112, 0.125
    %v1147 = vpack.c.bf16 %v601, %v600
    %v1148 = vpack.c.bf16 %v603, %v602
    %v1149 = vpack.c.bf16 %v1116, %v1115
    %v1150 = vpack.c.bf16 %v1118, %v1117
    %v1151 = vpack.c.bf16 %v1120, %v1119
    %v1152 = vpack.c.bf16 %v1122, %v1121
    %v1153 = vpack.c.bf16 %v1124, %v1123
    %v1154 = vpack.c.bf16 %v1126, %v1125
    %v1155 = vpack.c.bf16 %v1128, %v1127
    %v1156 = vpack.c.bf16 %v1130, %v1129
    %v1157 = vpack.c.bf16 %v1132, %v1131
    %v1158 = vpack.c.bf16 %v1134, %v1133
    %v1159 = vpack.c.bf16 %v1136, %v1135
    %v1160 = vpack.c.bf16 %v1138, %v1137
    %v1161 = vpack.c.bf16 %v1140, %v1139
    %v1162 = vpack.c.bf16 %v1142, %v1141
    %v1163 = vpack.c.bf16 %v1144, %v1143
    %v1164 = vpack.c.bf16 %v1146, %v1145
    %1165 = vmatprep.subr.bf16.mxu0 0
    %1166 = vmatpush1.bf16.msra.mxu0 %v1149
    %1167 = vmatprep.subr.bf16.mxu0 0
    %1168 = vmatpush1.bf16.msra.mxu0 %v1150
    %1169 = vmatprep.subr.bf16.mxu0 0
    %1170 = vmatpush1.bf16.msra.mxu0 %v1151
    %1171 = vmatprep.subr.bf16.mxu0 0
    %1172 = vmatpush1.bf16.msra.mxu0 %v1152
    %1173 = vmatprep.subr.bf16.mxu0 0
    %1174 = vmatpush1.bf16.msra.mxu0 %v1153
    %1175 = vmatprep.subr.bf16.mxu0 0
    %1176 = vmatpush1.bf16.msra.mxu0 %v1154
    %1177 = vmatprep.subr.bf16.mxu0 0
    %1178 = vmatpush1.bf16.msra.mxu0 %v1155
    %1179 = vmatprep.subr.bf16.mxu0 0
    %1180 = vmatpush1.bf16.msra.mxu0 %v1156
    %1181 = vmatprep.subr.bf16.mxu0 0
    %1182 = vmatpush1.bf16.msra.mxu0 0
    %1183 = vmatprep.subr.bf16.mxu0 0
    %1184 = vmatpush1.bf16.msra.mxu0 0
    %1185 = vmatprep.subr.bf16.mxu0 0
    %1186 = vmatpush1.bf16.msra.mxu0 0
    %1187 = vmatprep.subr.bf16.mxu0 0
    %1188 = vmatpush1.bf16.msra.mxu0 0
    %1189 = vmatprep.subr.bf16.mxu0 0
    %1190 = vmatpush1.bf16.msra.mxu0 0
    %1191 = vmatprep.subr.bf16.mxu0 0
    %1192 = vmatpush1.bf16.msra.mxu0 0
    %1193 = vmatprep.subr.bf16.mxu0 0
    %1194 = vmatpush1.bf16.msra.mxu0 0
    %1195 = vmatprep.subr.bf16.mxu0 0
    %1196 = vmatpush1.bf16.msra.mxu0 0
    %1197 = vmatprep.mubr.bf16.mxu0 0
    %1198 = vmatmul.mubr.bf16.gmra.mrb[0].mxu0 %v1147
    %v1199 = vpop.f32.mrb[0].mxu0
    %v1200 = vadd.f32 0.0, %v1199
    %v1201 = vpop.f32.mrb[0].mxu0
    %v1202 = vpop.f32.mrb[0].mxu0
    %v1203 = vadd.f32 0.0, %v1202
    %v1204 = vpop.f32.mrb[0].mxu0
    %1205 = vdwg.mxu0
    %1206 = vmatprep.subr.bf16.mxu0 0
    %1207 = vmatpush1.bf16.msra.mxu0 %v1157
    %1208 = vmatprep.subr.bf16.mxu0 0
    %1209 = vmatpush1.bf16.msra.mxu0 %v1158
    %1210 = vmatprep.subr.bf16.mxu0 0
    %1211 = vmatpush1.bf16.msra.mxu0 %v1159
    %1212 = vmatprep.subr.bf16.mxu0 0
    %1213 = vmatpush1.bf16.msra.mxu0 %v1160
    %1214 = vmatprep.subr.bf16.mxu0 0
    %1215 = vmatpush1.bf16.msra.mxu0 %v1161
    %1216 = vmatprep.subr.bf16.mxu0 0
    %1217 = vmatpush1.bf16.msra.mxu0 %v1162
    %1218 = vmatprep.subr.bf16.mxu0 0
    %1219 = vmatpush1.bf16.msra.mxu0 %v1163
    %1220 = vmatprep.subr.bf16.mxu0 0
    %1221 = vmatpush1.bf16.msra.mxu0 %v1164
    %1222 = vmatprep.subr.bf16.mxu0 0
    %1223 = vmatpush1.bf16.msra.mxu0 0
    %1224 = vmatprep.subr.bf16.mxu0 0
    %1225 = vmatpush1.bf16.msra.mxu0 0
    %1226 = vmatprep.subr.bf16.mxu0 0
    %1227 = vmatpush1.bf16.msra.mxu0 0
    %1228 = vmatprep.subr.bf16.mxu0 0
    %1229 = vmatpush1.bf16.msra.mxu0 0
    %1230 = vmatprep.subr.bf16.mxu0 0
    %1231 = vmatpush1.bf16.msra.mxu0 0
    %1232 = vmatprep.subr.bf16.mxu0 0
    %1233 = vmatpush1.bf16.msra.mxu0 0
    %1234 = vmatprep.subr.bf16.mxu0 0
    %1235 = vmatpush1.bf16.msra.mxu0 0
    %1236 = vmatprep.subr.bf16.mxu0 0
    %1237 = vmatpush1.bf16.msra.mxu0 0
    %1238 = vmatprep.mubr.bf16.mxu0 0
    %1239 = vmatmul.mubr.bf16.gmra.mrb[0].mxu0 %v1148
    %v1240 = vpop.f32.mrb[0].mxu0
    %v1241 = vadd.f32 0.0, %v1240
    %v1242 = vpop.f32.mrb[0].mxu0
    %v1243 = vpop.f32.mrb[0].mxu0
    %v1244 = vadd.f32 0.0, %v1243
    %v1245 = vpop.f32.mrb[0].mxu0
    %1246 = vdwg.mxu0
    %v1248 = vsel %vm872, %v790, 0
    %1250 = vmatprep.subr.bf16.mxu0 0
    %1251 = vmatpush1.bf16.msra.mxu0 %v664
    %1252 = vmatprep.subr.bf16.mxu0 0
    %1253 = vmatpush1.bf16.msra.mxu0 0
    %1254 = vmatprep.subr.bf16.mxu0 0
    %1255 = vmatpush1.bf16.msra.mxu0 0
    %1256 = vmatprep.subr.bf16.mxu0 0
    %1257 = vmatpush1.bf16.msra.mxu0 0
    %1258 = vmatprep.subr.bf16.mxu0 0
    %1259 = vmatpush1.bf16.msra.mxu0 0
    %1260 = vmatprep.subr.bf16.mxu0 0
    %1261 = vmatpush1.bf16.msra.mxu0 0
    %1262 = vmatprep.subr.bf16.mxu0 0
    %1263 = vmatpush1.bf16.msra.mxu0 0
    %1264 = vmatprep.subr.bf16.mxu0 0
    %1265 = vmatpush1.bf16.msra.mxu0 0
    %1266 = vmatprep.subr.bf16.mxu0 0
    %1267 = vmatpush1.bf16.msra.mxu0 0
    %1268 = vmatprep.subr.bf16.mxu0 0
    %1269 = vmatpush1.bf16.msra.mxu0 0
    %1270 = vmatprep.subr.bf16.mxu0 0
    %1271 = vmatpush1.bf16.msra.mxu0 0
    %1272 = vmatprep.subr.bf16.mxu0 0
    %1273 = vmatpush1.bf16.msra.mxu0 0
    %1274 = vmatprep.subr.bf16.mxu0 0
    %1275 = vmatpush1.bf16.msra.mxu0 0
    %1276 = vmatprep.subr.bf16.mxu0 0
    %1277 = vmatpush1.bf16.msra.mxu0 0
    %1278 = vmatprep.subr.bf16.mxu0 0
    %1279 = vmatpush1.bf16.msra.mxu0 0
    %1280 = vmatprep.subr.bf16.mxu0 0
    %1281 = vmatpush1.bf16.msra.mxu0 0
    %1282 = vmatprep.mubr.bf16.mxu0 0
    %1283 = vmatmul.mubr.bf16.gmra.mrb[0].mxu0 %v1248
    %v1284 = vpop.f32.mrb[0].mxu0
    %v1285 = vadd.f32 %v1200, %v1284
    %v1286 = vpop.f32.mrb[0].mxu0
    %v1287 = vpop.f32.mrb[0].mxu0
    %v1288 = vadd.f32 %v1203, %v1287
    %v1289 = vpop.f32.mrb[0].mxu0
    %1290 = vdwg.mxu0
    %v1292 = vsel %vm872, %v791, 0
    %1294 = vmatprep.subr.bf16.mxu0 0
    %1295 = vmatpush1.bf16.msra.mxu0 %v665
    %1296 = vmatprep.subr.bf16.mxu0 0
    %1297 = vmatpush1.bf16.msra.mxu0 0
    %1298 = vmatprep.subr.bf16.mxu0 0
    %1299 = vmatpush1.bf16.msra.mxu0 0
    %1300 = vmatprep.subr.bf16.mxu0 0
    %1301 = vmatpush1.bf16.msra.mxu0 0
    %1302 = vmatprep.subr.bf16.mxu0 0
    %1303 = vmatpush1.bf16.msra.mxu0 0
    %1304 = vmatprep.subr.bf16.mxu0 0
    %1305 = vmatpush1.bf16.msra.mxu0 0
    %1306 = vmatprep.subr.bf16.mxu0 0
    %1307 = vmatpush1.bf16.msra.mxu0 0
    %1308 = vmatprep.subr.bf16.mxu0 0
    %1309 = vmatpush1.bf16.msra.mxu0 0
    %1310 = vmatprep.subr.bf16.mxu0 0
    %1311 = vmatpush1.bf16.msra.mxu0 0
    %1312 = vmatprep.subr.bf16.mxu0 0
    %1313 = vmatpush1.bf16.msra.mxu0 0
    %1314 = vmatprep.subr.bf16.mxu0 0
    %1315 = vmatpush1.bf16.msra.mxu0 0
    %1316 = vmatprep.subr.bf16.mxu0 0
    %1317 = vmatpush1.bf16.msra.mxu0 0
    %1318 = vmatprep.subr.bf16.mxu0 0
    %1319 = vmatpush1.bf16.msra.mxu0 0
    %1320 = vmatprep.subr.bf16.mxu0 0
    %1321 = vmatpush1.bf16.msra.mxu0 0
    %1322 = vmatprep.subr.bf16.mxu0 0
    %1323 = vmatpush1.bf16.msra.mxu0 0
    %1324 = vmatprep.subr.bf16.mxu0 0
    %1325 = vmatpush1.bf16.msra.mxu0 0
    %1326 = vmatprep.mubr.bf16.mxu0 0
    %1327 = vmatmul.mubr.bf16.gmra.mrb[0].mxu0 %v1292
    %v1328 = vpop.f32.mrb[0].mxu0
    %v1329 = vadd.f32 %v1241, %v1328
    %v1330 = vpop.f32.mrb[0].mxu0
    %v1331 = vpop.f32.mrb[0].mxu0
    %v1332 = vadd.f32 %v1244, %v1331
    %v1333 = vpop.f32.mrb[0].mxu0
    %1334 = vdwg.mxu0
    %v1335 = vmul.f32 %v415, %v1285
    %v1336 = vmul.f32 %v417, %v1288
    %v1337 = vmul.f32 %v419, %v1329
    %v1338 = vmul.f32 %v421, %v1332
    %v1339 = vpack.c.bf16 %v1336, %v1335
    %v1340 = vpack.c.bf16 %v1338, %v1337
    %v1341 = vld [vmem:[%s11] sm:$0xf]
    %v1342 = vld [vmem:[%s11 + $0x4] sm:$0xf]
    %v1343 = vld [vmem:[%s11 + $0x8] sm:$0xf]
    %v1344 = vld [vmem:[%s11 + $0xc] sm:$0xf]
    %v1345 = vld [vmem:[%s11 + $0x10] sm:$0xf]
    %v1346 = vld [vmem:[%s11 + $0x14] sm:$0xf]
    %v1347 = vld [vmem:[%s11 + $0x18] sm:$0xf]
    %v1348 = vld [vmem:[%s11 + $0x1c] sm:$0xf]
    %v1349 = vld [vmem:[%s11 + $0x20] sm:$0xf]
    %v1350 = vld [vmem:[%s11 + $0x24] sm:$0xf]
    %v1351 = vld [vmem:[%s11 + $0x28] sm:$0xf]
    %v1352 = vld [vmem:[%s11 + $0x2c] sm:$0xf]
    %v1353 = vld [vmem:[%s11 + $0x30] sm:$0xf]
    %v1354 = vld [vmem:[%s11 + $0x34] sm:$0xf]
    %v1355 = vld [vmem:[%s11 + $0x38] sm:$0xf]
    %v1356 = vld [vmem:[%s11 + $0x3c] sm:$0xf]
    %v1373 = vunpack.c.l.b16 %v1341
    %v1374 = vunpack.c.l.b16 %v1342
    %v1375 = vunpack.c.l.b16 %v1343
    %v1376 = vunpack.c.l.b16 %v1344
    %v1377 = vunpack.c.l.b16 %v1345
    %v1378 = vunpack.c.l.b16 %v1346
    %v1379 = vunpack.c.l.b16 %v1347
    %v1380 = vunpack.c.l.b16 %v1348
    %v1381 = vunpack.c.l.b16 %v1349
    %v1382 = vunpack.c.l.b16 %v1350
    %v1383 = vunpack.c.l.b16 %v1351
    %v1384 = vunpack.c.l.b16 %v1352
    %v1385 = vunpack.c.l.b16 %v1353
    %v1386 = vunpack.c.l.b16 %v1354
    %v1387 = vunpack.c.l.b16 %v1355
    %v1388 = vunpack.c.l.b16 %v1356
    %v1389 = vpack.c.b16 %v1374, %v1373
    %v1390 = vpack.c.b16 %v1376, %v1375
    %v1391 = vpack.c.b16 %v1378, %v1377
    %v1392 = vpack.c.b16 %v1380, %v1379
    %v1393 = vpack.c.b16 %v1382, %v1381
    %v1394 = vpack.c.b16 %v1384, %v1383
    %v1395 = vpack.c.b16 %v1386, %v1385
    %v1396 = vpack.c.b16 %v1388, %v1387
    %1405 = vmatprep.subr.bf16.mxu0 0
    %1406 = vmatpush1.bf16.msra.mxu0 %v1389
    %1407 = vmatprep.subr.bf16.mxu0 0
    %1408 = vmatpush1.bf16.msra.mxu0 %v1390
    %1409 = vmatprep.subr.bf16.mxu0 0
    %1410 = vmatpush1.bf16.msra.mxu0 %v1391
    %1411 = vmatprep.subr.bf16.mxu0 0
    %1412 = vmatpush1.bf16.msra.mxu0 %v1392
    %1413 = vmatprep.subr.bf16.mxu0 0
    %1414 = vmatpush1.bf16.msra.mxu0 %v1393
    %1415 = vmatprep.subr.bf16.mxu0 0
    %1416 = vmatpush1.bf16.msra.mxu0 %v1394
    %1417 = vmatprep.subr.bf16.mxu0 0
    %1418 = vmatpush1.bf16.msra.mxu0 %v1395
    %1419 = vmatprep.subr.bf16.mxu0 0
    %1420 = vmatpush1.bf16.msra.mxu0 %v1396
    %1421 = vmatprep.subr.bf16.mxu0 0
    %1422 = vmatpush1.bf16.msra.mxu0 0
    %1423 = vmatprep.subr.bf16.mxu0 0
    %1424 = vmatpush1.bf16.msra.mxu0 0
    %1425 = vmatprep.subr.bf16.mxu0 0
    %1426 = vmatpush1.bf16.msra.mxu0 0
    %1427 = vmatprep.subr.bf16.mxu0 0
    %1428 = vmatpush1.bf16.msra.mxu0 0
    %1429 = vmatprep.subr.bf16.mxu0 0
    %1430 = vmatpush1.bf16.msra.mxu0 0
    %1431 = vmatprep.subr.bf16.mxu0 0
    %1432 = vmatpush1.bf16.msra.mxu0 0
    %1433 = vmatprep.subr.bf16.mxu0 0
    %1434 = vmatpush1.bf16.msra.mxu0 0
    %1435 = vmatprep.subr.bf16.mxu0 0
    %1436 = vmatpush1.bf16.msra.mxu0 0
    %1437 = vmatprep.mubr.bf16.mxu0 0
    %1438 = vmatmul.mubr.bf16.gmra.mrb[0].mxu0 %v1339
    %v1439 = vpop.f32.mrb[0].mxu0
    %v1440 = vadd.f32 0.0, %v1439
    %v1441 = vpop.f32.mrb[0].mxu0
    %v1442 = vpop.f32.mrb[0].mxu0
    %v1443 = vadd.f32 0.0, %v1442
    %v1444 = vpop.f32.mrb[0].mxu0
    %1445 = vmatprep.mubr.bf16.mxu0 0
    %1446 = vmatmul.mubr.bf16.gmra.mrb[0].mxu0 %v1340
    %v1447 = vpop.f32.mrb[0].mxu0
    %v1448 = vadd.f32 0.0, %v1447
    %v1449 = vpop.f32.mrb[0].mxu0
    %v1450 = vpop.f32.mrb[0].mxu0
    %v1451 = vadd.f32 0.0, %v1450
    %v1452 = vpop.f32.mrb[0].mxu0
    %1453 = vdwg.mxu0
    %v1454 = vadd.f32 %v124, %v1440
    %v1455 = vadd.f32 %v125, %v1443
    %v1456 = vadd.f32 %v126, %v1448
    %v1457 = vadd.f32 %v127, %v1451
    %v1458 = vld [vmem:[%s12] sm:$0x1]
    %v1460 = vlaneseq
    %v1461 = vshrl.u32 %v1460, 7
    %v1462 = vsub.s32 0, %v1461
    %v1463 = vrot.slane %v1458, %v1462
    %v1465 = vadd.f32 %v1454, %v1463
    %v1466 = vadd.f32 %v1455, %v1463
    %v1467 = vadd.f32 %v1456, %v1463
    %v1468 = vadd.f32 %v1457, %v1463
    %1469 = vst [vmem:[#allocation13] sm:$0xff] %v1465
    %1470 = vst [vmem:[#allocation13 + $0x8] sm:$0xff] %v1466
    %1471 = vst [vmem:[#allocation13 + $0x10] sm:$0xff] %v1467
    %1472 = vst [vmem:[#allocation13 + $0x18] sm:$0xff] %v1468
    // Predicated region
    $region78: #{tpu_custom_call.1} parent=1 // pred_check
      _
    $region79: #{tpu_custom_call.1} parent=1 // pred_check_branch
      %1474 = sbr.rel (0) target = $region81
    $region80: #{tpu_custom_call.1} parent=1 // pred_region
      %s1476 = ssub.s32 512, 512
      %1477 = vsyncadd [#allocation4], %s1476
      %s1478 = sshll.u32 [#allocation13], 4
      %s1479 = int_to_ptr.vmem [resolvable:$true] %s1478
      %1484 = dma.vmem_to_hbm [thread:$0]  %s1479, 512, %s13, [#allocation4], 128, 128, 8
    $region81: #{tpu_custom_call.1} parent=1 // pred_fallthru
      _
    // Predicated region
    $region82: #{tpu_custom_call.1} parent=1 // pred_check
      _
    $region83: #{tpu_custom_call.1} parent=1 // pred_check_branch
      %1486 = sbr.rel (0) target = $region85
    $region84: #{tpu_custom_call.1} parent=1 // pred_region
      %1487 = dma.done [#allocation4], 512
    $region85: #{tpu_custom_call.1} parent=1 // pred_fallthru
      _
    %1488 = vsyncpa [#allocation3], 1
    %1489 = vsyncpa [#allocation6], 1
    %1490 = vsyncpa [#allocation9], 1
    %1491 = vsyncpa [#allocation12], 1
    %1492 = vsyncpa [#allocation4], 1

</llo_original>
